<compile_context>
chip_gen: v5e
topology: v5e:2x2
jax: 0.10.0
libtpu: 0.0.40
codegen_flags: <defaults>
</compile_context>

<pallas_src>
import functools

import jax
import jax.numpy as jnp
from jax.experimental import pallas as pl
from jax.experimental.pallas import tpu as pltpu

# Lane-friendly padded hidden sizes (logical 600 / 200).
H1 = 640
H2 = 256


def _round_up(x, m):
    return (x + m - 1) // m * m


def _pad2(a, rows, cols):
    return jnp.pad(a, ((0, rows - a.shape[0]), (0, cols - a.shape[1])))


def vae_fwd_kernel(
    x_ref, eps_ref,
    w1_ref, b1_ref,      # ni_pad -> H1
    w2_ref, b2_ref,      # H1 -> H2
    wh_ref, bh_ref,      # fused mu|logvar head: H2 -> 2*lp
    w3_ref, b3_ref,      # lp -> H2
    w4_ref, b4_ref,      # H2 -> H1
    w5_ref, b5_ref,      # H1 -> ni_pad
    xrec_ref, mulv_ref,
    *, lp,
):
    f32 = jnp.float32
    bf16 = jnp.bfloat16

    # --- encode (bf16 MXU operands, f32 accumulation, f32 activations) ---
    x = x_ref[...].astype(bf16)
    h1 = jnp.tanh(jnp.dot(x, w1_ref[...], preferred_element_type=f32) + b1_ref[...])
    h2 = jnp.tanh(jnp.dot(h1.astype(bf16), w2_ref[...], preferred_element_type=f32) + b2_ref[...])

    # fused mu / logvar head: one matmul, then static lane-aligned slices
    mulv = jnp.dot(h2.astype(bf16), wh_ref[...], preferred_element_type=f32) + bh_ref[...]
    mu = mulv[:, :lp]
    logvar = mulv[:, lp:]

    # --- reparametrize: z = mu + eps * exp(0.5 * logvar)  (f32) ---
    z = mu + eps_ref[...] * jnp.exp(0.5 * logvar)

    # --- decode ---
    d1 = jnp.tanh(jnp.dot(z.astype(bf16), w3_ref[...], preferred_element_type=f32) + b3_ref[...])
    d2 = jnp.tanh(jnp.dot(d1.astype(bf16), w4_ref[...], preferred_element_type=f32) + b4_ref[...])
    logits = jnp.dot(d2.astype(bf16), w5_ref[...], preferred_element_type=f32) + b5_ref[...]

    xrec_ref[...] = jax.nn.sigmoid(logits)
    mulv_ref[...] = mulv


def pack_params(params, num_items, latent_dim):
    """Zero-pad to lane-friendly shapes, fuse the mu/logvar heads, cast weights to bf16."""
    ni_pad = _round_up(num_items, 128)
    lp = _round_up(latent_dim, 128)
    bf16 = jnp.bfloat16
    packed = dict(
        w1=_pad2(params["w1"], ni_pad, H1).astype(bf16),
        b1=_pad2(params["b1"], 1, H1),
        w2=_pad2(params["w2"], H1, H2).astype(bf16),
        b2=_pad2(params["b2"], 1, H2),
        wh=jnp.concatenate(
            [_pad2(params["wmu"], H2, lp), _pad2(params["wlv"], H2, lp)], axis=1
        ).astype(bf16),
        bh=jnp.concatenate(
            [_pad2(params["bmu"], 1, lp), _pad2(params["blv"], 1, lp)], axis=1
        ),
        w3=_pad2(params["w3"], lp, H2).astype(bf16),
        b3=_pad2(params["b3"], 1, H2),
        w4=_pad2(params["w4"], H2, H1).astype(bf16),
        b4=_pad2(params["b4"], 1, H1),
        w5=_pad2(params["w5"], H1, ni_pad).astype(bf16),
        b5=_pad2(params["b5"], 1, ni_pad),
    )
    return packed


def vae_forward(x, eps, packed, num_items, latent_dim, *, tile_m=128):
    batch = x.shape[0]
    ni_pad = packed["w1"].shape[0]
    lp = packed["w3"].shape[0]
    pb = _round_up(max(batch, 1), tile_m)

    # Streamed inputs, zero-padded (padded rows/lanes are discarded after the call).
    x_p = _pad2(x.astype(jnp.float32), pb, ni_pad)
    eps_p = _pad2(eps.astype(jnp.float32), pb, lp)

    grid = (pb // tile_m,)

    def stream(shape):                       # batch-tiled arrays
        return pl.BlockSpec(shape, lambda i: (i, 0))

    def resident(a):                         # weights/biases stay put across tiles
        return pl.BlockSpec(a.shape, lambda i: (0, 0))

    weight_order = ("w1", "b1", "w2", "b2", "wh", "bh",
                    "w3", "b3", "w4", "b4", "w5", "b5")
    weights = tuple(packed[k] for k in weight_order)

    in_specs = [stream((tile_m, ni_pad)), stream((tile_m, lp))] + [resident(w) for w in weights]
    out_specs = (stream((tile_m, ni_pad)), stream((tile_m, 2 * lp)))
    out_shape = (
        jax.ShapeDtypeStruct((pb, ni_pad), jnp.float32),   # x_recon (padded)
        jax.ShapeDtypeStruct((pb, 2 * lp), jnp.float32),   # packed mu | logvar (padded)
    )

    # Advisory cost estimate for XLA's scheduler.
    flops = 2 * pb * (ni_pad * H1 + H1 * H2 + H2 * 2 * lp + lp * H2 + H2 * H1 + H1 * ni_pad)
    transcendentals = pb * (2 * H1 + 2 * H2 + lp + ni_pad)
    w_bytes = sum(int(w.size) * w.dtype.itemsize for w in weights)
    bytes_accessed = w_bytes + x_p.size * 4 + eps_p.size * 4 + pb * (ni_pad + 2 * lp) * 4

    # VMEM budget sized from the real shapes: resident weights + double-buffered
    # streamed tiles + generous activation scratch, clamped well below v7x's 64 MiB.
    io_bytes = 2 * 4 * tile_m * (2 * ni_pad + 3 * lp)
    act_bytes = 6 * tile_m * (2 * H1 + 2 * H2 + 3 * lp + 2 * ni_pad) * 4
    vmem_limit = min(max(2 * (w_bytes + io_bytes + act_bytes), 24 << 20), 48 << 20)

    xrec_p, mulv_p = pl.pallas_call(
        functools.partial(vae_fwd_kernel, lp=lp),
        grid=grid,
        in_specs=in_specs,
        out_specs=out_specs,
        out_shape=out_shape,
        compiler_params=pltpu.CompilerParams(
            dimension_semantics=("parallel",),      # v7x: shard batch tiles across TCs
            vmem_limit_bytes=int(vmem_limit),
        ),
        cost_estimate=pl.CostEstimate(
            flops=flops, transcendentals=transcendentals, bytes_accessed=bytes_accessed),
    )(x_p, eps_p, *weights)

    x_recon = xrec_p[:batch, :num_items]
    mu = mulv_p[:batch, :latent_dim]
    logvar = mulv_p[:batch, lp:lp + latent_dim]
    return x_recon, mu, logvar


def init_linear(key, fan_in, fan_out):
    """Deterministic init mimicking nn.Linear (uniform +/- 1/sqrt(fan_in))."""
    kw, kb = jax.random.split(key)
    bound = 1.0 / jnp.sqrt(float(fan_in))
    w = jax.random.uniform(kw, (fan_in, fan_out), jnp.float32, -bound, bound)
    b = jax.random.uniform(kb, (1, fan_out), jnp.float32, -bound, bound)
    return w, b


def make_params(key, num_items, latent_dim):
    keys = jax.random.split(key, 7)
    p = {}
    p["w1"], p["b1"] = init_linear(keys[0], num_items, 600)
    p["w2"], p["b2"] = init_linear(keys[1], 600, 200)
    p["wmu"], p["bmu"] = init_linear(keys[2], 200, latent_dim)
    p["wlv"], p["blv"] = init_linear(keys[3], 200, latent_dim)
    p["w3"], p["b3"] = init_linear(keys[4], latent_dim, 200)
    p["w4"], p["b4"] = init_linear(keys[5], 200, 600)
    p["w5"], p["b5"] = init_linear(keys[6], 600, num_items)
    return p


def vae_reference(x, eps, params):
    """Pure-JAX f32 reference matching the PyTorch module's forward."""
    h1 = jnp.tanh(x @ params["w1"] + params["b1"])
    h2 = jnp.tanh(h1 @ params["w2"] + params["b2"])
    mu = h2 @ params["wmu"] + params["bmu"]
    logvar = h2 @ params["wlv"] + params["blv"]
    z = mu + eps * jnp.exp(0.5 * logvar)
    d1 = jnp.tanh(z @ params["w3"] + params["b3"])
    d2 = jnp.tanh(d1 @ params["w4"] + params["b4"])
    x_recon = jax.nn.sigmoid(d2 @ params["w5"] + params["b5"])
    return x_recon, mu, logvar


if __name__ == "__main__":
    batch = 2
    num_items = 256
    latent_dim = 20

    key = jax.random.PRNGKey(0)
    k_x, k_eps, k_params = jax.random.split(key, 3)

    x = jax.random.uniform(k_x, (batch, num_items), jnp.float32)       # implicit-feedback vector
    eps = jax.random.normal(k_eps, (batch, latent_dim), jnp.float32)   # reparametrization noise
    params = make_params(k_params, num_items, latent_dim)
    packed = pack_params(params, num_items, latent_dim)

    x_recon, mu, logvar = vae_forward(x, eps, packed, num_items, latent_dim)
    jax.block_until_ready((x_recon, mu, logvar))

    # sanity: shapes match the PyTorch module's forward outputs
    assert x_recon.shape == (batch, num_items)
    assert mu.shape == (batch, latent_dim)
    assert logvar.shape == (batch, latent_dim)

    # numerical check vs f32 reference (loose tolerance: weights run in bf16 on MXU)
    xr_ref, mu_ref, lv_ref = vae_reference(x, eps, params)
    assert float(jnp.max(jnp.abs(x_recon - xr_ref))) < 1e-1
    assert float(jnp.max(jnp.abs(mu - mu_ref))) < 1e-1
    assert float(jnp.max(jnp.abs(logvar - lv_ref))) < 1e-1

    print("KERNEL_OK")
</pallas_src>

<mosaic_0001>
module attributes {stable_mosaic.version = 11 : i64} {
  func.func @vae_fwd_kernel(%arg0: i32, %arg1: memref<128x256xf32, #tpu.memory_space<vmem>>, %arg2: memref<128x128xf32, #tpu.memory_space<vmem>>, %arg3: memref<256x640xbf16, #tpu.memory_space<vmem>>, %arg4: memref<1x640xf32, #tpu.memory_space<vmem>>, %arg5: memref<640x256xbf16, #tpu.memory_space<vmem>>, %arg6: memref<1x256xf32, #tpu.memory_space<vmem>>, %arg7: memref<256x256xbf16, #tpu.memory_space<vmem>>, %arg8: memref<1x256xf32, #tpu.memory_space<vmem>>, %arg9: memref<128x256xbf16, #tpu.memory_space<vmem>>, %arg10: memref<1x256xf32, #tpu.memory_space<vmem>>, %arg11: memref<256x640xbf16, #tpu.memory_space<vmem>>, %arg12: memref<1x640xf32, #tpu.memory_space<vmem>>, %arg13: memref<640x256xbf16, #tpu.memory_space<vmem>>, %arg14: memref<1x256xf32, #tpu.memory_space<vmem>>, %arg15: memref<128x256xf32, #tpu.memory_space<vmem>>, %arg16: memref<128x256xf32, #tpu.memory_space<vmem>>) attributes {dimension_semantics = [#tpu.dimension_semantics<parallel>], iteration_bounds = array<i64: 1>, scalar_prefetch = 0 : i64, scratch_operands = 0 : i64, tpu.core_type = #tpu.core_type<tc>, window_params = [{transform_indices = @transform_0, window_bounds = array<i64: 128, 256>}, {transform_indices = @transform_1, window_bounds = array<i64: 128, 128>}, {pipeline_mode = #tpu.pipeline_mode<synchronous>, transform_indices = @transform_2, window_bounds = array<i64: 256, 640>}, {pipeline_mode = #tpu.pipeline_mode<synchronous>, transform_indices = @transform_3, window_bounds = array<i64: 1, 640>}, {pipeline_mode = #tpu.pipeline_mode<synchronous>, transform_indices = @transform_4, window_bounds = array<i64: 640, 256>}, {pipeline_mode = #tpu.pipeline_mode<synchronous>, transform_indices = @transform_5, window_bounds = array<i64: 1, 256>}, {pipeline_mode = #tpu.pipeline_mode<synchronous>, transform_indices = @transform_6, window_bounds = array<i64: 256, 256>}, {pipeline_mode = #tpu.pipeline_mode<synchronous>, transform_indices = @transform_7, window_bounds = array<i64: 1, 256>}, {pipeline_mode = #tpu.pipeline_mode<synchronous>, transform_indices = @transform_8, window_bounds = array<i64: 128, 256>}, {pipeline_mode = #tpu.pipeline_mode<synchronous>, transform_indices = @transform_9, window_bounds = array<i64: 1, 256>}, {pipeline_mode = #tpu.pipeline_mode<synchronous>, transform_indices = @transform_10, window_bounds = array<i64: 256, 640>}, {pipeline_mode = #tpu.pipeline_mode<synchronous>, transform_indices = @transform_11, window_bounds = array<i64: 1, 640>}, {pipeline_mode = #tpu.pipeline_mode<synchronous>, transform_indices = @transform_12, window_bounds = array<i64: 640, 256>}, {pipeline_mode = #tpu.pipeline_mode<synchronous>, transform_indices = @transform_13, window_bounds = array<i64: 1, 256>}, {transform_indices = @transform_14, window_bounds = array<i64: 128, 256>}, {transform_indices = @transform_15, window_bounds = array<i64: 128, 256>}]} {
    %c0 = arith.constant 0 : index
    %c0_0 = arith.constant 0 : index
    %0 = vector.load %arg1[%c0, %c0_0] : memref<128x256xf32, #tpu.memory_space<vmem>>, vector<128x256xf32>
    %1 = arith.truncf %0 : vector<128x256xf32> to vector<128x256xbf16>
    %c0_1 = arith.constant 0 : index
    %c0_2 = arith.constant 0 : index
    %2 = vector.load %arg3[%c0_1, %c0_2] : memref<256x640xbf16, #tpu.memory_space<vmem>>, vector<256x640xbf16>
    %cst = arith.constant dense<0.000000e+00> : vector<128x640xf32>
    %3 = tpu.matmul %1, %2, %cst {dimension_numbers = #tpu.dot_dimension_numbers<[1], [0], [0], [1], [0, 0, 1, 1], [], []>} : vector<128x256xbf16>, vector<256x640xbf16>, vector<128x640xf32> -> vector<128x640xf32>
    %c0_3 = arith.constant 0 : index
    %c0_4 = arith.constant 0 : index
    %4 = vector.load %arg4[%c0_3, %c0_4] : memref<1x640xf32, #tpu.memory_space<vmem>>, vector<1x640xf32>
    %5 = vector.broadcast %4 : vector<1x640xf32> to vector<128x640xf32>
    %6 = arith.addf %3, %5 : vector<128x640xf32>
    %7 = math.tanh %6 : vector<128x640xf32>
    %8 = arith.truncf %7 : vector<128x640xf32> to vector<128x640xbf16>
    %c0_5 = arith.constant 0 : index
    %c0_6 = arith.constant 0 : index
    %9 = vector.load %arg5[%c0_5, %c0_6] : memref<640x256xbf16, #tpu.memory_space<vmem>>, vector<640x256xbf16>
    %cst_7 = arith.constant dense<0.000000e+00> : vector<128x256xf32>
    %10 = tpu.matmul %8, %9, %cst_7 {dimension_numbers = #tpu.dot_dimension_numbers<[1], [0], [0], [1], [0, 0, 1, 1], [], []>} : vector<128x640xbf16>, vector<640x256xbf16>, vector<128x256xf32> -> vector<128x256xf32>
    %c0_8 = arith.constant 0 : index
    %c0_9 = arith.constant 0 : index
    %11 = vector.load %arg6[%c0_8, %c0_9] : memref<1x256xf32, #tpu.memory_space<vmem>>, vector<1x256xf32>
    %12 = vector.broadcast %11 : vector<1x256xf32> to vector<128x256xf32>
    %13 = arith.addf %10, %12 : vector<128x256xf32>
    %14 = math.tanh %13 : vector<128x256xf32>
    %15 = arith.truncf %14 : vector<128x256xf32> to vector<128x256xbf16>
    %c0_10 = arith.constant 0 : index
    %c0_11 = arith.constant 0 : index
    %16 = vector.load %arg7[%c0_10, %c0_11] : memref<256x256xbf16, #tpu.memory_space<vmem>>, vector<256x256xbf16>
    %cst_12 = arith.constant dense<0.000000e+00> : vector<128x256xf32>
    %17 = tpu.matmul %15, %16, %cst_12 {dimension_numbers = #tpu.dot_dimension_numbers<[1], [0], [0], [1], [0, 0, 1, 1], [], []>} : vector<128x256xbf16>, vector<256x256xbf16>, vector<128x256xf32> -> vector<128x256xf32>
    %c0_13 = arith.constant 0 : index
    %c0_14 = arith.constant 0 : index
    %18 = vector.load %arg8[%c0_13, %c0_14] : memref<1x256xf32, #tpu.memory_space<vmem>>, vector<1x256xf32>
    %19 = vector.broadcast %18 : vector<1x256xf32> to vector<128x256xf32>
    %20 = arith.addf %17, %19 : vector<128x256xf32>
    %21 = vector.extract_strided_slice %20 {offsets = [0, 0], sizes = [128, 128], strides = [1, 1]} : vector<128x256xf32> to vector<128x128xf32>
    %22 = vector.extract_strided_slice %20 {offsets = [0, 128], sizes = [128, 128], strides = [1, 1]} : vector<128x256xf32> to vector<128x128xf32>
    %c0_15 = arith.constant 0 : index
    %c0_16 = arith.constant 0 : index
    %23 = vector.load %arg2[%c0_15, %c0_16] : memref<128x128xf32, #tpu.memory_space<vmem>>, vector<128x128xf32>
    %cst_17 = arith.constant 5.000000e-01 : f32
    %24 = vector.broadcast %cst_17 : f32 to vector<128x128xf32>
    %25 = arith.mulf %24, %22 : vector<128x128xf32>
    %26 = math.exp %25 : vector<128x128xf32>
    %27 = arith.mulf %23, %26 : vector<128x128xf32>
    %28 = arith.addf %21, %27 : vector<128x128xf32>
    %29 = arith.truncf %28 : vector<128x128xf32> to vector<128x128xbf16>
    %c0_18 = arith.constant 0 : index
    %c0_19 = arith.constant 0 : index
    %30 = vector.load %arg9[%c0_18, %c0_19] : memref<128x256xbf16, #tpu.memory_space<vmem>>, vector<128x256xbf16>
    %cst_20 = arith.constant dense<0.000000e+00> : vector<128x256xf32>
    %31 = tpu.matmul %29, %30, %cst_20 {dimension_numbers = #tpu.dot_dimension_numbers<[1], [0], [0], [1], [0, 0, 1, 1], [], []>} : vector<128x128xbf16>, vector<128x256xbf16>, vector<128x256xf32> -> vector<128x256xf32>
    %c0_21 = arith.constant 0 : index
    %c0_22 = arith.constant 0 : index
    %32 = vector.load %arg10[%c0_21, %c0_22] : memref<1x256xf32, #tpu.memory_space<vmem>>, vector<1x256xf32>
    %33 = vector.broadcast %32 : vector<1x256xf32> to vector<128x256xf32>
    %34 = arith.addf %31, %33 : vector<128x256xf32>
    %35 = math.tanh %34 : vector<128x256xf32>
    %36 = arith.truncf %35 : vector<128x256xf32> to vector<128x256xbf16>
    %c0_23 = arith.constant 0 : index
    %c0_24 = arith.constant 0 : index
    %37 = vector.load %arg11[%c0_23, %c0_24] : memref<256x640xbf16, #tpu.memory_space<vmem>>, vector<256x640xbf16>
    %cst_25 = arith.constant dense<0.000000e+00> : vector<128x640xf32>
    %38 = tpu.matmul %36, %37, %cst_25 {dimension_numbers = #tpu.dot_dimension_numbers<[1], [0], [0], [1], [0, 0, 1, 1], [], []>} : vector<128x256xbf16>, vector<256x640xbf16>, vector<128x640xf32> -> vector<128x640xf32>
    %c0_26 = arith.constant 0 : index
    %c0_27 = arith.constant 0 : index
    %39 = vector.load %arg12[%c0_26, %c0_27] : memref<1x640xf32, #tpu.memory_space<vmem>>, vector<1x640xf32>
    %40 = vector.broadcast %39 : vector<1x640xf32> to vector<128x640xf32>
    %41 = arith.addf %38, %40 : vector<128x640xf32>
    %42 = math.tanh %41 : vector<128x640xf32>
    %43 = arith.truncf %42 : vector<128x640xf32> to vector<128x640xbf16>
    %c0_28 = arith.constant 0 : index
    %c0_29 = arith.constant 0 : index
    %44 = vector.load %arg13[%c0_28, %c0_29] : memref<640x256xbf16, #tpu.memory_space<vmem>>, vector<640x256xbf16>
    %cst_30 = arith.constant dense<0.000000e+00> : vector<128x256xf32>
    %45 = tpu.matmul %43, %44, %cst_30 {dimension_numbers = #tpu.dot_dimension_numbers<[1], [0], [0], [1], [0, 0, 1, 1], [], []>} : vector<128x640xbf16>, vector<640x256xbf16>, vector<128x256xf32> -> vector<128x256xf32>
    %c0_31 = arith.constant 0 : index
    %c0_32 = arith.constant 0 : index
    %46 = vector.load %arg14[%c0_31, %c0_32] : memref<1x256xf32, #tpu.memory_space<vmem>>, vector<1x256xf32>
    %47 = vector.broadcast %46 : vector<1x256xf32> to vector<128x256xf32>
    %48 = arith.addf %45, %47 : vector<128x256xf32>
    %49 = arith.negf %48 : vector<128x256xf32>
    %50 = math.exp %49 : vector<128x256xf32>
    %cst_33 = arith.constant 1.000000e+00 : f32
    %51 = vector.broadcast %cst_33 : f32 to vector<128x256xf32>
    %52 = arith.addf %51, %50 : vector<128x256xf32>
    %53 = arith.divf %51, %52 : vector<128x256xf32>
    %c0_34 = arith.constant 0 : index
    %c0_35 = arith.constant 0 : index
    %54 = vector.load %arg15[%c0_34, %c0_35] : memref<128x256xf32, #tpu.memory_space<vmem>>, vector<128x256xf32>
    tpu.vector_store %arg15[%c0_34, %c0_35], %53 {strides = array<i32>} : memref<128x256xf32, #tpu.memory_space<vmem>>, vector<128x256xf32>,
    %c0_36 = arith.constant 0 : index
    %c0_37 = arith.constant 0 : index
    %55 = vector.load %arg16[%c0_36, %c0_37] : memref<128x256xf32, #tpu.memory_space<vmem>>, vector<128x256xf32>
    tpu.vector_store %arg16[%c0_36, %c0_37], %20 {strides = array<i32>} : memref<128x256xf32, #tpu.memory_space<vmem>>, vector<128x256xf32>,
    return
  }
  func.func @transform_0(%arg0: i32) -> (i32, i32) {
    %c0_i32 = arith.constant 0 : i32
    %c0_i32_0 = arith.constant 0 : i32
    return %arg0, %c0_i32 : i32, i32
  }
  func.func @transform_1(%arg0: i32) -> (i32, i32) {
    %c0_i32 = arith.constant 0 : i32
    %c0_i32_0 = arith.constant 0 : i32
    return %arg0, %c0_i32 : i32, i32
  }
  func.func @transform_2(%arg0: i32) -> (i32, i32) {
    %c0_i32 = arith.constant 0 : i32
    %c0_i32_0 = arith.constant 0 : i32
    %c0_i32_1 = arith.constant 0 : i32
    return %c0_i32, %c0_i32_0 : i32, i32
  }
  func.func @transform_3(%arg0: i32) -> (i32, i32) {
    %c0_i32 = arith.constant 0 : i32
    %c0_i32_0 = arith.constant 0 : i32
    %c0_i32_1 = arith.constant 0 : i32
    return %c0_i32, %c0_i32_0 : i32, i32
  }
  func.func @transform_4(%arg0: i32) -> (i32, i32) {
    %c0_i32 = arith.constant 0 : i32
    %c0_i32_0 = arith.constant 0 : i32
    %c0_i32_1 = arith.constant 0 : i32
    return %c0_i32, %c0_i32_0 : i32, i32
  }
  func.func @transform_5(%arg0: i32) -> (i32, i32) {
    %c0_i32 = arith.constant 0 : i32
    %c0_i32_0 = arith.constant 0 : i32
    %c0_i32_1 = arith.constant 0 : i32
    return %c0_i32, %c0_i32_0 : i32, i32
  }
  func.func @transform_6(%arg0: i32) -> (i32, i32) {
    %c0_i32 = arith.constant 0 : i32
    %c0_i32_0 = arith.constant 0 : i32
    %c0_i32_1 = arith.constant 0 : i32
    return %c0_i32, %c0_i32_0 : i32, i32
  }
  func.func @transform_7(%arg0: i32) -> (i32, i32) {
    %c0_i32 = arith.constant 0 : i32
    %c0_i32_0 = arith.constant 0 : i32
    %c0_i32_1 = arith.constant 0 : i32
    return %c0_i32, %c0_i32_0 : i32, i32
  }
  func.func @transform_8(%arg0: i32) -> (i32, i32) {
    %c0_i32 = arith.constant 0 : i32
    %c0_i32_0 = arith.constant 0 : i32
    %c0_i32_1 = arith.constant 0 : i32
    return %c0_i32, %c0_i32_0 : i32, i32
  }
  func.func @transform_9(%arg0: i32) -> (i32, i32) {
    %c0_i32 = arith.constant 0 : i32
    %c0_i32_0 = arith.constant 0 : i32
    %c0_i32_1 = arith.constant 0 : i32
    return %c0_i32, %c0_i32_0 : i32, i32
  }
  func.func @transform_10(%arg0: i32) -> (i32, i32) {
    %c0_i32 = arith.constant 0 : i32
    %c0_i32_0 = arith.constant 0 : i32
    %c0_i32_1 = arith.constant 0 : i32
    return %c0_i32, %c0_i32_0 : i32, i32
  }
  func.func @transform_11(%arg0: i32) -> (i32, i32) {
    %c0_i32 = arith.constant 0 : i32
    %c0_i32_0 = arith.constant 0 : i32
    %c0_i32_1 = arith.constant 0 : i32
    return %c0_i32, %c0_i32_0 : i32, i32
  }
  func.func @transform_12(%arg0: i32) -> (i32, i32) {
    %c0_i32 = arith.constant 0 : i32
    %c0_i32_0 = arith.constant 0 : i32
    %c0_i32_1 = arith.constant 0 : i32
    return %c0_i32, %c0_i32_0 : i32, i32
  }
  func.func @transform_13(%arg0: i32) -> (i32, i32) {
    %c0_i32 = arith.constant 0 : i32
    %c0_i32_0 = arith.constant 0 : i32
    %c0_i32_1 = arith.constant 0 : i32
    return %c0_i32, %c0_i32_0 : i32, i32
  }
  func.func @transform_14(%arg0: i32) -> (i32, i32) {
    %c0_i32 = arith.constant 0 : i32
    %c0_i32_0 = arith.constant 0 : i32
    return %arg0, %c0_i32 : i32, i32
  }
  func.func @transform_15(%arg0: i32) -> (i32, i32) {
    %c0_i32 = arith.constant 0 : i32
    %c0_i32_0 = arith.constant 0 : i32
    return %arg0, %c0_i32 : i32, i32
  }
}

</mosaic_0001>

<llo_original>
// kernel: tpu_custom_call.1
$region0: #{tpu_custom_call.1}
  #allocation0 [shape = 'u32[]', space=smem, size = 0x4, offset = 0x4, fixed_abs, tag = 'smem constant byte address 0x4 - core index']
  #allocation1 [shape = 'u32[72,128]{1,0:T(1,128)}', space=vmem, size = 0x9000, scoped, tag = 'internal scratch']
  %s0 = inlined_call_operand.hbm [shape: f32[128,256], index: 0, kind: input, shape index: {}]
  %s1 = inlined_call_operand.hbm [shape: f32[128,128], index: 1, kind: input, shape index: {}]
  %s2 = inlined_call_operand.hbm [shape: bf16[256,640], index: 2, kind: input, shape index: {}]
  %s3 = inlined_call_operand.hbm [shape: f32[1,640], index: 3, kind: input, shape index: {}]
  %s4 = inlined_call_operand.hbm [shape: bf16[640,256], index: 4, kind: input, shape index: {}]
  %s5 = inlined_call_operand.vmem [shape: f32[1,256], index: 5, kind: input, shape index: {}]
  %s6 = inlined_call_operand.hbm [shape: bf16[256,256], index: 6, kind: input, shape index: {}]
  %s7 = inlined_call_operand.vmem [shape: f32[1,256], index: 7, kind: input, shape index: {}]
  %s8 = inlined_call_operand.hbm [shape: bf16[128,256], index: 8, kind: input, shape index: {}]
  %s9 = inlined_call_operand.hbm [shape: f32[1,256], index: 9, kind: input, shape index: {}]
  %s10 = inlined_call_operand.hbm [shape: bf16[256,640], index: 10, kind: input, shape index: {}]
  %s11 = inlined_call_operand.vmem [shape: f32[1,640], index: 11, kind: input, shape index: {}]
  %s12 = inlined_call_operand.hbm [shape: bf16[640,256], index: 12, kind: input, shape index: {}]
  %s13 = inlined_call_operand.vmem [shape: f32[1,256], index: 13, kind: input, shape index: {}]
  %s14 = inlined_call_operand.hbm [shape: f32[128,256], index: 14, kind: output, shape index: {0}]
  %s15 = inlined_call_operand.hbm [shape: f32[128,256], index: 15, kind: output, shape index: {1}]
  %16 = xla_tuple %s14, %s15
  %s17 = sld [smem:[#allocation0]]
  $region114: #{tpu_custom_call.1} parent=0
    _
  %s19 = ssub.s32 1, %s17
  %s20 = scalar_select 0, %s19, %s17
  $region1: #{tpu_custom_call.1} parent=0
    #allocation2 [shape = 'u8[131072]{0}', space=vmem, size = 0x20000, scoped, tag = 'input window, operand 0, single buffered']
    #allocation3 [shape = 's32[1]{0}', space=sflag, size = 0x4, scoped, tag = 'scoped memory for tpu_custom_call.1']
    #allocation4 [shape = 's32[1]{0}', space=sflag, size = 0x4, scoped, tag = 'scoped memory for tpu_custom_call.1']
    #allocation5 [shape = 'u8[65536]{0}', space=vmem, size = 0x10000, scoped, tag = 'input window, operand 1, single buffered']
    #allocation6 [shape = 's32[1]{0}', space=sflag, size = 0x4, scoped, tag = 'scoped memory for tpu_custom_call.1']
    #allocation7 [shape = 'u8[327680]{0}', space=vmem, size = 0x50000, scoped, tag = 'input window, operand 2, single buffered']
    #allocation8 [shape = 'u8[2560]{0}', space=vmem, size = 0xc00, scoped, tag = 'input window, operand 3, single buffered']
    #allocation9 [shape = 's32[1]{0}', space=sflag, size = 0x4, scoped, tag = 'scoped memory for tpu_custom_call.1']
    #allocation10 [shape = 'u8[327680]{0}', space=vmem, size = 0x50000, scoped, tag = 'input window, operand 4, single buffered']
    #allocation11 [shape = 'u8[131072]{0}', space=vmem, size = 0x20000, scoped, tag = 'input window, operand 6, single buffered']
    #allocation12 [shape = 's32[1]{0}', space=sflag, size = 0x4, scoped, tag = 'scoped memory for tpu_custom_call.1']
    #allocation13 [shape = 'u8[65536]{0}', space=vmem, size = 0x10000, scoped, tag = 'input window, operand 8, single buffered']
    #allocation14 [shape = 'u8[1024]{0}', space=vmem, size = 0x400, scoped, tag = 'input window, operand 9, single buffered']
    #allocation15 [shape = 's32[1]{0}', space=sflag, size = 0x4, scoped, tag = 'scoped memory for tpu_custom_call.1']
    #allocation16 [shape = 'u8[327680]{0}', space=vmem, size = 0x50000, scoped, tag = 'input window, operand 10, single buffered']
    #allocation17 [shape = 'u8[327680]{0}', space=vmem, size = 0x50000, scoped, tag = 'input window, operand 12, single buffered']
    #allocation18 [shape = 's32[1]{0}', space=sflag, size = 0x4, scoped, tag = 'scoped memory for tpu_custom_call.1']
    #allocation19 [shape = 'u8[131072]{0}', space=vmem, size = 0x20000, scoped, tag = 'output window, operand 0, single buffered']
    #allocation20 [shape = 'u8[131072]{0}', space=vmem, size = 0x20000, scoped, tag = 'output window, operand 1, single buffered']
    #allocation21 [shape = 's32[1]{0}', space=sflag, size = 0x4, scoped, tag = 'scoped memory for tpu_custom_call.1']
    %21 = vsyncpa [#allocation3], 0
    %22 = vsyncpa [#allocation6], 0
    %23 = vsyncpa [#allocation9], 0
    %24 = vsyncpa [#allocation12], 0
    %25 = vsyncpa [#allocation15], 0
    %26 = vsyncpa [#allocation18], 0
    %27 = vsyncpa [#allocation4], 0
    %28 = vsyncpa [#allocation21], 0
    // Predicated region
    $region2: #{tpu_custom_call.1} parent=1 // pred_check
      _
    $region3: #{tpu_custom_call.1} parent=1 // pred_check_branch
      %30 = sbr.rel (0) target = $region5
    $region4: #{tpu_custom_call.1} parent=1 // pred_region
      %32 = vsyncadd [#allocation3], 0
      %s33 = sshll.u32 %s0, 4
      %s34 = int_to_ptr.hbm [resolvable:$true] %s33
      %s35 = sshll.u32 [#allocation2], 4
      %s36 = int_to_ptr.vmem [resolvable:$true] %s35
      %41 = dma.hbm_to_vmem [thread:$0]  %s34, 4096, %s36, [#allocation3], 256, 256, 16
    $region5: #{tpu_custom_call.1} parent=1 // pred_fallthru
      _
    // Predicated region
    $region6: #{tpu_custom_call.1} parent=1 // pred_check
      _
    $region7: #{tpu_custom_call.1} parent=1 // pred_check_branch
      %43 = sbr.rel (0) target = $region9
    $region8: #{tpu_custom_call.1} parent=1 // pred_region
      %45 = vsyncadd [#allocation6], 0
      %s46 = sshll.u32 %s1, 4
      %s47 = int_to_ptr.hbm [resolvable:$true] %s46
      %s48 = sshll.u32 [#allocation5], 4
      %s49 = int_to_ptr.vmem [resolvable:$true] %s48
      %54 = dma.hbm_to_vmem [thread:$0]  %s47, 2048, %s49, [#allocation6], 128, 128, 8
    $region9: #{tpu_custom_call.1} parent=1 // pred_fallthru
      _
    // Predicated region
    $region10: #{tpu_custom_call.1} parent=1 // pred_check
      _
    $region11: #{tpu_custom_call.1} parent=1 // pred_check_branch
      %56 = sbr.rel (0) target = $region13
    $region12: #{tpu_custom_call.1} parent=1 // pred_region
      %58 = vsyncadd [#allocation6], 0
      %s59 = sshll.u32 %s2, 4
      %s60 = int_to_ptr.hbm [resolvable:$true] %s59
      %s61 = sshll.u32 [#allocation7], 4
      %s62 = int_to_ptr.vmem [resolvable:$true] %s61
      %67 = dma.hbm_to_vmem [thread:$0]  %s60, 10240, %s62, [#allocation6], 320, 320, 20
    $region13: #{tpu_custom_call.1} parent=1 // pred_fallthru
      _
    // Predicated region
    $region14: #{tpu_custom_call.1} parent=1 // pred_check
      _
    $region15: #{tpu_custom_call.1} parent=1 // pred_check_branch
      %69 = sbr.rel (0) target = $region17
    $region16: #{tpu_custom_call.1} parent=1 // pred_region
      %71 = vsyncadd [#allocation9], 0
      %s73 = sshll.u32 %s3, 4
      %s74 = int_to_ptr.hbm [resolvable:$true] %s73
      %s75 = sshll.u32 [#allocation8], 4
      %s76 = int_to_ptr.vmem [resolvable:$true] %s75
      %78 = dma.hbm_to_vmem [thread:$0]  %s74, 80, %s76, [#allocation9]
    $region17: #{tpu_custom_call.1} parent=1 // pred_fallthru
      _
    // Predicated region
    $region18: #{tpu_custom_call.1} parent=1 // pred_check
      _
    $region19: #{tpu_custom_call.1} parent=1 // pred_check_branch
      %80 = sbr.rel (0) target = $region21
    $region20: #{tpu_custom_call.1} parent=1 // pred_region
      %82 = vsyncadd [#allocation9], 0
      %s83 = sshll.u32 %s4, 4
      %s84 = int_to_ptr.hbm [resolvable:$true] %s83
      %s85 = sshll.u32 [#allocation10], 4
      %s86 = int_to_ptr.vmem [resolvable:$true] %s85
      %91 = dma.hbm_to_vmem [thread:$0]  %s84, 10240, %s86, [#allocation9], 128, 128, 8
    $region21: #{tpu_custom_call.1} parent=1 // pred_fallthru
      _
    // Predicated region
    $region22: #{tpu_custom_call.1} parent=1 // pred_check
      _
    $region23: #{tpu_custom_call.1} parent=1 // pred_check_branch
      %93 = sbr.rel (0) target = $region25
    $region24: #{tpu_custom_call.1} parent=1 // pred_region
      _
    $region25: #{tpu_custom_call.1} parent=1 // pred_fallthru
      _
    // Predicated region
    $region26: #{tpu_custom_call.1} parent=1 // pred_check
      _
    $region27: #{tpu_custom_call.1} parent=1 // pred_check_branch
      %95 = sbr.rel (0) target = $region29
    $region28: #{tpu_custom_call.1} parent=1 // pred_region
      %97 = vsyncadd [#allocation12], 0
      %s98 = sshll.u32 %s6, 4
      %s99 = int_to_ptr.hbm [resolvable:$true] %s98
      %s100 = sshll.u32 [#allocation11], 4
      %s101 = int_to_ptr.vmem [resolvable:$true] %s100
      %106 = dma.hbm_to_vmem [thread:$0]  %s99, 4096, %s101, [#allocation12], 128, 128, 8
    $region29: #{tpu_custom_call.1} parent=1 // pred_fallthru
      _
    // Predicated region
    $region30: #{tpu_custom_call.1} parent=1 // pred_check
      _
    $region31: #{tpu_custom_call.1} parent=1 // pred_check_branch
      %108 = sbr.rel (0) target = $region33
    $region32: #{tpu_custom_call.1} parent=1 // pred_region
      _
    $region33: #{tpu_custom_call.1} parent=1 // pred_fallthru
      _
    // Predicated region
    $region34: #{tpu_custom_call.1} parent=1 // pred_check
      _
    $region35: #{tpu_custom_call.1} parent=1 // pred_check_branch
      %110 = sbr.rel (0) target = $region37
    $region36: #{tpu_custom_call.1} parent=1 // pred_region
      %112 = vsyncadd [#allocation12], 0
      %s113 = sshll.u32 %s8, 4
      %s114 = int_to_ptr.hbm [resolvable:$true] %s113
      %s115 = sshll.u32 [#allocation13], 4
      %s116 = int_to_ptr.vmem [resolvable:$true] %s115
      %121 = dma.hbm_to_vmem [thread:$0]  %s114, 2048, %s116, [#allocation12], 128, 128, 8
    $region37: #{tpu_custom_call.1} parent=1 // pred_fallthru
      _
    // Predicated region
    $region38: #{tpu_custom_call.1} parent=1 // pred_check
      _
    $region39: #{tpu_custom_call.1} parent=1 // pred_check_branch
      %123 = sbr.rel (0) target = $region41
    $region40: #{tpu_custom_call.1} parent=1 // pred_region
      %125 = vsyncadd [#allocation15], 0
      %s127 = sshll.u32 %s9, 4
      %s128 = int_to_ptr.hbm [resolvable:$true] %s127
      %s129 = sshll.u32 [#allocation14], 4
      %s130 = int_to_ptr.vmem [resolvable:$true] %s129
      %132 = dma.hbm_to_vmem [thread:$0]  %s128, 32, %s130, [#allocation15]
    $region41: #{tpu_custom_call.1} parent=1 // pred_fallthru
      _
    // Predicated region
    $region42: #{tpu_custom_call.1} parent=1 // pred_check
      _
    $region43: #{tpu_custom_call.1} parent=1 // pred_check_branch
      %134 = sbr.rel (0) target = $region45
    $region44: #{tpu_custom_call.1} parent=1 // pred_region
      %136 = vsyncadd [#allocation15], 0
      %s137 = sshll.u32 %s10, 4
      %s138 = int_to_ptr.hbm [resolvable:$true] %s137
      %s139 = sshll.u32 [#allocation16], 4
      %s140 = int_to_ptr.vmem [resolvable:$true] %s139
      %145 = dma.hbm_to_vmem [thread:$0]  %s138, 10240, %s140, [#allocation15], 320, 320, 20
    $region45: #{tpu_custom_call.1} parent=1 // pred_fallthru
      _
    // Predicated region
    $region46: #{tpu_custom_call.1} parent=1 // pred_check
      _
    $region47: #{tpu_custom_call.1} parent=1 // pred_check_branch
      %147 = sbr.rel (0) target = $region49
    $region48: #{tpu_custom_call.1} parent=1 // pred_region
      _
    $region49: #{tpu_custom_call.1} parent=1 // pred_fallthru
      _
    // Predicated region
    $region50: #{tpu_custom_call.1} parent=1 // pred_check
      _
    $region51: #{tpu_custom_call.1} parent=1 // pred_check_branch
      %149 = sbr.rel (0) target = $region53
    $region52: #{tpu_custom_call.1} parent=1 // pred_region
      %151 = vsyncadd [#allocation18], 0
      %s152 = sshll.u32 %s12, 4
      %s153 = int_to_ptr.hbm [resolvable:$true] %s152
      %s154 = sshll.u32 [#allocation17], 4
      %s155 = int_to_ptr.vmem [resolvable:$true] %s154
      %160 = dma.hbm_to_vmem [thread:$0]  %s153, 10240, %s155, [#allocation18], 128, 128, 8
    $region53: #{tpu_custom_call.1} parent=1 // pred_fallthru
      _
    // Predicated region
    $region54: #{tpu_custom_call.1} parent=1 // pred_check
      _
    $region55: #{tpu_custom_call.1} parent=1 // pred_check_branch
      %162 = sbr.rel (0) target = $region57
    $region56: #{tpu_custom_call.1} parent=1 // pred_region
      _
    $region57: #{tpu_custom_call.1} parent=1 // pred_fallthru
      _
    // Predicated region
    $region58: #{tpu_custom_call.1} parent=1 // pred_check
      _
    $region59: #{tpu_custom_call.1} parent=1 // pred_check_branch
      %164 = sbr.rel (0) target = $region61
    $region60: #{tpu_custom_call.1} parent=1 // pred_region
      %166 = dma.done [#allocation3], 4096
    $region61: #{tpu_custom_call.1} parent=1 // pred_fallthru
      _
    // Predicated region
    $region62: #{tpu_custom_call.1} parent=1 // pred_check
      _
    $region63: #{tpu_custom_call.1} parent=1 // pred_check_branch
      %168 = sbr.rel (0) target = $region65
    $region64: #{tpu_custom_call.1} parent=1 // pred_region
      %170 = dma.done [#allocation6], 2048
    $region65: #{tpu_custom_call.1} parent=1 // pred_fallthru
      _
    // Predicated region
    $region66: #{tpu_custom_call.1} parent=1 // pred_check
      _
    $region67: #{tpu_custom_call.1} parent=1 // pred_check_branch
      %172 = sbr.rel (0) target = $region69
    $region68: #{tpu_custom_call.1} parent=1 // pred_region
      %174 = dma.done [#allocation6], 10240
    $region69: #{tpu_custom_call.1} parent=1 // pred_fallthru
      _
    // Predicated region
    $region70: #{tpu_custom_call.1} parent=1 // pred_check
      _
    $region71: #{tpu_custom_call.1} parent=1 // pred_check_branch
      %176 = sbr.rel (0) target = $region73
    $region72: #{tpu_custom_call.1} parent=1 // pred_region
      %178 = dma.done [#allocation9], 80
    $region73: #{tpu_custom_call.1} parent=1 // pred_fallthru
      _
    // Predicated region
    $region74: #{tpu_custom_call.1} parent=1 // pred_check
      _
    $region75: #{tpu_custom_call.1} parent=1 // pred_check_branch
      %180 = sbr.rel (0) target = $region77
    $region76: #{tpu_custom_call.1} parent=1 // pred_region
      %182 = dma.done [#allocation9], 10240
    $region77: #{tpu_custom_call.1} parent=1 // pred_fallthru
      _
    // Predicated region
    $region78: #{tpu_custom_call.1} parent=1 // pred_check
      _
    $region79: #{tpu_custom_call.1} parent=1 // pred_check_branch
      %184 = sbr.rel (0) target = $region81
    $region80: #{tpu_custom_call.1} parent=1 // pred_region
      %186 = dma.done [#allocation12], 4096
    $region81: #{tpu_custom_call.1} parent=1 // pred_fallthru
      _
    // Predicated region
    $region82: #{tpu_custom_call.1} parent=1 // pred_check
      _
    $region83: #{tpu_custom_call.1} parent=1 // pred_check_branch
      %188 = sbr.rel (0) target = $region85
    $region84: #{tpu_custom_call.1} parent=1 // pred_region
      %190 = dma.done [#allocation12], 2048
    $region85: #{tpu_custom_call.1} parent=1 // pred_fallthru
      _
    // Predicated region
    $region86: #{tpu_custom_call.1} parent=1 // pred_check
      _
    $region87: #{tpu_custom_call.1} parent=1 // pred_check_branch
      %192 = sbr.rel (0) target = $region89
    $region88: #{tpu_custom_call.1} parent=1 // pred_region
      %194 = dma.done [#allocation15], 32
    $region89: #{tpu_custom_call.1} parent=1 // pred_fallthru
      _
    // Predicated region
    $region90: #{tpu_custom_call.1} parent=1 // pred_check
      _
    $region91: #{tpu_custom_call.1} parent=1 // pred_check_branch
      %196 = sbr.rel (0) target = $region93
    $region92: #{tpu_custom_call.1} parent=1 // pred_region
      %198 = dma.done [#allocation15], 10240
    $region93: #{tpu_custom_call.1} parent=1 // pred_fallthru
      _
    // Predicated region
    $region94: #{tpu_custom_call.1} parent=1 // pred_check
      _
    $region95: #{tpu_custom_call.1} parent=1 // pred_check_branch
      %200 = sbr.rel (0) target = $region97
    $region96: #{tpu_custom_call.1} parent=1 // pred_region
      %202 = dma.done [#allocation18], 10240
    $region97: #{tpu_custom_call.1} parent=1 // pred_fallthru
      _
    %v203 = vld [vmem:[#allocation2] sm:$0xff]
    %v204 = vld [vmem:[#allocation2 + $0x8] sm:$0xff]
    %v205 = vld [vmem:[#allocation2 + $0x10] sm:$0xff]
    %v206 = vld [vmem:[#allocation2 + $0x18] sm:$0xff]
    %v207 = vld [vmem:[#allocation2 + $0x20] sm:$0xff]
    %v208 = vld [vmem:[#allocation2 + $0x28] sm:$0xff]
    %v209 = vld [vmem:[#allocation2 + $0x30] sm:$0xff]
    %v210 = vld [vmem:[#allocation2 + $0x38] sm:$0xff]
    %v211 = vld [vmem:[#allocation2 + $0x40] sm:$0xff]
    %v212 = vld [vmem:[#allocation2 + $0x48] sm:$0xff]
    %v213 = vld [vmem:[#allocation2 + $0x50] sm:$0xff]
    %v214 = vld [vmem:[#allocation2 + $0x58] sm:$0xff]
    %v215 = vld [vmem:[#allocation2 + $0x60] sm:$0xff]
    %v216 = vld [vmem:[#allocation2 + $0x68] sm:$0xff]
    %v217 = vld [vmem:[#allocation2 + $0x70] sm:$0xff]
    %v218 = vld [vmem:[#allocation2 + $0x78] sm:$0xff]
    %v219 = vld [vmem:[#allocation2 + $0x80] sm:$0xff]
    %v220 = vld [vmem:[#allocation2 + $0x88] sm:$0xff]
    %v221 = vld [vmem:[#allocation2 + $0x90] sm:$0xff]
    %v222 = vld [vmem:[#allocation2 + $0x98] sm:$0xff]
    %v223 = vld [vmem:[#allocation2 + $0xa0] sm:$0xff]
    %v224 = vld [vmem:[#allocation2 + $0xa8] sm:$0xff]
    %v225 = vld [vmem:[#allocation2 + $0xb0] sm:$0xff]
    %v226 = vld [vmem:[#allocation2 + $0xb8] sm:$0xff]
    %v227 = vld [vmem:[#allocation2 + $0xc0] sm:$0xff]
    %v228 = vld [vmem:[#allocation2 + $0xc8] sm:$0xff]
    %v229 = vld [vmem:[#allocation2 + $0xd0] sm:$0xff]
    %v230 = vld [vmem:[#allocation2 + $0xd8] sm:$0xff]
    %v231 = vld [vmem:[#allocation2 + $0xe0] sm:$0xff]
    %v232 = vld [vmem:[#allocation2 + $0xe8] sm:$0xff]
    %v233 = vld [vmem:[#allocation2 + $0xf0] sm:$0xff]
    %v234 = vld [vmem:[#allocation2 + $0xf8] sm:$0xff]
    %v235 = vpack.c.bf16 %v205, %v203
    %v236 = vpack.c.bf16 %v206, %v204
    %v237 = vpack.c.bf16 %v209, %v207
    %v238 = vpack.c.bf16 %v210, %v208
    %v239 = vpack.c.bf16 %v213, %v211
    %v240 = vpack.c.bf16 %v214, %v212
    %v241 = vpack.c.bf16 %v217, %v215
    %v242 = vpack.c.bf16 %v218, %v216
    %v243 = vpack.c.bf16 %v221, %v219
    %v244 = vpack.c.bf16 %v222, %v220
    %v245 = vpack.c.bf16 %v225, %v223
    %v246 = vpack.c.bf16 %v226, %v224
    %v247 = vpack.c.bf16 %v229, %v227
    %v248 = vpack.c.bf16 %v230, %v228
    %v249 = vpack.c.bf16 %v233, %v231
    %v250 = vpack.c.bf16 %v234, %v232
    %v251 = vld [vmem:[#allocation7] sm:$0xff]
    %v252 = vld [vmem:[#allocation7 + $0x8] sm:$0xff]
    %v253 = vld [vmem:[#allocation7 + $0x10] sm:$0xf]
    %v254 = vld [vmem:[#allocation7 + $0x14] sm:$0xff]
    %v255 = vld [vmem:[#allocation7 + $0x1c] sm:$0xff]
    %v256 = vld [vmem:[#allocation7 + $0x24] sm:$0xf]
    %v257 = vld [vmem:[#allocation7 + $0x28] sm:$0xff]
    %v258 = vld [vmem:[#allocation7 + $0x30] sm:$0xff]
    %v259 = vld [vmem:[#allocation7 + $0x38] sm:$0xf]
    %v260 = vld [vmem:[#allocation7 + $0x3c] sm:$0xff]
    %v261 = vld [vmem:[#allocation7 + $0x44] sm:$0xff]
    %v262 = vld [vmem:[#allocation7 + $0x4c] sm:$0xf]
    %v263 = vld [vmem:[#allocation7 + $0x50] sm:$0xff]
    %v264 = vld [vmem:[#allocation7 + $0x58] sm:$0xff]
    %v265 = vld [vmem:[#allocation7 + $0x60] sm:$0xf]
    %v266 = vld [vmem:[#allocation7 + $0x64] sm:$0xff]
    %v267 = vld [vmem:[#allocation7 + $0x6c] sm:$0xff]
    %v268 = vld [vmem:[#allocation7 + $0x74] sm:$0xf]
    %v269 = vld [vmem:[#allocation7 + $0x78] sm:$0xff]
    %v270 = vld [vmem:[#allocation7 + $0x80] sm:$0xff]
    %v271 = vld [vmem:[#allocation7 + $0x88] sm:$0xf]
    %v272 = vld [vmem:[#allocation7 + $0x8c] sm:$0xff]
    %v273 = vld [vmem:[#allocation7 + $0x94] sm:$0xff]
    %v274 = vld [vmem:[#allocation7 + $0x9c] sm:$0xf]
    %v275 = vld [vmem:[#allocation7 + $0xa0] sm:$0xff]
    %v276 = vld [vmem:[#allocation7 + $0xa8] sm:$0xff]
    %v277 = vld [vmem:[#allocation7 + $0xb0] sm:$0xf]
    %v278 = vld [vmem:[#allocation7 + $0xb4] sm:$0xff]
    %v279 = vld [vmem:[#allocation7 + $0xbc] sm:$0xff]
    %v280 = vld [vmem:[#allocation7 + $0xc4] sm:$0xf]
    %v281 = vld [vmem:[#allocation7 + $0xc8] sm:$0xff]
    %v282 = vld [vmem:[#allocation7 + $0xd0] sm:$0xff]
    %v283 = vld [vmem:[#allocation7 + $0xd8] sm:$0xf]
    %v284 = vld [vmem:[#allocation7 + $0xdc] sm:$0xff]
    %v285 = vld [vmem:[#allocation7 + $0xe4] sm:$0xff]
    %v286 = vld [vmem:[#allocation7 + $0xec] sm:$0xf]
    %v287 = vld [vmem:[#allocation7 + $0xf0] sm:$0xff]
    %v288 = vld [vmem:[#allocation7 + $0xf8] sm:$0xff]
    %v289 = vld [vmem:[#allocation7 + $0x100] sm:$0xf]
    %v290 = vld [vmem:[#allocation7 + $0x104] sm:$0xff]
    %v291 = vld [vmem:[#allocation7 + $0x10c] sm:$0xff]
    %v292 = vld [vmem:[#allocation7 + $0x114] sm:$0xf]
    %v293 = vld [vmem:[#allocation7 + $0x118] sm:$0xff]
    %v294 = vld [vmem:[#allocation7 + $0x120] sm:$0xff]
    %v295 = vld [vmem:[#allocation7 + $0x128] sm:$0xf]
    %v296 = vld [vmem:[#allocation7 + $0x12c] sm:$0xff]
    %v297 = vld [vmem:[#allocation7 + $0x134] sm:$0xff]
    %v298 = vld [vmem:[#allocation7 + $0x13c] sm:$0xf]
    %v299 = vld [vmem:[#allocation7 + $0x140] sm:$0xff]
    %v300 = vld [vmem:[#allocation7 + $0x148] sm:$0xff]
    %v301 = vld [vmem:[#allocation7 + $0x150] sm:$0xf]
    %v302 = vld [vmem:[#allocation7 + $0x154] sm:$0xff]
    %v303 = vld [vmem:[#allocation7 + $0x15c] sm:$0xff]
    %v304 = vld [vmem:[#allocation7 + $0x164] sm:$0xf]
    %v305 = vld [vmem:[#allocation7 + $0x168] sm:$0xff]
    %v306 = vld [vmem:[#allocation7 + $0x170] sm:$0xff]
    %v307 = vld [vmem:[#allocation7 + $0x178] sm:$0xf]
    %v308 = vld [vmem:[#allocation7 + $0x17c] sm:$0xff]
    %v309 = vld [vmem:[#allocation7 + $0x184] sm:$0xff]
    %v310 = vld [vmem:[#allocation7 + $0x18c] sm:$0xf]
    %v311 = vld [vmem:[#allocation7 + $0x190] sm:$0xff]
    %v312 = vld [vmem:[#allocation7 + $0x198] sm:$0xff]
    %v313 = vld [vmem:[#allocation7 + $0x1a0] sm:$0xf]
    %v314 = vld [vmem:[#allocation7 + $0x1a4] sm:$0xff]
    %v315 = vld [vmem:[#allocation7 + $0x1ac] sm:$0xff]
    %v316 = vld [vmem:[#allocation7 + $0x1b4] sm:$0xf]
    %v317 = vld [vmem:[#allocation7 + $0x1b8] sm:$0xff]
    %v318 = vld [vmem:[#allocation7 + $0x1c0] sm:$0xff]
    %v319 = vld [vmem:[#allocation7 + $0x1c8] sm:$0xf]
    %v320 = vld [vmem:[#allocation7 + $0x1cc] sm:$0xff]
    %v321 = vld [vmem:[#allocation7 + $0x1d4] sm:$0xff]
    %v322 = vld [vmem:[#allocation7 + $0x1dc] sm:$0xf]
    %v323 = vld [vmem:[#allocation7 + $0x1e0] sm:$0xff]
    %v324 = vld [vmem:[#allocation7 + $0x1e8] sm:$0xff]
    %v325 = vld [vmem:[#allocation7 + $0x1f0] sm:$0xf]
    %v326 = vld [vmem:[#allocation7 + $0x1f4] sm:$0xff]
    %v327 = vld [vmem:[#allocation7 + $0x1fc] sm:$0xff]
    %v328 = vld [vmem:[#allocation7 + $0x204] sm:$0xf]
    %v329 = vld [vmem:[#allocation7 + $0x208] sm:$0xff]
    %v330 = vld [vmem:[#allocation7 + $0x210] sm:$0xff]
    %v331 = vld [vmem:[#allocation7 + $0x218] sm:$0xf]
    %v332 = vld [vmem:[#allocation7 + $0x21c] sm:$0xff]
    %v333 = vld [vmem:[#allocation7 + $0x224] sm:$0xff]
    %v334 = vld [vmem:[#allocation7 + $0x22c] sm:$0xf]
    %v335 = vld [vmem:[#allocation7 + $0x230] sm:$0xff]
    %v336 = vld [vmem:[#allocation7 + $0x238] sm:$0xff]
    %v337 = vld [vmem:[#allocation7 + $0x240] sm:$0xf]
    %v338 = vld [vmem:[#allocation7 + $0x244] sm:$0xff]
    %v339 = vld [vmem:[#allocation7 + $0x24c] sm:$0xff]
    %v340 = vld [vmem:[#allocation7 + $0x254] sm:$0xf]
    %v341 = vld [vmem:[#allocation7 + $0x258] sm:$0xff]
    %v342 = vld [vmem:[#allocation7 + $0x260] sm:$0xff]
    %v343 = vld [vmem:[#allocation7 + $0x268] sm:$0xf]
    %v344 = vld [vmem:[#allocation7 + $0x26c] sm:$0xff]
    %v345 = vld [vmem:[#allocation7 + $0x274] sm:$0xff]
    %v346 = vld [vmem:[#allocation7 + $0x27c] sm:$0xf]
    %v347 = vld [vmem:[#allocation8] sm:$0x1f]
    %v349 = vperm.slane %v347, 0
    %v350 = vperm.slane %v347, 1
    %v351 = vperm.slane %v347, 2
    %v352 = vperm.slane %v347, 3
    %v353 = vperm.slane %v347, 4
    %v455 = vunpack.c.l.b16 %v251
    %v456 = vunpack.c.h.b16 %v251
    %v457 = vunpack.c.l.b16 %v252
    %v458 = vunpack.c.h.b16 %v252
    %v459 = vunpack.c.l.b16 %v253
    %v460 = vunpack.c.l.b16 %v254
    %v461 = vunpack.c.h.b16 %v254
    %v462 = vunpack.c.l.b16 %v255
    %v463 = vunpack.c.h.b16 %v255
    %v464 = vunpack.c.l.b16 %v256
    %v465 = vunpack.c.l.b16 %v257
    %v466 = vunpack.c.h.b16 %v257
    %v467 = vunpack.c.l.b16 %v258
    %v468 = vunpack.c.h.b16 %v258
    %v469 = vunpack.c.l.b16 %v259
    %v470 = vunpack.c.l.b16 %v260
    %v471 = vunpack.c.h.b16 %v260
    %v472 = vunpack.c.l.b16 %v261
    %v473 = vunpack.c.h.b16 %v261
    %v474 = vunpack.c.l.b16 %v262
    %v475 = vunpack.c.l.b16 %v263
    %v476 = vunpack.c.h.b16 %v263
    %v477 = vunpack.c.l.b16 %v264
    %v478 = vunpack.c.h.b16 %v264
    %v479 = vunpack.c.l.b16 %v265
    %v480 = vunpack.c.l.b16 %v266
    %v481 = vunpack.c.h.b16 %v266
    %v482 = vunpack.c.l.b16 %v267
    %v483 = vunpack.c.h.b16 %v267
    %v484 = vunpack.c.l.b16 %v268
    %v485 = vunpack.c.l.b16 %v269
    %v486 = vunpack.c.h.b16 %v269
    %v487 = vunpack.c.l.b16 %v270
    %v488 = vunpack.c.h.b16 %v270
    %v489 = vunpack.c.l.b16 %v271
    %v490 = vunpack.c.l.b16 %v272
    %v491 = vunpack.c.h.b16 %v272
    %v492 = vunpack.c.l.b16 %v273
    %v493 = vunpack.c.h.b16 %v273
    %v494 = vunpack.c.l.b16 %v274
    %v495 = vunpack.c.l.b16 %v275
    %v496 = vunpack.c.h.b16 %v275
    %v497 = vunpack.c.l.b16 %v276
    %v498 = vunpack.c.h.b16 %v276
    %v499 = vunpack.c.l.b16 %v277
    %v500 = vunpack.c.l.b16 %v278
    %v501 = vunpack.c.h.b16 %v278
    %v502 = vunpack.c.l.b16 %v279
    %v503 = vunpack.c.h.b16 %v279
    %v504 = vunpack.c.l.b16 %v280
    %v505 = vunpack.c.l.b16 %v281
    %v506 = vunpack.c.h.b16 %v281
    %v507 = vunpack.c.l.b16 %v282
    %v508 = vunpack.c.h.b16 %v282
    %v509 = vunpack.c.l.b16 %v283
    %v510 = vunpack.c.l.b16 %v284
    %v511 = vunpack.c.h.b16 %v284
    %v512 = vunpack.c.l.b16 %v285
    %v513 = vunpack.c.h.b16 %v285
    %v514 = vunpack.c.l.b16 %v286
    %v515 = vunpack.c.l.b16 %v287
    %v516 = vunpack.c.h.b16 %v287
    %v517 = vunpack.c.l.b16 %v288
    %v518 = vunpack.c.h.b16 %v288
    %v519 = vunpack.c.l.b16 %v289
    %v520 = vunpack.c.l.b16 %v290
    %v521 = vunpack.c.h.b16 %v290
    %v522 = vunpack.c.l.b16 %v291
    %v523 = vunpack.c.h.b16 %v291
    %v524 = vunpack.c.l.b16 %v292
    %v525 = vunpack.c.l.b16 %v293
    %v526 = vunpack.c.h.b16 %v293
    %v527 = vunpack.c.l.b16 %v294
    %v528 = vunpack.c.h.b16 %v294
    %v529 = vunpack.c.l.b16 %v295
    %v530 = vunpack.c.l.b16 %v296
    %v531 = vunpack.c.h.b16 %v296
    %v532 = vunpack.c.l.b16 %v297
    %v533 = vunpack.c.h.b16 %v297
    %v534 = vunpack.c.l.b16 %v298
    %v535 = vunpack.c.l.b16 %v299
    %v536 = vunpack.c.h.b16 %v299
    %v537 = vunpack.c.l.b16 %v300
    %v538 = vunpack.c.h.b16 %v300
    %v539 = vunpack.c.l.b16 %v301
    %v540 = vunpack.c.l.b16 %v302
    %v541 = vunpack.c.h.b16 %v302
    %v542 = vunpack.c.l.b16 %v303
    %v543 = vunpack.c.h.b16 %v303
    %v544 = vunpack.c.l.b16 %v304
    %v545 = vunpack.c.l.b16 %v305
    %v546 = vunpack.c.h.b16 %v305
    %v547 = vunpack.c.l.b16 %v306
    %v548 = vunpack.c.h.b16 %v306
    %v549 = vunpack.c.l.b16 %v307
    %v550 = vunpack.c.l.b16 %v308
    %v551 = vunpack.c.h.b16 %v308
    %v552 = vunpack.c.l.b16 %v309
    %v553 = vunpack.c.h.b16 %v309
    %v554 = vunpack.c.l.b16 %v310
    %v555 = vunpack.c.l.b16 %v311
    %v556 = vunpack.c.h.b16 %v311
    %v557 = vunpack.c.l.b16 %v312
    %v558 = vunpack.c.h.b16 %v312
    %v559 = vunpack.c.l.b16 %v313
    %v560 = vunpack.c.l.b16 %v314
    %v561 = vunpack.c.h.b16 %v314
    %v562 = vunpack.c.l.b16 %v315
    %v563 = vunpack.c.h.b16 %v315
    %v564 = vunpack.c.l.b16 %v316
    %v565 = vunpack.c.l.b16 %v317
    %v566 = vunpack.c.h.b16 %v317
    %v567 = vunpack.c.l.b16 %v318
    %v568 = vunpack.c.h.b16 %v318
    %v569 = vunpack.c.l.b16 %v319
    %v570 = vunpack.c.l.b16 %v320
    %v571 = vunpack.c.h.b16 %v320
    %v572 = vunpack.c.l.b16 %v321
    %v573 = vunpack.c.h.b16 %v321
    %v574 = vunpack.c.l.b16 %v322
    %v575 = vunpack.c.l.b16 %v323
    %v576 = vunpack.c.h.b16 %v323
    %v577 = vunpack.c.l.b16 %v324
    %v578 = vunpack.c.h.b16 %v324
    %v579 = vunpack.c.l.b16 %v325
    %v580 = vunpack.c.l.b16 %v326
    %v581 = vunpack.c.h.b16 %v326
    %v582 = vunpack.c.l.b16 %v327
    %v583 = vunpack.c.h.b16 %v327
    %v584 = vunpack.c.l.b16 %v328
    %v585 = vunpack.c.l.b16 %v329
    %v586 = vunpack.c.h.b16 %v329
    %v587 = vunpack.c.l.b16 %v330
    %v588 = vunpack.c.h.b16 %v330
    %v589 = vunpack.c.l.b16 %v331
    %v590 = vunpack.c.l.b16 %v332
    %v591 = vunpack.c.h.b16 %v332
    %v592 = vunpack.c.l.b16 %v333
    %v593 = vunpack.c.h.b16 %v333
    %v594 = vunpack.c.l.b16 %v334
    %v595 = vunpack.c.l.b16 %v335
    %v596 = vunpack.c.h.b16 %v335
    %v597 = vunpack.c.l.b16 %v336
    %v598 = vunpack.c.h.b16 %v336
    %v599 = vunpack.c.l.b16 %v337
    %v600 = vunpack.c.l.b16 %v338
    %v601 = vunpack.c.h.b16 %v338
    %v602 = vunpack.c.l.b16 %v339
    %v603 = vunpack.c.h.b16 %v339
    %v604 = vunpack.c.l.b16 %v340
    %v605 = vunpack.c.l.b16 %v341
    %v606 = vunpack.c.h.b16 %v341
    %v607 = vunpack.c.l.b16 %v342
    %v608 = vunpack.c.h.b16 %v342
    %v609 = vunpack.c.l.b16 %v343
    %v610 = vunpack.c.l.b16 %v344
    %v611 = vunpack.c.h.b16 %v344
    %v612 = vunpack.c.l.b16 %v345
    %v613 = vunpack.c.h.b16 %v345
    %v614 = vunpack.c.l.b16 %v346
    %v615 = vpack.c.b16 %v460, %v455
    %v616 = vpack.c.b16 %v461, %v456
    %v617 = vpack.c.b16 %v462, %v457
    %v618 = vpack.c.b16 %v463, %v458
    %v619 = vpack.c.b16 %v464, %v459
    %v620 = vpack.c.b16 %v470, %v465
    %v621 = vpack.c.b16 %v471, %v466
    %v622 = vpack.c.b16 %v472, %v467
    %v623 = vpack.c.b16 %v473, %v468
    %v624 = vpack.c.b16 %v474, %v469
    %v625 = vpack.c.b16 %v480, %v475
    %v626 = vpack.c.b16 %v481, %v476
    %v627 = vpack.c.b16 %v482, %v477
    %v628 = vpack.c.b16 %v483, %v478
    %v629 = vpack.c.b16 %v484, %v479
    %v630 = vpack.c.b16 %v490, %v485
    %v631 = vpack.c.b16 %v491, %v486
    %v632 = vpack.c.b16 %v492, %v487
    %v633 = vpack.c.b16 %v493, %v488
    %v634 = vpack.c.b16 %v494, %v489
    %v635 = vpack.c.b16 %v500, %v495
    %v636 = vpack.c.b16 %v501, %v496
    %v637 = vpack.c.b16 %v502, %v497
    %v638 = vpack.c.b16 %v503, %v498
    %v639 = vpack.c.b16 %v504, %v499
    %v640 = vpack.c.b16 %v510, %v505
    %v641 = vpack.c.b16 %v511, %v506
    %v642 = vpack.c.b16 %v512, %v507
    %v643 = vpack.c.b16 %v513, %v508
    %v644 = vpack.c.b16 %v514, %v509
    %v645 = vpack.c.b16 %v520, %v515
    %v646 = vpack.c.b16 %v521, %v516
    %v647 = vpack.c.b16 %v522, %v517
    %v648 = vpack.c.b16 %v523, %v518
    %v649 = vpack.c.b16 %v524, %v519
    %v650 = vpack.c.b16 %v530, %v525
    %v651 = vpack.c.b16 %v531, %v526
    %v652 = vpack.c.b16 %v532, %v527
    %v653 = vpack.c.b16 %v533, %v528
    %v654 = vpack.c.b16 %v534, %v529
    %v655 = vpack.c.b16 %v540, %v535
    %v656 = vpack.c.b16 %v541, %v536
    %v657 = vpack.c.b16 %v542, %v537
    %v658 = vpack.c.b16 %v543, %v538
    %v659 = vpack.c.b16 %v544, %v539
    %v660 = vpack.c.b16 %v550, %v545
    %v661 = vpack.c.b16 %v551, %v546
    %v662 = vpack.c.b16 %v552, %v547
    %v663 = vpack.c.b16 %v553, %v548
    %v664 = vpack.c.b16 %v554, %v549
    %v665 = vpack.c.b16 %v560, %v555
    %v666 = vpack.c.b16 %v561, %v556
    %v667 = vpack.c.b16 %v562, %v557
    %v668 = vpack.c.b16 %v563, %v558
    %v669 = vpack.c.b16 %v564, %v559
    %v670 = vpack.c.b16 %v570, %v565
    %v671 = vpack.c.b16 %v571, %v566
    %v672 = vpack.c.b16 %v572, %v567
    %v673 = vpack.c.b16 %v573, %v568
    %v674 = vpack.c.b16 %v574, %v569
    %v675 = vpack.c.b16 %v580, %v575
    %v676 = vpack.c.b16 %v581, %v576
    %v677 = vpack.c.b16 %v582, %v577
    %v678 = vpack.c.b16 %v583, %v578
    %v679 = vpack.c.b16 %v584, %v579
    %v680 = vpack.c.b16 %v590, %v585
    %v681 = vpack.c.b16 %v591, %v586
    %v682 = vpack.c.b16 %v592, %v587
    %v683 = vpack.c.b16 %v593, %v588
    %v684 = vpack.c.b16 %v594, %v589
    %v685 = vpack.c.b16 %v600, %v595
    %v686 = vpack.c.b16 %v601, %v596
    %v687 = vpack.c.b16 %v602, %v597
    %v688 = vpack.c.b16 %v603, %v598
    %v689 = vpack.c.b16 %v604, %v599
    %v690 = vpack.c.b16 %v610, %v605
    %v691 = vpack.c.b16 %v611, %v606
    %v692 = vpack.c.b16 %v612, %v607
    %v693 = vpack.c.b16 %v613, %v608
    %v694 = vpack.c.b16 %v614, %v609
    %775 = vmatpush.bf16.msra.mxu0 %v650
    %776 = vmatpush.bf16.msra.mxu0 %v645
    %777 = vmatpush.bf16.msra.mxu0 %v640
    %778 = vmatpush.bf16.msra.mxu0 %v635
    %779 = vmatpush.bf16.msra.mxu0 %v630
    %780 = vmatpush.bf16.msra.mxu0 %v625
    %781 = vmatpush.bf16.msra.mxu0 %v620
    %782 = vmatpush.bf16.msra.mxu0 %v615
    %783 = vmatmul.bf16.gmra.mxu0 %v235
    %v784 = vpop.f32.mrf.mxu0
    %v785 = vadd.f32 %v349, %v784
    %v786 = vpop.f32.mrf.mxu0
    %v787 = vadd.f32 %v349, %v786
    %788 = vmatmul.bf16.gmra.mxu0 %v237
    %v789 = vpop.f32.mrf.mxu0
    %v790 = vadd.f32 %v349, %v789
    %v791 = vpop.f32.mrf.mxu0
    %v792 = vadd.f32 %v349, %v791
    %793 = vmatmul.bf16.gmra.mxu0 %v239
    %v794 = vpop.f32.mrf.mxu0
    %v795 = vadd.f32 %v349, %v794
    %v796 = vpop.f32.mrf.mxu0
    %v797 = vadd.f32 %v349, %v796
    %798 = vmatmul.bf16.gmra.mxu0 %v241
    %v799 = vpop.f32.mrf.mxu0
    %v800 = vadd.f32 %v349, %v799
    %v801 = vpop.f32.mrf.mxu0
    %v802 = vadd.f32 %v349, %v801
    %803 = vmatmul.bf16.gmra.mxu0 %v243
    %v804 = vpop.f32.mrf.mxu0
    %v805 = vadd.f32 %v349, %v804
    %v806 = vpop.f32.mrf.mxu0
    %v807 = vadd.f32 %v349, %v806
    %808 = vmatmul.bf16.gmra.mxu0 %v245
    %v809 = vpop.f32.mrf.mxu0
    %v810 = vadd.f32 %v349, %v809
    %v811 = vpop.f32.mrf.mxu0
    %v812 = vadd.f32 %v349, %v811
    %813 = vmatmul.bf16.gmra.mxu0 %v247
    %v814 = vpop.f32.mrf.mxu0
    %v815 = vadd.f32 %v349, %v814
    %v816 = vpop.f32.mrf.mxu0
    %v817 = vadd.f32 %v349, %v816
    %818 = vmatmul.bf16.gmra.mxu0 %v249
    %v819 = vpop.f32.mrf.mxu0
    %v820 = vadd.f32 %v349, %v819
    %v821 = vpop.f32.mrf.mxu0
    %v822 = vadd.f32 %v349, %v821
    %823 = vdwg.mxu0
    %824 = vmatpush.bf16.msra.mxu0 %v690
    %825 = vmatpush.bf16.msra.mxu0 %v685
    %826 = vmatpush.bf16.msra.mxu0 %v680
    %827 = vmatpush.bf16.msra.mxu0 %v675
    %828 = vmatpush.bf16.msra.mxu0 %v670
    %829 = vmatpush.bf16.msra.mxu0 %v665
    %830 = vmatpush.bf16.msra.mxu0 %v660
    %831 = vmatpush.bf16.msra.mxu0 %v655
    %832 = vmatmul.bf16.gmra.mxu0 %v236
    %v833 = vpop.f32.mrf.mxu0
    %v834 = vadd.f32 %v785, %v833
    %v835 = vpop.f32.mrf.mxu0
    %v836 = vadd.f32 %v787, %v835
    %837 = vmatmul.bf16.gmra.mxu0 %v238
    %v838 = vpop.f32.mrf.mxu0
    %v839 = vadd.f32 %v790, %v838
    %v840 = vpop.f32.mrf.mxu0
    %v841 = vadd.f32 %v792, %v840
    %842 = vmatmul.bf16.gmra.mxu0 %v240
    %v843 = vpop.f32.mrf.mxu0
    %v844 = vadd.f32 %v795, %v843
    %v845 = vpop.f32.mrf.mxu0
    %v846 = vadd.f32 %v797, %v845
    %847 = vmatmul.bf16.gmra.mxu0 %v242
    %v848 = vpop.f32.mrf.mxu0
    %v849 = vadd.f32 %v800, %v848
    %v850 = vpop.f32.mrf.mxu0
    %v851 = vadd.f32 %v802, %v850
    %852 = vmatmul.bf16.gmra.mxu0 %v244
    %v853 = vpop.f32.mrf.mxu0
    %v854 = vadd.f32 %v805, %v853
    %v855 = vpop.f32.mrf.mxu0
    %v856 = vadd.f32 %v807, %v855
    %857 = vmatmul.bf16.gmra.mxu0 %v246
    %v858 = vpop.f32.mrf.mxu0
    %v859 = vadd.f32 %v810, %v858
    %v860 = vpop.f32.mrf.mxu0
    %v861 = vadd.f32 %v812, %v860
    %862 = vmatmul.bf16.gmra.mxu0 %v248
    %v863 = vpop.f32.mrf.mxu0
    %v864 = vadd.f32 %v815, %v863
    %v865 = vpop.f32.mrf.mxu0
    %v866 = vadd.f32 %v817, %v865
    %867 = vmatmul.bf16.gmra.mxu0 %v250
    %v868 = vpop.f32.mrf.mxu0
    %v869 = vadd.f32 %v820, %v868
    %v870 = vpop.f32.mrf.mxu0
    %v871 = vadd.f32 %v822, %v870
    %872 = vdwg.mxu0
    %873 = vmatpush.bf16.msra.mxu0 %v651
    %874 = vmatpush.bf16.msra.mxu0 %v646
    %875 = vmatpush.bf16.msra.mxu0 %v641
    %876 = vmatpush.bf16.msra.mxu0 %v636
    %877 = vmatpush.bf16.msra.mxu0 %v631
    %878 = vmatpush.bf16.msra.mxu0 %v626
    %879 = vmatpush.bf16.msra.mxu0 %v621
    %880 = vmatpush.bf16.msra.mxu0 %v616
    %881 = vmatmul.bf16.gmra.mxu0 %v235
    %v882 = vpop.f32.mrf.mxu0
    %v883 = vadd.f32 %v350, %v882
    %v884 = vpop.f32.mrf.mxu0
    %v885 = vadd.f32 %v350, %v884
    %886 = vmatmul.bf16.gmra.mxu0 %v237
    %v887 = vpop.f32.mrf.mxu0
    %v888 = vadd.f32 %v350, %v887
    %v889 = vpop.f32.mrf.mxu0
    %v890 = vadd.f32 %v350, %v889
    %891 = vmatmul.bf16.gmra.mxu0 %v239
    %v892 = vpop.f32.mrf.mxu0
    %v893 = vadd.f32 %v350, %v892
    %v894 = vpop.f32.mrf.mxu0
    %v895 = vadd.f32 %v350, %v894
    %896 = vmatmul.bf16.gmra.mxu0 %v241
    %v897 = vpop.f32.mrf.mxu0
    %v898 = vadd.f32 %v350, %v897
    %v899 = vpop.f32.mrf.mxu0
    %v900 = vadd.f32 %v350, %v899
    %901 = vmatmul.bf16.gmra.mxu0 %v243
    %v902 = vpop.f32.mrf.mxu0
    %v903 = vadd.f32 %v350, %v902
    %v904 = vpop.f32.mrf.mxu0
    %v905 = vadd.f32 %v350, %v904
    %906 = vmatmul.bf16.gmra.mxu0 %v245
    %v907 = vpop.f32.mrf.mxu0
    %v908 = vadd.f32 %v350, %v907
    %v909 = vpop.f32.mrf.mxu0
    %v910 = vadd.f32 %v350, %v909
    %911 = vmatmul.bf16.gmra.mxu0 %v247
    %v912 = vpop.f32.mrf.mxu0
    %v913 = vadd.f32 %v350, %v912
    %v914 = vpop.f32.mrf.mxu0
    %v915 = vadd.f32 %v350, %v914
    %916 = vmatmul.bf16.gmra.mxu0 %v249
    %v917 = vpop.f32.mrf.mxu0
    %v918 = vadd.f32 %v350, %v917
    %v919 = vpop.f32.mrf.mxu0
    %v920 = vadd.f32 %v350, %v919
    %921 = vdwg.mxu0
    %922 = vmatpush.bf16.msra.mxu0 %v691
    %923 = vmatpush.bf16.msra.mxu0 %v686
    %924 = vmatpush.bf16.msra.mxu0 %v681
    %925 = vmatpush.bf16.msra.mxu0 %v676
    %926 = vmatpush.bf16.msra.mxu0 %v671
    %927 = vmatpush.bf16.msra.mxu0 %v666
    %928 = vmatpush.bf16.msra.mxu0 %v661
    %929 = vmatpush.bf16.msra.mxu0 %v656
    %930 = vmatmul.bf16.gmra.mxu0 %v236
    %v931 = vpop.f32.mrf.mxu0
    %v932 = vadd.f32 %v883, %v931
    %v933 = vpop.f32.mrf.mxu0
    %v934 = vadd.f32 %v885, %v933
    %935 = vmatmul.bf16.gmra.mxu0 %v238
    %v936 = vpop.f32.mrf.mxu0
    %v937 = vadd.f32 %v888, %v936
    %v938 = vpop.f32.mrf.mxu0
    %v939 = vadd.f32 %v890, %v938
    %940 = vmatmul.bf16.gmra.mxu0 %v240
    %v941 = vpop.f32.mrf.mxu0
    %v942 = vadd.f32 %v893, %v941
    %v943 = vpop.f32.mrf.mxu0
    %v944 = vadd.f32 %v895, %v943
    %945 = vmatmul.bf16.gmra.mxu0 %v242
    %v946 = vpop.f32.mrf.mxu0
    %v947 = vadd.f32 %v898, %v946
    %v948 = vpop.f32.mrf.mxu0
    %v949 = vadd.f32 %v900, %v948
    %950 = vmatmul.bf16.gmra.mxu0 %v244
    %v951 = vpop.f32.mrf.mxu0
    %v952 = vadd.f32 %v903, %v951
    %v953 = vpop.f32.mrf.mxu0
    %v954 = vadd.f32 %v905, %v953
    %955 = vmatmul.bf16.gmra.mxu0 %v246
    %v956 = vpop.f32.mrf.mxu0
    %v957 = vadd.f32 %v908, %v956
    %v958 = vpop.f32.mrf.mxu0
    %v959 = vadd.f32 %v910, %v958
    %960 = vmatmul.bf16.gmra.mxu0 %v248
    %v961 = vpop.f32.mrf.mxu0
    %v962 = vadd.f32 %v913, %v961
    %v963 = vpop.f32.mrf.mxu0
    %v964 = vadd.f32 %v915, %v963
    %965 = vmatmul.bf16.gmra.mxu0 %v250
    %v966 = vpop.f32.mrf.mxu0
    %v967 = vadd.f32 %v918, %v966
    %v968 = vpop.f32.mrf.mxu0
    %v969 = vadd.f32 %v920, %v968
    %970 = vdwg.mxu0
    %971 = vmatpush.bf16.msra.mxu0 %v652
    %972 = vmatpush.bf16.msra.mxu0 %v647
    %973 = vmatpush.bf16.msra.mxu0 %v642
    %974 = vmatpush.bf16.msra.mxu0 %v637
    %975 = vmatpush.bf16.msra.mxu0 %v632
    %976 = vmatpush.bf16.msra.mxu0 %v627
    %977 = vmatpush.bf16.msra.mxu0 %v622
    %978 = vmatpush.bf16.msra.mxu0 %v617
    %979 = vmatmul.bf16.gmra.mxu0 %v235
    %v980 = vpop.f32.mrf.mxu0
    %v981 = vadd.f32 %v351, %v980
    %v982 = vpop.f32.mrf.mxu0
    %v983 = vadd.f32 %v351, %v982
    %984 = vmatmul.bf16.gmra.mxu0 %v237
    %v985 = vpop.f32.mrf.mxu0
    %v986 = vadd.f32 %v351, %v985
    %v987 = vpop.f32.mrf.mxu0
    %v988 = vadd.f32 %v351, %v987
    %989 = vmatmul.bf16.gmra.mxu0 %v239
    %v990 = vpop.f32.mrf.mxu0
    %v991 = vadd.f32 %v351, %v990
    %v992 = vpop.f32.mrf.mxu0
    %v993 = vadd.f32 %v351, %v992
    %994 = vmatmul.bf16.gmra.mxu0 %v241
    %v995 = vpop.f32.mrf.mxu0
    %v996 = vadd.f32 %v351, %v995
    %v997 = vpop.f32.mrf.mxu0
    %v998 = vadd.f32 %v351, %v997
    %999 = vmatmul.bf16.gmra.mxu0 %v243
    %v1000 = vpop.f32.mrf.mxu0
    %v1001 = vadd.f32 %v351, %v1000
    %v1002 = vpop.f32.mrf.mxu0
    %v1003 = vadd.f32 %v351, %v1002
    %1004 = vmatmul.bf16.gmra.mxu0 %v245
    %v1005 = vpop.f32.mrf.mxu0
    %v1006 = vadd.f32 %v351, %v1005
    %v1007 = vpop.f32.mrf.mxu0
    %v1008 = vadd.f32 %v351, %v1007
    %1009 = vmatmul.bf16.gmra.mxu0 %v247
    %v1010 = vpop.f32.mrf.mxu0
    %v1011 = vadd.f32 %v351, %v1010
    %v1012 = vpop.f32.mrf.mxu0
    %v1013 = vadd.f32 %v351, %v1012
    %1014 = vmatmul.bf16.gmra.mxu0 %v249
    %v1015 = vpop.f32.mrf.mxu0
    %v1016 = vadd.f32 %v351, %v1015
    %v1017 = vpop.f32.mrf.mxu0
    %v1018 = vadd.f32 %v351, %v1017
    %1019 = vdwg.mxu0
    %1020 = vmatpush.bf16.msra.mxu0 %v692
    %1021 = vmatpush.bf16.msra.mxu0 %v687
    %1022 = vmatpush.bf16.msra.mxu0 %v682
    %1023 = vmatpush.bf16.msra.mxu0 %v677
    %1024 = vmatpush.bf16.msra.mxu0 %v672
    %1025 = vmatpush.bf16.msra.mxu0 %v667
    %1026 = vmatpush.bf16.msra.mxu0 %v662
    %1027 = vmatpush.bf16.msra.mxu0 %v657
    %1028 = vmatmul.bf16.gmra.mxu0 %v236
    %v1029 = vpop.f32.mrf.mxu0
    %v1030 = vadd.f32 %v981, %v1029
    %v1031 = vpop.f32.mrf.mxu0
    %v1032 = vadd.f32 %v983, %v1031
    %1033 = vmatmul.bf16.gmra.mxu0 %v238
    %v1034 = vpop.f32.mrf.mxu0
    %v1035 = vadd.f32 %v986, %v1034
    %v1036 = vpop.f32.mrf.mxu0
    %v1037 = vadd.f32 %v988, %v1036
    %1038 = vmatmul.bf16.gmra.mxu0 %v240
    %v1039 = vpop.f32.mrf.mxu0
    %v1040 = vadd.f32 %v991, %v1039
    %v1041 = vpop.f32.mrf.mxu0
    %v1042 = vadd.f32 %v993, %v1041
    %1043 = vmatmul.bf16.gmra.mxu0 %v242
    %v1044 = vpop.f32.mrf.mxu0
    %v1045 = vadd.f32 %v996, %v1044
    %v1046 = vpop.f32.mrf.mxu0
    %v1047 = vadd.f32 %v998, %v1046
    %1048 = vmatmul.bf16.gmra.mxu0 %v244
    %v1049 = vpop.f32.mrf.mxu0
    %v1050 = vadd.f32 %v1001, %v1049
    %v1051 = vpop.f32.mrf.mxu0
    %v1052 = vadd.f32 %v1003, %v1051
    %1053 = vmatmul.bf16.gmra.mxu0 %v246
    %v1054 = vpop.f32.mrf.mxu0
    %v1055 = vadd.f32 %v1006, %v1054
    %v1056 = vpop.f32.mrf.mxu0
    %v1057 = vadd.f32 %v1008, %v1056
    %1058 = vmatmul.bf16.gmra.mxu0 %v248
    %v1059 = vpop.f32.mrf.mxu0
    %v1060 = vadd.f32 %v1011, %v1059
    %v1061 = vpop.f32.mrf.mxu0
    %v1062 = vadd.f32 %v1013, %v1061
    %1063 = vmatmul.bf16.gmra.mxu0 %v250
    %v1064 = vpop.f32.mrf.mxu0
    %v1065 = vadd.f32 %v1016, %v1064
    %v1066 = vpop.f32.mrf.mxu0
    %v1067 = vadd.f32 %v1018, %v1066
    %1068 = vdwg.mxu0
    %1069 = vmatpush.bf16.msra.mxu0 %v653
    %1070 = vmatpush.bf16.msra.mxu0 %v648
    %1071 = vmatpush.bf16.msra.mxu0 %v643
    %1072 = vmatpush.bf16.msra.mxu0 %v638
    %1073 = vmatpush.bf16.msra.mxu0 %v633
    %1074 = vmatpush.bf16.msra.mxu0 %v628
    %1075 = vmatpush.bf16.msra.mxu0 %v623
    %1076 = vmatpush.bf16.msra.mxu0 %v618
    %1077 = vmatmul.bf16.gmra.mxu0 %v235
    %v1078 = vpop.f32.mrf.mxu0
    %v1079 = vadd.f32 %v352, %v1078
    %v1080 = vpop.f32.mrf.mxu0
    %v1081 = vadd.f32 %v352, %v1080
    %1082 = vmatmul.bf16.gmra.mxu0 %v237
    %v1083 = vpop.f32.mrf.mxu0
    %v1084 = vadd.f32 %v352, %v1083
    %v1085 = vpop.f32.mrf.mxu0
    %v1086 = vadd.f32 %v352, %v1085
    %1087 = vmatmul.bf16.gmra.mxu0 %v239
    %v1088 = vpop.f32.mrf.mxu0
    %v1089 = vadd.f32 %v352, %v1088
    %v1090 = vpop.f32.mrf.mxu0
    %v1091 = vadd.f32 %v352, %v1090
    %1092 = vmatmul.bf16.gmra.mxu0 %v241
    %v1093 = vpop.f32.mrf.mxu0
    %v1094 = vadd.f32 %v352, %v1093
    %v1095 = vpop.f32.mrf.mxu0
    %v1096 = vadd.f32 %v352, %v1095
    %1097 = vmatmul.bf16.gmra.mxu0 %v243
    %v1098 = vpop.f32.mrf.mxu0
    %v1099 = vadd.f32 %v352, %v1098
    %v1100 = vpop.f32.mrf.mxu0
    %v1101 = vadd.f32 %v352, %v1100
    %1102 = vmatmul.bf16.gmra.mxu0 %v245
    %v1103 = vpop.f32.mrf.mxu0
    %v1104 = vadd.f32 %v352, %v1103
    %v1105 = vpop.f32.mrf.mxu0
    %v1106 = vadd.f32 %v352, %v1105
    %1107 = vmatmul.bf16.gmra.mxu0 %v247
    %v1108 = vpop.f32.mrf.mxu0
    %v1109 = vadd.f32 %v352, %v1108
    %v1110 = vpop.f32.mrf.mxu0
    %v1111 = vadd.f32 %v352, %v1110
    %1112 = vmatmul.bf16.gmra.mxu0 %v249
    %v1113 = vpop.f32.mrf.mxu0
    %v1114 = vadd.f32 %v352, %v1113
    %v1115 = vpop.f32.mrf.mxu0
    %v1116 = vadd.f32 %v352, %v1115
    %1117 = vdwg.mxu0
    %1118 = vmatpush.bf16.msra.mxu0 %v693
    %1119 = vmatpush.bf16.msra.mxu0 %v688
    %1120 = vmatpush.bf16.msra.mxu0 %v683
    %1121 = vmatpush.bf16.msra.mxu0 %v678
    %1122 = vmatpush.bf16.msra.mxu0 %v673
    %1123 = vmatpush.bf16.msra.mxu0 %v668
    %1124 = vmatpush.bf16.msra.mxu0 %v663
    %1125 = vmatpush.bf16.msra.mxu0 %v658
    %1126 = vmatmul.bf16.gmra.mxu0 %v236
    %v1127 = vpop.f32.mrf.mxu0
    %v1128 = vadd.f32 %v1079, %v1127
    %v1129 = vpop.f32.mrf.mxu0
    %v1130 = vadd.f32 %v1081, %v1129
    %1131 = vmatmul.bf16.gmra.mxu0 %v238
    %v1132 = vpop.f32.mrf.mxu0
    %v1133 = vadd.f32 %v1084, %v1132
    %v1134 = vpop.f32.mrf.mxu0
    %v1135 = vadd.f32 %v1086, %v1134
    %1136 = vmatmul.bf16.gmra.mxu0 %v240
    %v1137 = vpop.f32.mrf.mxu0
    %v1138 = vadd.f32 %v1089, %v1137
    %v1139 = vpop.f32.mrf.mxu0
    %v1140 = vadd.f32 %v1091, %v1139
    %1141 = vmatmul.bf16.gmra.mxu0 %v242
    %v1142 = vpop.f32.mrf.mxu0
    %v1143 = vadd.f32 %v1094, %v1142
    %v1144 = vpop.f32.mrf.mxu0
    %v1145 = vadd.f32 %v1096, %v1144
    %1146 = vmatmul.bf16.gmra.mxu0 %v244
    %v1147 = vpop.f32.mrf.mxu0
    %v1148 = vadd.f32 %v1099, %v1147
    %v1149 = vpop.f32.mrf.mxu0
    %v1150 = vadd.f32 %v1101, %v1149
    %1151 = vmatmul.bf16.gmra.mxu0 %v246
    %v1152 = vpop.f32.mrf.mxu0
    %v1153 = vadd.f32 %v1104, %v1152
    %v1154 = vpop.f32.mrf.mxu0
    %v1155 = vadd.f32 %v1106, %v1154
    %1156 = vmatmul.bf16.gmra.mxu0 %v248
    %v1157 = vpop.f32.mrf.mxu0
    %v1158 = vadd.f32 %v1109, %v1157
    %v1159 = vpop.f32.mrf.mxu0
    %v1160 = vadd.f32 %v1111, %v1159
    %1161 = vmatmul.bf16.gmra.mxu0 %v250
    %v1162 = vpop.f32.mrf.mxu0
    %v1163 = vadd.f32 %v1114, %v1162
    %v1164 = vpop.f32.mrf.mxu0
    %v1165 = vadd.f32 %v1116, %v1164
    %1166 = vdwg.mxu0
    %1167 = vmatpush.bf16.msra.mxu0 %v654
    %1168 = vmatpush.bf16.msra.mxu0 %v649
    %1169 = vmatpush.bf16.msra.mxu0 %v644
    %1170 = vmatpush.bf16.msra.mxu0 %v639
    %1171 = vmatpush.bf16.msra.mxu0 %v634
    %1172 = vmatpush.bf16.msra.mxu0 %v629
    %1173 = vmatpush.bf16.msra.mxu0 %v624
    %1174 = vmatpush.bf16.msra.mxu0 %v619
    %1175 = vmatmul.bf16.gmra.mxu0 %v235
    %v1176 = vpop.f32.mrf.mxu0
    %v1177 = vadd.f32 %v353, %v1176
    %v1178 = vpop.f32.mrf.mxu0
    %v1179 = vadd.f32 %v353, %v1178
    %1180 = vmatmul.bf16.gmra.mxu0 %v237
    %v1181 = vpop.f32.mrf.mxu0
    %v1182 = vadd.f32 %v353, %v1181
    %v1183 = vpop.f32.mrf.mxu0
    %v1184 = vadd.f32 %v353, %v1183
    %1185 = vmatmul.bf16.gmra.mxu0 %v239
    %v1186 = vpop.f32.mrf.mxu0
    %v1187 = vadd.f32 %v353, %v1186
    %v1188 = vpop.f32.mrf.mxu0
    %v1189 = vadd.f32 %v353, %v1188
    %1190 = vmatmul.bf16.gmra.mxu0 %v241
    %v1191 = vpop.f32.mrf.mxu0
    %v1192 = vadd.f32 %v353, %v1191
    %v1193 = vpop.f32.mrf.mxu0
    %v1194 = vadd.f32 %v353, %v1193
    %1195 = vmatmul.bf16.gmra.mxu0 %v243
    %v1196 = vpop.f32.mrf.mxu0
    %v1197 = vadd.f32 %v353, %v1196
    %v1198 = vpop.f32.mrf.mxu0
    %v1199 = vadd.f32 %v353, %v1198
    %1200 = vmatmul.bf16.gmra.mxu0 %v245
    %v1201 = vpop.f32.mrf.mxu0
    %v1202 = vadd.f32 %v353, %v1201
    %v1203 = vpop.f32.mrf.mxu0
    %v1204 = vadd.f32 %v353, %v1203
    %1205 = vmatmul.bf16.gmra.mxu0 %v247
    %v1206 = vpop.f32.mrf.mxu0
    %v1207 = vadd.f32 %v353, %v1206
    %v1208 = vpop.f32.mrf.mxu0
    %v1209 = vadd.f32 %v353, %v1208
    %1210 = vmatmul.bf16.gmra.mxu0 %v249
    %v1211 = vpop.f32.mrf.mxu0
    %v1212 = vadd.f32 %v353, %v1211
    %v1213 = vpop.f32.mrf.mxu0
    %v1214 = vadd.f32 %v353, %v1213
    %1215 = vdwg.mxu0
    %1216 = vmatpush.bf16.msra.mxu0 %v694
    %1217 = vmatpush.bf16.msra.mxu0 %v689
    %1218 = vmatpush.bf16.msra.mxu0 %v684
    %1219 = vmatpush.bf16.msra.mxu0 %v679
    %1220 = vmatpush.bf16.msra.mxu0 %v674
    %1221 = vmatpush.bf16.msra.mxu0 %v669
    %1222 = vmatpush.bf16.msra.mxu0 %v664
    %1223 = vmatpush.bf16.msra.mxu0 %v659
    %1224 = vmatmul.bf16.gmra.mxu0 %v236
    %v1225 = vpop.f32.mrf.mxu0
    %v1226 = vadd.f32 %v1177, %v1225
    %v1227 = vpop.f32.mrf.mxu0
    %v1228 = vadd.f32 %v1179, %v1227
    %1229 = vmatmul.bf16.gmra.mxu0 %v238
    %v1230 = vpop.f32.mrf.mxu0
    %v1231 = vadd.f32 %v1182, %v1230
    %v1232 = vpop.f32.mrf.mxu0
    %v1233 = vadd.f32 %v1184, %v1232
    %1234 = vmatmul.bf16.gmra.mxu0 %v240
    %v1235 = vpop.f32.mrf.mxu0
    %v1236 = vadd.f32 %v1187, %v1235
    %v1237 = vpop.f32.mrf.mxu0
    %v1238 = vadd.f32 %v1189, %v1237
    %1239 = vmatmul.bf16.gmra.mxu0 %v242
    %v1240 = vpop.f32.mrf.mxu0
    %v1241 = vadd.f32 %v1192, %v1240
    %v1242 = vpop.f32.mrf.mxu0
    %v1243 = vadd.f32 %v1194, %v1242
    %1244 = vmatmul.bf16.gmra.mxu0 %v244
    %v1245 = vpop.f32.mrf.mxu0
    %v1246 = vadd.f32 %v1197, %v1245
    %v1247 = vpop.f32.mrf.mxu0
    %v1248 = vadd.f32 %v1199, %v1247
    %1249 = vmatmul.bf16.gmra.mxu0 %v246
    %v1250 = vpop.f32.mrf.mxu0
    %v1251 = vadd.f32 %v1202, %v1250
    %v1252 = vpop.f32.mrf.mxu0
    %v1253 = vadd.f32 %v1204, %v1252
    %1254 = vmatmul.bf16.gmra.mxu0 %v248
    %v1255 = vpop.f32.mrf.mxu0
    %v1256 = vadd.f32 %v1207, %v1255
    %v1257 = vpop.f32.mrf.mxu0
    %v1258 = vadd.f32 %v1209, %v1257
    %1259 = vmatmul.bf16.gmra.mxu0 %v250
    %v1260 = vpop.f32.mrf.mxu0
    %v1261 = vadd.f32 %v1212, %v1260
    %v1262 = vpop.f32.mrf.mxu0
    %v1263 = vadd.f32 %v1214, %v1262
    %1264 = vdwg.mxu0
    %v1265 = vtanh.pop %v834
    %v1266 = vtanh.pop %v932
    %v1267 = vtanh.pop %v1030
    %v1268 = vtanh.pop %v1128
    %v1269 = vtanh.pop %v1226
    %v1270 = vtanh.pop %v836
    %v1271 = vtanh.pop %v934
    %v1272 = vtanh.pop %v1032
    %v1273 = vtanh.pop %v1130
    %v1274 = vtanh.pop %v1228
    %v1275 = vtanh.pop %v839
    %v1276 = vtanh.pop %v937
    %v1277 = vtanh.pop %v1035
    %v1278 = vtanh.pop %v1133
    %v1279 = vtanh.pop %v1231
    %v1280 = vtanh.pop %v841
    %v1281 = vtanh.pop %v939
    %v1282 = vtanh.pop %v1037
    %v1283 = vtanh.pop %v1135
    %v1284 = vtanh.pop %v1233
    %v1285 = vtanh.pop %v844
    %v1286 = vtanh.pop %v942
    %v1287 = vtanh.pop %v1040
    %v1288 = vtanh.pop %v1138
    %v1289 = vtanh.pop %v1236
    %v1290 = vtanh.pop %v846
    %v1291 = vtanh.pop %v944
    %v1292 = vtanh.pop %v1042
    %v1293 = vtanh.pop %v1140
    %v1294 = vtanh.pop %v1238
    %v1295 = vtanh.pop %v849
    %v1296 = vtanh.pop %v947
    %v1297 = vtanh.pop %v1045
    %v1298 = vtanh.pop %v1143
    %v1299 = vtanh.pop %v1241
    %v1300 = vtanh.pop %v851
    %v1301 = vtanh.pop %v949
    %v1302 = vtanh.pop %v1047
    %v1303 = vtanh.pop %v1145
    %v1304 = vtanh.pop %v1243
    %v1305 = vtanh.pop %v854
    %v1306 = vtanh.pop %v952
    %v1307 = vtanh.pop %v1050
    %v1308 = vtanh.pop %v1148
    %v1309 = vtanh.pop %v1246
    %v1310 = vtanh.pop %v856
    %v1311 = vtanh.pop %v954
    %v1312 = vtanh.pop %v1052
    %v1313 = vtanh.pop %v1150
    %v1314 = vtanh.pop %v1248
    %v1315 = vtanh.pop %v859
    %v1316 = vtanh.pop %v957
    %v1317 = vtanh.pop %v1055
    %v1318 = vtanh.pop %v1153
    %v1319 = vtanh.pop %v1251
    %v1320 = vtanh.pop %v861
    %v1321 = vtanh.pop %v959
    %v1322 = vtanh.pop %v1057
    %v1323 = vtanh.pop %v1155
    %v1324 = vtanh.pop %v1253
    %v1325 = vtanh.pop %v864
    %v1326 = vtanh.pop %v962
    %v1327 = vtanh.pop %v1060
    %v1328 = vtanh.pop %v1158
    %v1329 = vtanh.pop %v1256
    %v1330 = vtanh.pop %v866
    %v1331 = vtanh.pop %v964
    %v1332 = vtanh.pop %v1062
    %v1333 = vtanh.pop %v1160
    %v1334 = vtanh.pop %v1258
    %v1335 = vtanh.pop %v869
    %v1336 = vtanh.pop %v967
    %v1337 = vtanh.pop %v1065
    %v1338 = vtanh.pop %v1163
    %v1339 = vtanh.pop %v1261
    %v1340 = vtanh.pop %v871
    %v1341 = vtanh.pop %v969
    %v1342 = vtanh.pop %v1067
    %v1343 = vtanh.pop %v1165
    %v1344 = vtanh.pop %v1263
    %v1345 = vpack.c.bf16 %v1270, %v1265
    %v1346 = vpack.c.bf16 %v1271, %v1266
    %v1347 = vpack.c.bf16 %v1272, %v1267
    %v1348 = vpack.c.bf16 %v1273, %v1268
    %v1349 = vpack.c.bf16 %v1274, %v1269
    %v1350 = vpack.c.bf16 %v1280, %v1275
    %v1351 = vpack.c.bf16 %v1281, %v1276
    %v1352 = vpack.c.bf16 %v1282, %v1277
    %v1353 = vpack.c.bf16 %v1283, %v1278
    %v1354 = vpack.c.bf16 %v1284, %v1279
    %v1355 = vpack.c.bf16 %v1290, %v1285
    %v1356 = vpack.c.bf16 %v1291, %v1286
    %v1357 = vpack.c.bf16 %v1292, %v1287
    %v1358 = vpack.c.bf16 %v1293, %v1288
    %v1359 = vpack.c.bf16 %v1294, %v1289
    %v1360 = vpack.c.bf16 %v1300, %v1295
    %v1361 = vpack.c.bf16 %v1301, %v1296
    %v1362 = vpack.c.bf16 %v1302, %v1297
    %v1363 = vpack.c.bf16 %v1303, %v1298
    %v1364 = vpack.c.bf16 %v1304, %v1299
    %v1365 = vpack.c.bf16 %v1310, %v1305
    %v1366 = vpack.c.bf16 %v1311, %v1306
    %v1367 = vpack.c.bf16 %v1312, %v1307
    %v1368 = vpack.c.bf16 %v1313, %v1308
    %v1369 = vpack.c.bf16 %v1314, %v1309
    %v1370 = vpack.c.bf16 %v1320, %v1315
    %v1371 = vpack.c.bf16 %v1321, %v1316
    %v1372 = vpack.c.bf16 %v1322, %v1317
    %v1373 = vpack.c.bf16 %v1323, %v1318
    %v1374 = vpack.c.bf16 %v1324, %v1319
    %v1375 = vpack.c.bf16 %v1330, %v1325
    %v1376 = vpack.c.bf16 %v1331, %v1326
    %v1377 = vpack.c.bf16 %v1332, %v1327
    %v1378 = vpack.c.bf16 %v1333, %v1328
    %v1379 = vpack.c.bf16 %v1334, %v1329
    %v1380 = vpack.c.bf16 %v1340, %v1335
    %v1381 = vpack.c.bf16 %v1341, %v1336
    %v1382 = vpack.c.bf16 %v1342, %v1337
    %v1383 = vpack.c.bf16 %v1343, %v1338
    %v1384 = vpack.c.bf16 %v1344, %v1339
    %v1385 = vld [vmem:[#allocation10] sm:$0xff]
    %v1386 = vld [vmem:[#allocation10 + $0x8] sm:$0xff]
    %v1387 = vld [vmem:[#allocation10 + $0x10] sm:$0xff]
    %v1388 = vld [vmem:[#allocation10 + $0x18] sm:$0xff]
    %v1389 = vld [vmem:[#allocation10 + $0x20] sm:$0xff]
    %v1390 = vld [vmem:[#allocation10 + $0x28] sm:$0xff]
    %v1391 = vld [vmem:[#allocation10 + $0x30] sm:$0xff]
    %v1392 = vld [vmem:[#allocation10 + $0x38] sm:$0xff]
    %v1393 = vld [vmem:[#allocation10 + $0x40] sm:$0xff]
    %v1394 = vld [vmem:[#allocation10 + $0x48] sm:$0xff]
    %v1395 = vld [vmem:[#allocation10 + $0x50] sm:$0xff]
    %v1396 = vld [vmem:[#allocation10 + $0x58] sm:$0xff]
    %v1397 = vld [vmem:[#allocation10 + $0x60] sm:$0xff]
    %v1398 = vld [vmem:[#allocation10 + $0x68] sm:$0xff]
    %v1399 = vld [vmem:[#allocation10 + $0x70] sm:$0xff]
    %v1400 = vld [vmem:[#allocation10 + $0x78] sm:$0xff]
    %v1401 = vld [vmem:[#allocation10 + $0x80] sm:$0xff]
    %v1402 = vld [vmem:[#allocation10 + $0x88] sm:$0xff]
    %v1403 = vld [vmem:[#allocation10 + $0x90] sm:$0xff]
    %v1404 = vld [vmem:[#allocation10 + $0x98] sm:$0xff]
    %v1405 = vld [vmem:[#allocation10 + $0xa0] sm:$0xff]
    %v1406 = vld [vmem:[#allocation10 + $0xa8] sm:$0xff]
    %v1407 = vld [vmem:[#allocation10 + $0xb0] sm:$0xff]
    %v1408 = vld [vmem:[#allocation10 + $0xb8] sm:$0xff]
    %v1409 = vld [vmem:[#allocation10 + $0xc0] sm:$0xff]
    %v1410 = vld [vmem:[#allocation10 + $0xc8] sm:$0xff]
    %v1411 = vld [vmem:[#allocation10 + $0xd0] sm:$0xff]
    %v1412 = vld [vmem:[#allocation10 + $0xd8] sm:$0xff]
    %v1413 = vld [vmem:[#allocation10 + $0xe0] sm:$0xff]
    %v1414 = vld [vmem:[#allocation10 + $0xe8] sm:$0xff]
    %v1415 = vld [vmem:[#allocation10 + $0xf0] sm:$0xff]
    %v1416 = vld [vmem:[#allocation10 + $0xf8] sm:$0xff]
    %v1417 = vld [vmem:[#allocation10 + $0x100] sm:$0xff]
    %v1418 = vld [vmem:[#allocation10 + $0x108] sm:$0xff]
    %v1419 = vld [vmem:[#allocation10 + $0x110] sm:$0xff]
    %v1420 = vld [vmem:[#allocation10 + $0x118] sm:$0xff]
    %v1421 = vld [vmem:[#allocation10 + $0x120] sm:$0xff]
    %v1422 = vld [vmem:[#allocation10 + $0x128] sm:$0xff]
    %v1423 = vld [vmem:[#allocation10 + $0x130] sm:$0xff]
    %v1424 = vld [vmem:[#allocation10 + $0x138] sm:$0xff]
    %v1425 = vld [vmem:[#allocation10 + $0x140] sm:$0xff]
    %v1426 = vld [vmem:[#allocation10 + $0x148] sm:$0xff]
    %v1427 = vld [vmem:[#allocation10 + $0x150] sm:$0xff]
    %v1428 = vld [vmem:[#allocation10 + $0x158] sm:$0xff]
    %v1429 = vld [vmem:[#allocation10 + $0x160] sm:$0xff]
    %v1430 = vld [vmem:[#allocation10 + $0x168] sm:$0xff]
    %v1431 = vld [vmem:[#allocation10 + $0x170] sm:$0xff]
    %v1432 = vld [vmem:[#allocation10 + $0x178] sm:$0xff]
    %v1433 = vld [vmem:[#allocation10 + $0x180] sm:$0xff]
    %v1434 = vld [vmem:[#allocation10 + $0x188] sm:$0xff]
    %v1435 = vld [vmem:[#allocation10 + $0x190] sm:$0xff]
    %v1436 = vld [vmem:[#allocation10 + $0x198] sm:$0xff]
    %v1437 = vld [vmem:[#allocation10 + $0x1a0] sm:$0xff]
    %v1438 = vld [vmem:[#allocation10 + $0x1a8] sm:$0xff]
    %v1439 = vld [vmem:[#allocation10 + $0x1b0] sm:$0xff]
    %v1440 = vld [vmem:[#allocation10 + $0x1b8] sm:$0xff]
    %v1441 = vld [vmem:[#allocation10 + $0x1c0] sm:$0xff]
    %v1442 = vld [vmem:[#allocation10 + $0x1c8] sm:$0xff]
    %v1443 = vld [vmem:[#allocation10 + $0x1d0] sm:$0xff]
    %v1444 = vld [vmem:[#allocation10 + $0x1d8] sm:$0xff]
    %v1445 = vld [vmem:[#allocation10 + $0x1e0] sm:$0xff]
    %v1446 = vld [vmem:[#allocation10 + $0x1e8] sm:$0xff]
    %v1447 = vld [vmem:[#allocation10 + $0x1f0] sm:$0xff]
    %v1448 = vld [vmem:[#allocation10 + $0x1f8] sm:$0xff]
    %v1449 = vld [vmem:[#allocation10 + $0x200] sm:$0xff]
    %v1450 = vld [vmem:[#allocation10 + $0x208] sm:$0xff]
    %v1451 = vld [vmem:[#allocation10 + $0x210] sm:$0xff]
    %v1452 = vld [vmem:[#allocation10 + $0x218] sm:$0xff]
    %v1453 = vld [vmem:[#allocation10 + $0x220] sm:$0xff]
    %v1454 = vld [vmem:[#allocation10 + $0x228] sm:$0xff]
    %v1455 = vld [vmem:[#allocation10 + $0x230] sm:$0xff]
    %v1456 = vld [vmem:[#allocation10 + $0x238] sm:$0xff]
    %v1457 = vld [vmem:[#allocation10 + $0x240] sm:$0xff]
    %v1458 = vld [vmem:[#allocation10 + $0x248] sm:$0xff]
    %v1459 = vld [vmem:[#allocation10 + $0x250] sm:$0xff]
    %v1460 = vld [vmem:[#allocation10 + $0x258] sm:$0xff]
    %v1461 = vld [vmem:[#allocation10 + $0x260] sm:$0xff]
    %v1462 = vld [vmem:[#allocation10 + $0x268] sm:$0xff]
    %v1463 = vld [vmem:[#allocation10 + $0x270] sm:$0xff]
    %v1464 = vld [vmem:[#allocation10 + $0x278] sm:$0xff]
    %v1465 = vld [vmem:[%s5] sm:$0x3]
    %v1467 = vperm.slane %v1465, 0
    %v1468 = vperm.slane %v1465, 1
    %v1551 = vunpack.c.l.b16 %v1385
    %v1552 = vunpack.c.h.b16 %v1385
    %v1553 = vunpack.c.l.b16 %v1386
    %v1554 = vunpack.c.h.b16 %v1386
    %v1555 = vunpack.c.l.b16 %v1387
    %v1556 = vunpack.c.h.b16 %v1387
    %v1557 = vunpack.c.l.b16 %v1388
    %v1558 = vunpack.c.h.b16 %v1388
    %v1559 = vunpack.c.l.b16 %v1389
    %v1560 = vunpack.c.h.b16 %v1389
    %v1561 = vunpack.c.l.b16 %v1390
    %v1562 = vunpack.c.h.b16 %v1390
    %v1563 = vunpack.c.l.b16 %v1391
    %v1564 = vunpack.c.h.b16 %v1391
    %v1565 = vunpack.c.l.b16 %v1392
    %v1566 = vunpack.c.h.b16 %v1392
    %v1567 = vunpack.c.l.b16 %v1393
    %v1568 = vunpack.c.h.b16 %v1393
    %v1569 = vunpack.c.l.b16 %v1394
    %v1570 = vunpack.c.h.b16 %v1394
    %v1571 = vunpack.c.l.b16 %v1395
    %v1572 = vunpack.c.h.b16 %v1395
    %v1573 = vunpack.c.l.b16 %v1396
    %v1574 = vunpack.c.h.b16 %v1396
    %v1575 = vunpack.c.l.b16 %v1397
    %v1576 = vunpack.c.h.b16 %v1397
    %v1577 = vunpack.c.l.b16 %v1398
    %v1578 = vunpack.c.h.b16 %v1398
    %v1579 = vunpack.c.l.b16 %v1399
    %v1580 = vunpack.c.h.b16 %v1399
    %v1581 = vunpack.c.l.b16 %v1400
    %v1582 = vunpack.c.h.b16 %v1400
    %v1583 = vunpack.c.l.b16 %v1401
    %v1584 = vunpack.c.h.b16 %v1401
    %v1585 = vunpack.c.l.b16 %v1402
    %v1586 = vunpack.c.h.b16 %v1402
    %v1587 = vunpack.c.l.b16 %v1403
    %v1588 = vunpack.c.h.b16 %v1403
    %v1589 = vunpack.c.l.b16 %v1404
    %v1590 = vunpack.c.h.b16 %v1404
    %v1591 = vunpack.c.l.b16 %v1405
    %v1592 = vunpack.c.h.b16 %v1405
    %v1593 = vunpack.c.l.b16 %v1406
    %v1594 = vunpack.c.h.b16 %v1406
    %v1595 = vunpack.c.l.b16 %v1407
    %v1596 = vunpack.c.h.b16 %v1407
    %v1597 = vunpack.c.l.b16 %v1408
    %v1598 = vunpack.c.h.b16 %v1408
    %v1599 = vunpack.c.l.b16 %v1409
    %v1600 = vunpack.c.h.b16 %v1409
    %v1601 = vunpack.c.l.b16 %v1410
    %v1602 = vunpack.c.h.b16 %v1410
    %v1603 = vunpack.c.l.b16 %v1411
    %v1604 = vunpack.c.h.b16 %v1411
    %v1605 = vunpack.c.l.b16 %v1412
    %v1606 = vunpack.c.h.b16 %v1412
    %v1607 = vunpack.c.l.b16 %v1413
    %v1608 = vunpack.c.h.b16 %v1413
    %v1609 = vunpack.c.l.b16 %v1414
    %v1610 = vunpack.c.h.b16 %v1414
    %v1611 = vunpack.c.l.b16 %v1415
    %v1612 = vunpack.c.h.b16 %v1415
    %v1613 = vunpack.c.l.b16 %v1416
    %v1614 = vunpack.c.h.b16 %v1416
    %v1615 = vunpack.c.l.b16 %v1417
    %v1616 = vunpack.c.h.b16 %v1417
    %v1617 = vunpack.c.l.b16 %v1418
    %v1618 = vunpack.c.h.b16 %v1418
    %v1619 = vunpack.c.l.b16 %v1419
    %v1620 = vunpack.c.h.b16 %v1419
    %v1621 = vunpack.c.l.b16 %v1420
    %v1622 = vunpack.c.h.b16 %v1420
    %v1623 = vunpack.c.l.b16 %v1421
    %v1624 = vunpack.c.h.b16 %v1421
    %v1625 = vunpack.c.l.b16 %v1422
    %v1626 = vunpack.c.h.b16 %v1422
    %v1627 = vunpack.c.l.b16 %v1423
    %v1628 = vunpack.c.h.b16 %v1423
    %v1629 = vunpack.c.l.b16 %v1424
    %v1630 = vunpack.c.h.b16 %v1424
    %v1631 = vunpack.c.l.b16 %v1425
    %v1632 = vunpack.c.h.b16 %v1425
    %v1633 = vunpack.c.l.b16 %v1426
    %v1634 = vunpack.c.h.b16 %v1426
    %v1635 = vunpack.c.l.b16 %v1427
    %v1636 = vunpack.c.h.b16 %v1427
    %v1637 = vunpack.c.l.b16 %v1428
    %v1638 = vunpack.c.h.b16 %v1428
    %v1639 = vunpack.c.l.b16 %v1429
    %v1640 = vunpack.c.h.b16 %v1429
    %v1641 = vunpack.c.l.b16 %v1430
    %v1642 = vunpack.c.h.b16 %v1430
    %v1643 = vunpack.c.l.b16 %v1431
    %v1644 = vunpack.c.h.b16 %v1431
    %v1645 = vunpack.c.l.b16 %v1432
    %v1646 = vunpack.c.h.b16 %v1432
    %v1647 = vunpack.c.l.b16 %v1433
    %v1648 = vunpack.c.h.b16 %v1433
    %v1649 = vunpack.c.l.b16 %v1434
    %v1650 = vunpack.c.h.b16 %v1434
    %v1651 = vunpack.c.l.b16 %v1435
    %v1652 = vunpack.c.h.b16 %v1435
    %v1653 = vunpack.c.l.b16 %v1436
    %v1654 = vunpack.c.h.b16 %v1436
    %v1655 = vunpack.c.l.b16 %v1437
    %v1656 = vunpack.c.h.b16 %v1437
    %v1657 = vunpack.c.l.b16 %v1438
    %v1658 = vunpack.c.h.b16 %v1438
    %v1659 = vunpack.c.l.b16 %v1439
    %v1660 = vunpack.c.h.b16 %v1439
    %v1661 = vunpack.c.l.b16 %v1440
    %v1662 = vunpack.c.h.b16 %v1440
    %v1663 = vunpack.c.l.b16 %v1441
    %v1664 = vunpack.c.h.b16 %v1441
    %v1665 = vunpack.c.l.b16 %v1442
    %v1666 = vunpack.c.h.b16 %v1442
    %v1667 = vunpack.c.l.b16 %v1443
    %v1668 = vunpack.c.h.b16 %v1443
    %v1669 = vunpack.c.l.b16 %v1444
    %v1670 = vunpack.c.h.b16 %v1444
    %v1671 = vunpack.c.l.b16 %v1445
    %v1672 = vunpack.c.h.b16 %v1445
    %v1673 = vunpack.c.l.b16 %v1446
    %v1674 = vunpack.c.h.b16 %v1446
    %v1675 = vunpack.c.l.b16 %v1447
    %v1676 = vunpack.c.h.b16 %v1447
    %v1677 = vunpack.c.l.b16 %v1448
    %v1678 = vunpack.c.h.b16 %v1448
    %v1679 = vunpack.c.l.b16 %v1449
    %v1680 = vunpack.c.h.b16 %v1449
    %v1681 = vunpack.c.l.b16 %v1450
    %v1682 = vunpack.c.h.b16 %v1450
    %v1683 = vunpack.c.l.b16 %v1451
    %v1684 = vunpack.c.h.b16 %v1451
    %v1685 = vunpack.c.l.b16 %v1452
    %v1686 = vunpack.c.h.b16 %v1452
    %v1687 = vunpack.c.l.b16 %v1453
    %v1688 = vunpack.c.h.b16 %v1453
    %v1689 = vunpack.c.l.b16 %v1454
    %v1690 = vunpack.c.h.b16 %v1454
    %v1691 = vunpack.c.l.b16 %v1455
    %v1692 = vunpack.c.h.b16 %v1455
    %v1693 = vunpack.c.l.b16 %v1456
    %v1694 = vunpack.c.h.b16 %v1456
    %v1695 = vunpack.c.l.b16 %v1457
    %v1696 = vunpack.c.h.b16 %v1457
    %v1697 = vunpack.c.l.b16 %v1458
    %v1698 = vunpack.c.h.b16 %v1458
    %v1699 = vunpack.c.l.b16 %v1459
    %v1700 = vunpack.c.h.b16 %v1459
    %v1701 = vunpack.c.l.b16 %v1460
    %v1702 = vunpack.c.h.b16 %v1460
    %v1703 = vunpack.c.l.b16 %v1461
    %v1704 = vunpack.c.h.b16 %v1461
    %v1705 = vunpack.c.l.b16 %v1462
    %v1706 = vunpack.c.h.b16 %v1462
    %v1707 = vunpack.c.l.b16 %v1463
    %v1708 = vunpack.c.h.b16 %v1463
    %v1709 = vunpack.c.l.b16 %v1464
    %v1710 = vunpack.c.h.b16 %v1464
    %v1711 = vpack.c.b16 %v1553, %v1551
    %v1712 = vpack.c.b16 %v1554, %v1552
    %v1713 = vpack.c.b16 %v1557, %v1555
    %v1714 = vpack.c.b16 %v1558, %v1556
    %v1715 = vpack.c.b16 %v1561, %v1559
    %v1716 = vpack.c.b16 %v1562, %v1560
    %v1717 = vpack.c.b16 %v1565, %v1563
    %v1718 = vpack.c.b16 %v1566, %v1564
    %v1719 = vpack.c.b16 %v1569, %v1567
    %v1720 = vpack.c.b16 %v1570, %v1568
    %v1721 = vpack.c.b16 %v1573, %v1571
    %v1722 = vpack.c.b16 %v1574, %v1572
    %v1723 = vpack.c.b16 %v1577, %v1575
    %v1724 = vpack.c.b16 %v1578, %v1576
    %v1725 = vpack.c.b16 %v1581, %v1579
    %v1726 = vpack.c.b16 %v1582, %v1580
    %v1727 = vpack.c.b16 %v1585, %v1583
    %v1728 = vpack.c.b16 %v1586, %v1584
    %v1729 = vpack.c.b16 %v1589, %v1587
    %v1730 = vpack.c.b16 %v1590, %v1588
    %v1731 = vpack.c.b16 %v1593, %v1591
    %v1732 = vpack.c.b16 %v1594, %v1592
    %v1733 = vpack.c.b16 %v1597, %v1595
    %v1734 = vpack.c.b16 %v1598, %v1596
    %v1735 = vpack.c.b16 %v1601, %v1599
    %v1736 = vpack.c.b16 %v1602, %v1600
    %v1737 = vpack.c.b16 %v1605, %v1603
    %v1738 = vpack.c.b16 %v1606, %v1604
    %v1739 = vpack.c.b16 %v1609, %v1607
    %v1740 = vpack.c.b16 %v1610, %v1608
    %v1741 = vpack.c.b16 %v1613, %v1611
    %v1742 = vpack.c.b16 %v1614, %v1612
    %v1743 = vpack.c.b16 %v1617, %v1615
    %v1744 = vpack.c.b16 %v1618, %v1616
    %v1745 = vpack.c.b16 %v1621, %v1619
    %v1746 = vpack.c.b16 %v1622, %v1620
    %v1747 = vpack.c.b16 %v1625, %v1623
    %v1748 = vpack.c.b16 %v1626, %v1624
    %v1749 = vpack.c.b16 %v1629, %v1627
    %v1750 = vpack.c.b16 %v1630, %v1628
    %v1751 = vpack.c.b16 %v1633, %v1631
    %v1752 = vpack.c.b16 %v1634, %v1632
    %v1753 = vpack.c.b16 %v1637, %v1635
    %v1754 = vpack.c.b16 %v1638, %v1636
    %v1755 = vpack.c.b16 %v1641, %v1639
    %v1756 = vpack.c.b16 %v1642, %v1640
    %v1757 = vpack.c.b16 %v1645, %v1643
    %v1758 = vpack.c.b16 %v1646, %v1644
    %v1759 = vpack.c.b16 %v1649, %v1647
    %v1760 = vpack.c.b16 %v1650, %v1648
    %v1761 = vpack.c.b16 %v1653, %v1651
    %v1762 = vpack.c.b16 %v1654, %v1652
    %v1763 = vpack.c.b16 %v1657, %v1655
    %v1764 = vpack.c.b16 %v1658, %v1656
    %v1765 = vpack.c.b16 %v1661, %v1659
    %v1766 = vpack.c.b16 %v1662, %v1660
    %v1767 = vpack.c.b16 %v1665, %v1663
    %v1768 = vpack.c.b16 %v1666, %v1664
    %v1769 = vpack.c.b16 %v1669, %v1667
    %v1770 = vpack.c.b16 %v1670, %v1668
    %v1771 = vpack.c.b16 %v1673, %v1671
    %v1772 = vpack.c.b16 %v1674, %v1672
    %v1773 = vpack.c.b16 %v1677, %v1675
    %v1774 = vpack.c.b16 %v1678, %v1676
    %v1775 = vpack.c.b16 %v1681, %v1679
    %v1776 = vpack.c.b16 %v1682, %v1680
    %v1777 = vpack.c.b16 %v1685, %v1683
    %v1778 = vpack.c.b16 %v1686, %v1684
    %v1779 = vpack.c.b16 %v1689, %v1687
    %v1780 = vpack.c.b16 %v1690, %v1688
    %v1781 = vpack.c.b16 %v1693, %v1691
    %v1782 = vpack.c.b16 %v1694, %v1692
    %v1783 = vpack.c.b16 %v1697, %v1695
    %v1784 = vpack.c.b16 %v1698, %v1696
    %v1785 = vpack.c.b16 %v1701, %v1699
    %v1786 = vpack.c.b16 %v1702, %v1700
    %v1787 = vpack.c.b16 %v1705, %v1703
    %v1788 = vpack.c.b16 %v1706, %v1704
    %v1789 = vpack.c.b16 %v1709, %v1707
    %v1790 = vpack.c.b16 %v1710, %v1708
    %1871 = vmatpush.bf16.msra.mxu0 %v1725
    %1872 = vmatpush.bf16.msra.mxu0 %v1723
    %1873 = vmatpush.bf16.msra.mxu0 %v1721
    %1874 = vmatpush.bf16.msra.mxu0 %v1719
    %1875 = vmatpush.bf16.msra.mxu0 %v1717
    %1876 = vmatpush.bf16.msra.mxu0 %v1715
    %1877 = vmatpush.bf16.msra.mxu0 %v1713
    %1878 = vmatpush.bf16.msra.mxu0 %v1711
    %1879 = vmatmul.bf16.gmra.mxu0 %v1345
    %v1880 = vpop.f32.mrf.mxu0
    %v1881 = vadd.f32 %v1467, %v1880
    %v1882 = vpop.f32.mrf.mxu0
    %v1883 = vadd.f32 %v1467, %v1882
    %1884 = vmatmul.bf16.gmra.mxu0 %v1350
    %v1885 = vpop.f32.mrf.mxu0
    %v1886 = vadd.f32 %v1467, %v1885
    %v1887 = vpop.f32.mrf.mxu0
    %v1888 = vadd.f32 %v1467, %v1887
    %1889 = vmatmul.bf16.gmra.mxu0 %v1355
    %v1890 = vpop.f32.mrf.mxu0
    %v1891 = vadd.f32 %v1467, %v1890
    %v1892 = vpop.f32.mrf.mxu0
    %v1893 = vadd.f32 %v1467, %v1892
    %1894 = vmatmul.bf16.gmra.mxu0 %v1360
    %v1895 = vpop.f32.mrf.mxu0
    %v1896 = vadd.f32 %v1467, %v1895
    %v1897 = vpop.f32.mrf.mxu0
    %v1898 = vadd.f32 %v1467, %v1897
    %1899 = vmatmul.bf16.gmra.mxu0 %v1365
    %v1900 = vpop.f32.mrf.mxu0
    %v1901 = vadd.f32 %v1467, %v1900
    %v1902 = vpop.f32.mrf.mxu0
    %v1903 = vadd.f32 %v1467, %v1902
    %1904 = vmatmul.bf16.gmra.mxu0 %v1370
    %v1905 = vpop.f32.mrf.mxu0
    %v1906 = vadd.f32 %v1467, %v1905
    %v1907 = vpop.f32.mrf.mxu0
    %v1908 = vadd.f32 %v1467, %v1907
    %1909 = vmatmul.bf16.gmra.mxu0 %v1375
    %v1910 = vpop.f32.mrf.mxu0
    %v1911 = vadd.f32 %v1467, %v1910
    %v1912 = vpop.f32.mrf.mxu0
    %v1913 = vadd.f32 %v1467, %v1912
    %1914 = vmatmul.bf16.gmra.mxu0 %v1380
    %v1915 = vpop.f32.mrf.mxu0
    %v1916 = vadd.f32 %v1467, %v1915
    %v1917 = vpop.f32.mrf.mxu0
    %v1918 = vadd.f32 %v1467, %v1917
    %1919 = vdwg.mxu0
    %1920 = vmatpush.bf16.msra.mxu0 %v1741
    %1921 = vmatpush.bf16.msra.mxu0 %v1739
    %1922 = vmatpush.bf16.msra.mxu0 %v1737
    %1923 = vmatpush.bf16.msra.mxu0 %v1735
    %1924 = vmatpush.bf16.msra.mxu0 %v1733
    %1925 = vmatpush.bf16.msra.mxu0 %v1731
    %1926 = vmatpush.bf16.msra.mxu0 %v1729
    %1927 = vmatpush.bf16.msra.mxu0 %v1727
    %1928 = vmatmul.bf16.gmra.mxu0 %v1346
    %v1929 = vpop.f32.mrf.mxu0
    %v1930 = vadd.f32 %v1881, %v1929
    %v1931 = vpop.f32.mrf.mxu0
    %v1932 = vadd.f32 %v1883, %v1931
    %1933 = vmatmul.bf16.gmra.mxu0 %v1351
    %v1934 = vpop.f32.mrf.mxu0
    %v1935 = vadd.f32 %v1886, %v1934
    %v1936 = vpop.f32.mrf.mxu0
    %v1937 = vadd.f32 %v1888, %v1936
    %1938 = vmatmul.bf16.gmra.mxu0 %v1356
    %v1939 = vpop.f32.mrf.mxu0
    %v1940 = vadd.f32 %v1891, %v1939
    %v1941 = vpop.f32.mrf.mxu0
    %v1942 = vadd.f32 %v1893, %v1941
    %1943 = vmatmul.bf16.gmra.mxu0 %v1361
    %v1944 = vpop.f32.mrf.mxu0
    %v1945 = vadd.f32 %v1896, %v1944
    %v1946 = vpop.f32.mrf.mxu0
    %v1947 = vadd.f32 %v1898, %v1946
    %1948 = vmatmul.bf16.gmra.mxu0 %v1366
    %v1949 = vpop.f32.mrf.mxu0
    %v1950 = vadd.f32 %v1901, %v1949
    %v1951 = vpop.f32.mrf.mxu0
    %v1952 = vadd.f32 %v1903, %v1951
    %1953 = vmatmul.bf16.gmra.mxu0 %v1371
    %v1954 = vpop.f32.mrf.mxu0
    %v1955 = vadd.f32 %v1906, %v1954
    %v1956 = vpop.f32.mrf.mxu0
    %v1957 = vadd.f32 %v1908, %v1956
    %1958 = vmatmul.bf16.gmra.mxu0 %v1376
    %v1959 = vpop.f32.mrf.mxu0
    %v1960 = vadd.f32 %v1911, %v1959
    %v1961 = vpop.f32.mrf.mxu0
    %v1962 = vadd.f32 %v1913, %v1961
    %1963 = vmatmul.bf16.gmra.mxu0 %v1381
    %v1964 = vpop.f32.mrf.mxu0
    %v1965 = vadd.f32 %v1916, %v1964
    %v1966 = vpop.f32.mrf.mxu0
    %v1967 = vadd.f32 %v1918, %v1966
    %1968 = vdwg.mxu0
    %1969 = vmatpush.bf16.msra.mxu0 %v1757
    %1970 = vmatpush.bf16.msra.mxu0 %v1755
    %1971 = vmatpush.bf16.msra.mxu0 %v1753
    %1972 = vmatpush.bf16.msra.mxu0 %v1751
    %1973 = vmatpush.bf16.msra.mxu0 %v1749
    %1974 = vmatpush.bf16.msra.mxu0 %v1747
    %1975 = vmatpush.bf16.msra.mxu0 %v1745
    %1976 = vmatpush.bf16.msra.mxu0 %v1743
    %1977 = vmatmul.bf16.gmra.mxu0 %v1347
    %v1978 = vpop.f32.mrf.mxu0
    %v1979 = vadd.f32 %v1930, %v1978
    %v1980 = vpop.f32.mrf.mxu0
    %v1981 = vadd.f32 %v1932, %v1980
    %1982 = vmatmul.bf16.gmra.mxu0 %v1352
    %v1983 = vpop.f32.mrf.mxu0
    %v1984 = vadd.f32 %v1935, %v1983
    %v1985 = vpop.f32.mrf.mxu0
    %v1986 = vadd.f32 %v1937, %v1985
    %1987 = vmatmul.bf16.gmra.mxu0 %v1357
    %v1988 = vpop.f32.mrf.mxu0
    %v1989 = vadd.f32 %v1940, %v1988
    %v1990 = vpop.f32.mrf.mxu0
    %v1991 = vadd.f32 %v1942, %v1990
    %1992 = vmatmul.bf16.gmra.mxu0 %v1362
    %v1993 = vpop.f32.mrf.mxu0
    %v1994 = vadd.f32 %v1945, %v1993
    %v1995 = vpop.f32.mrf.mxu0
    %v1996 = vadd.f32 %v1947, %v1995
    %1997 = vmatmul.bf16.gmra.mxu0 %v1367
    %v1998 = vpop.f32.mrf.mxu0
    %v1999 = vadd.f32 %v1950, %v1998
    %v2000 = vpop.f32.mrf.mxu0
    %v2001 = vadd.f32 %v1952, %v2000
    %2002 = vmatmul.bf16.gmra.mxu0 %v1372
    %v2003 = vpop.f32.mrf.mxu0
    %v2004 = vadd.f32 %v1955, %v2003
    %v2005 = vpop.f32.mrf.mxu0
    %v2006 = vadd.f32 %v1957, %v2005
    %2007 = vmatmul.bf16.gmra.mxu0 %v1377
    %v2008 = vpop.f32.mrf.mxu0
    %v2009 = vadd.f32 %v1960, %v2008
    %v2010 = vpop.f32.mrf.mxu0
    %v2011 = vadd.f32 %v1962, %v2010
    %2012 = vmatmul.bf16.gmra.mxu0 %v1382
    %v2013 = vpop.f32.mrf.mxu0
    %v2014 = vadd.f32 %v1965, %v2013
    %v2015 = vpop.f32.mrf.mxu0
    %v2016 = vadd.f32 %v1967, %v2015
    %2017 = vdwg.mxu0
    %2018 = vmatpush.bf16.msra.mxu0 %v1773
    %2019 = vmatpush.bf16.msra.mxu0 %v1771
    %2020 = vmatpush.bf16.msra.mxu0 %v1769
    %2021 = vmatpush.bf16.msra.mxu0 %v1767
    %2022 = vmatpush.bf16.msra.mxu0 %v1765
    %2023 = vmatpush.bf16.msra.mxu0 %v1763
    %2024 = vmatpush.bf16.msra.mxu0 %v1761
    %2025 = vmatpush.bf16.msra.mxu0 %v1759
    %2026 = vmatmul.bf16.gmra.mxu0 %v1348
    %v2027 = vpop.f32.mrf.mxu0
    %v2028 = vadd.f32 %v1979, %v2027
    %v2029 = vpop.f32.mrf.mxu0
    %v2030 = vadd.f32 %v1981, %v2029
    %2031 = vmatmul.bf16.gmra.mxu0 %v1353
    %v2032 = vpop.f32.mrf.mxu0
    %v2033 = vadd.f32 %v1984, %v2032
    %v2034 = vpop.f32.mrf.mxu0
    %v2035 = vadd.f32 %v1986, %v2034
    %2036 = vmatmul.bf16.gmra.mxu0 %v1358
    %v2037 = vpop.f32.mrf.mxu0
    %v2038 = vadd.f32 %v1989, %v2037
    %v2039 = vpop.f32.mrf.mxu0
    %v2040 = vadd.f32 %v1991, %v2039
    %2041 = vmatmul.bf16.gmra.mxu0 %v1363
    %v2042 = vpop.f32.mrf.mxu0
    %v2043 = vadd.f32 %v1994, %v2042
    %v2044 = vpop.f32.mrf.mxu0
    %v2045 = vadd.f32 %v1996, %v2044
    %2046 = vmatmul.bf16.gmra.mxu0 %v1368
    %v2047 = vpop.f32.mrf.mxu0
    %v2048 = vadd.f32 %v1999, %v2047
    %v2049 = vpop.f32.mrf.mxu0
    %v2050 = vadd.f32 %v2001, %v2049
    %2051 = vmatmul.bf16.gmra.mxu0 %v1373
    %v2052 = vpop.f32.mrf.mxu0
    %v2053 = vadd.f32 %v2004, %v2052
    %v2054 = vpop.f32.mrf.mxu0
    %v2055 = vadd.f32 %v2006, %v2054
    %2056 = vmatmul.bf16.gmra.mxu0 %v1378
    %v2057 = vpop.f32.mrf.mxu0
    %v2058 = vadd.f32 %v2009, %v2057
    %v2059 = vpop.f32.mrf.mxu0
    %v2060 = vadd.f32 %v2011, %v2059
    %2061 = vmatmul.bf16.gmra.mxu0 %v1383
    %v2062 = vpop.f32.mrf.mxu0
    %v2063 = vadd.f32 %v2014, %v2062
    %v2064 = vpop.f32.mrf.mxu0
    %v2065 = vadd.f32 %v2016, %v2064
    %2066 = vdwg.mxu0
    %2067 = vmatpush.bf16.msra.mxu0 %v1789
    %2068 = vmatpush.bf16.msra.mxu0 %v1787
    %2069 = vmatpush.bf16.msra.mxu0 %v1785
    %2070 = vmatpush.bf16.msra.mxu0 %v1783
    %2071 = vmatpush.bf16.msra.mxu0 %v1781
    %2072 = vmatpush.bf16.msra.mxu0 %v1779
    %2073 = vmatpush.bf16.msra.mxu0 %v1777
    %2074 = vmatpush.bf16.msra.mxu0 %v1775
    %2075 = vmatmul.bf16.gmra.mxu0 %v1349
    %v2076 = vpop.f32.mrf.mxu0
    %v2077 = vadd.f32 %v2028, %v2076
    %v2078 = vpop.f32.mrf.mxu0
    %v2079 = vadd.f32 %v2030, %v2078
    %2080 = vmatmul.bf16.gmra.mxu0 %v1354
    %v2081 = vpop.f32.mrf.mxu0
    %v2082 = vadd.f32 %v2033, %v2081
    %v2083 = vpop.f32.mrf.mxu0
    %v2084 = vadd.f32 %v2035, %v2083
    %2085 = vmatmul.bf16.gmra.mxu0 %v1359
    %v2086 = vpop.f32.mrf.mxu0
    %v2087 = vadd.f32 %v2038, %v2086
    %v2088 = vpop.f32.mrf.mxu0
    %v2089 = vadd.f32 %v2040, %v2088
    %2090 = vmatmul.bf16.gmra.mxu0 %v1364
    %v2091 = vpop.f32.mrf.mxu0
    %v2092 = vadd.f32 %v2043, %v2091
    %v2093 = vpop.f32.mrf.mxu0
    %v2094 = vadd.f32 %v2045, %v2093
    %2095 = vmatmul.bf16.gmra.mxu0 %v1369
    %v2096 = vpop.f32.mrf.mxu0
    %v2097 = vadd.f32 %v2048, %v2096
    %v2098 = vpop.f32.mrf.mxu0
    %v2099 = vadd.f32 %v2050, %v2098
    %2100 = vmatmul.bf16.gmra.mxu0 %v1374
    %v2101 = vpop.f32.mrf.mxu0
    %v2102 = vadd.f32 %v2053, %v2101
    %v2103 = vpop.f32.mrf.mxu0
    %v2104 = vadd.f32 %v2055, %v2103
    %2105 = vmatmul.bf16.gmra.mxu0 %v1379
    %v2106 = vpop.f32.mrf.mxu0
    %v2107 = vadd.f32 %v2058, %v2106
    %v2108 = vpop.f32.mrf.mxu0
    %v2109 = vadd.f32 %v2060, %v2108
    %2110 = vmatmul.bf16.gmra.mxu0 %v1384
    %v2111 = vpop.f32.mrf.mxu0
    %v2112 = vadd.f32 %v2063, %v2111
    %v2113 = vpop.f32.mrf.mxu0
    %v2114 = vadd.f32 %v2065, %v2113
    %2115 = vdwg.mxu0
    %2116 = vmatpush.bf16.msra.mxu0 %v1726
    %2117 = vmatpush.bf16.msra.mxu0 %v1724
    %2118 = vmatpush.bf16.msra.mxu0 %v1722
    %2119 = vmatpush.bf16.msra.mxu0 %v1720
    %2120 = vmatpush.bf16.msra.mxu0 %v1718
    %2121 = vmatpush.bf16.msra.mxu0 %v1716
    %2122 = vmatpush.bf16.msra.mxu0 %v1714
    %2123 = vmatpush.bf16.msra.mxu0 %v1712
    %2124 = vmatmul.bf16.gmra.mxu0 %v1345
    %v2125 = vpop.f32.mrf.mxu0
    %v2126 = vadd.f32 %v1468, %v2125
    %v2127 = vpop.f32.mrf.mxu0
    %v2128 = vadd.f32 %v1468, %v2127
    %2129 = vmatmul.bf16.gmra.mxu0 %v1350
    %v2130 = vpop.f32.mrf.mxu0
    %v2131 = vadd.f32 %v1468, %v2130
    %v2132 = vpop.f32.mrf.mxu0
    %v2133 = vadd.f32 %v1468, %v2132
    %2134 = vmatmul.bf16.gmra.mxu0 %v1355
    %v2135 = vpop.f32.mrf.mxu0
    %v2136 = vadd.f32 %v1468, %v2135
    %v2137 = vpop.f32.mrf.mxu0
    %v2138 = vadd.f32 %v1468, %v2137
    %2139 = vmatmul.bf16.gmra.mxu0 %v1360
    %v2140 = vpop.f32.mrf.mxu0
    %v2141 = vadd.f32 %v1468, %v2140
    %v2142 = vpop.f32.mrf.mxu0
    %v2143 = vadd.f32 %v1468, %v2142
    %2144 = vmatmul.bf16.gmra.mxu0 %v1365
    %v2145 = vpop.f32.mrf.mxu0
    %v2146 = vadd.f32 %v1468, %v2145
    %v2147 = vpop.f32.mrf.mxu0
    %v2148 = vadd.f32 %v1468, %v2147
    %2149 = vmatmul.bf16.gmra.mxu0 %v1370
    %v2150 = vpop.f32.mrf.mxu0
    %v2151 = vadd.f32 %v1468, %v2150
    %v2152 = vpop.f32.mrf.mxu0
    %v2153 = vadd.f32 %v1468, %v2152
    %2154 = vmatmul.bf16.gmra.mxu0 %v1375
    %v2155 = vpop.f32.mrf.mxu0
    %v2156 = vadd.f32 %v1468, %v2155
    %v2157 = vpop.f32.mrf.mxu0
    %v2158 = vadd.f32 %v1468, %v2157
    %2159 = vmatmul.bf16.gmra.mxu0 %v1380
    %v2160 = vpop.f32.mrf.mxu0
    %v2161 = vadd.f32 %v1468, %v2160
    %v2162 = vpop.f32.mrf.mxu0
    %v2163 = vadd.f32 %v1468, %v2162
    %2164 = vdwg.mxu0
    %2165 = vmatpush.bf16.msra.mxu0 %v1742
    %2166 = vmatpush.bf16.msra.mxu0 %v1740
    %2167 = vmatpush.bf16.msra.mxu0 %v1738
    %2168 = vmatpush.bf16.msra.mxu0 %v1736
    %2169 = vmatpush.bf16.msra.mxu0 %v1734
    %2170 = vmatpush.bf16.msra.mxu0 %v1732
    %2171 = vmatpush.bf16.msra.mxu0 %v1730
    %2172 = vmatpush.bf16.msra.mxu0 %v1728
    %2173 = vmatmul.bf16.gmra.mxu0 %v1346
    %v2174 = vpop.f32.mrf.mxu0
    %v2175 = vadd.f32 %v2126, %v2174
    %v2176 = vpop.f32.mrf.mxu0
    %v2177 = vadd.f32 %v2128, %v2176
    %2178 = vmatmul.bf16.gmra.mxu0 %v1351
    %v2179 = vpop.f32.mrf.mxu0
    %v2180 = vadd.f32 %v2131, %v2179
    %v2181 = vpop.f32.mrf.mxu0
    %v2182 = vadd.f32 %v2133, %v2181
    %2183 = vmatmul.bf16.gmra.mxu0 %v1356
    %v2184 = vpop.f32.mrf.mxu0
    %v2185 = vadd.f32 %v2136, %v2184
    %v2186 = vpop.f32.mrf.mxu0
    %v2187 = vadd.f32 %v2138, %v2186
    %2188 = vmatmul.bf16.gmra.mxu0 %v1361
    %v2189 = vpop.f32.mrf.mxu0
    %v2190 = vadd.f32 %v2141, %v2189
    %v2191 = vpop.f32.mrf.mxu0
    %v2192 = vadd.f32 %v2143, %v2191
    %2193 = vmatmul.bf16.gmra.mxu0 %v1366
    %v2194 = vpop.f32.mrf.mxu0
    %v2195 = vadd.f32 %v2146, %v2194
    %v2196 = vpop.f32.mrf.mxu0
    %v2197 = vadd.f32 %v2148, %v2196
    %2198 = vmatmul.bf16.gmra.mxu0 %v1371
    %v2199 = vpop.f32.mrf.mxu0
    %v2200 = vadd.f32 %v2151, %v2199
    %v2201 = vpop.f32.mrf.mxu0
    %v2202 = vadd.f32 %v2153, %v2201
    %2203 = vmatmul.bf16.gmra.mxu0 %v1376
    %v2204 = vpop.f32.mrf.mxu0
    %v2205 = vadd.f32 %v2156, %v2204
    %v2206 = vpop.f32.mrf.mxu0
    %v2207 = vadd.f32 %v2158, %v2206
    %2208 = vmatmul.bf16.gmra.mxu0 %v1381
    %v2209 = vpop.f32.mrf.mxu0
    %v2210 = vadd.f32 %v2161, %v2209
    %v2211 = vpop.f32.mrf.mxu0
    %v2212 = vadd.f32 %v2163, %v2211
    %2213 = vdwg.mxu0
    %2214 = vmatpush.bf16.msra.mxu0 %v1758
    %2215 = vmatpush.bf16.msra.mxu0 %v1756
    %2216 = vmatpush.bf16.msra.mxu0 %v1754
    %2217 = vmatpush.bf16.msra.mxu0 %v1752
    %2218 = vmatpush.bf16.msra.mxu0 %v1750
    %2219 = vmatpush.bf16.msra.mxu0 %v1748
    %2220 = vmatpush.bf16.msra.mxu0 %v1746
    %2221 = vmatpush.bf16.msra.mxu0 %v1744
    %2222 = vmatmul.bf16.gmra.mxu0 %v1347
    %v2223 = vpop.f32.mrf.mxu0
    %v2224 = vadd.f32 %v2175, %v2223
    %v2225 = vpop.f32.mrf.mxu0
    %v2226 = vadd.f32 %v2177, %v2225
    %2227 = vmatmul.bf16.gmra.mxu0 %v1352
    %v2228 = vpop.f32.mrf.mxu0
    %v2229 = vadd.f32 %v2180, %v2228
    %v2230 = vpop.f32.mrf.mxu0
    %v2231 = vadd.f32 %v2182, %v2230
    %2232 = vmatmul.bf16.gmra.mxu0 %v1357
    %v2233 = vpop.f32.mrf.mxu0
    %v2234 = vadd.f32 %v2185, %v2233
    %v2235 = vpop.f32.mrf.mxu0
    %v2236 = vadd.f32 %v2187, %v2235
    %2237 = vmatmul.bf16.gmra.mxu0 %v1362
    %v2238 = vpop.f32.mrf.mxu0
    %v2239 = vadd.f32 %v2190, %v2238
    %v2240 = vpop.f32.mrf.mxu0
    %v2241 = vadd.f32 %v2192, %v2240
    %2242 = vmatmul.bf16.gmra.mxu0 %v1367
    %v2243 = vpop.f32.mrf.mxu0
    %v2244 = vadd.f32 %v2195, %v2243
    %v2245 = vpop.f32.mrf.mxu0
    %v2246 = vadd.f32 %v2197, %v2245
    %2247 = vmatmul.bf16.gmra.mxu0 %v1372
    %v2248 = vpop.f32.mrf.mxu0
    %v2249 = vadd.f32 %v2200, %v2248
    %v2250 = vpop.f32.mrf.mxu0
    %v2251 = vadd.f32 %v2202, %v2250
    %2252 = vmatmul.bf16.gmra.mxu0 %v1377
    %v2253 = vpop.f32.mrf.mxu0
    %v2254 = vadd.f32 %v2205, %v2253
    %v2255 = vpop.f32.mrf.mxu0
    %v2256 = vadd.f32 %v2207, %v2255
    %2257 = vmatmul.bf16.gmra.mxu0 %v1382
    %v2258 = vpop.f32.mrf.mxu0
    %v2259 = vadd.f32 %v2210, %v2258
    %v2260 = vpop.f32.mrf.mxu0
    %v2261 = vadd.f32 %v2212, %v2260
    %2262 = vdwg.mxu0
    %2263 = vmatpush.bf16.msra.mxu0 %v1774
    %2264 = vmatpush.bf16.msra.mxu0 %v1772
    %2265 = vmatpush.bf16.msra.mxu0 %v1770
    %2266 = vmatpush.bf16.msra.mxu0 %v1768
    %2267 = vmatpush.bf16.msra.mxu0 %v1766
    %2268 = vmatpush.bf16.msra.mxu0 %v1764
    %2269 = vmatpush.bf16.msra.mxu0 %v1762
    %2270 = vmatpush.bf16.msra.mxu0 %v1760
    %2271 = vmatmul.bf16.gmra.mxu0 %v1348
    %v2272 = vpop.f32.mrf.mxu0
    %v2273 = vadd.f32 %v2224, %v2272
    %v2274 = vpop.f32.mrf.mxu0
    %v2275 = vadd.f32 %v2226, %v2274
    %2276 = vmatmul.bf16.gmra.mxu0 %v1353
    %v2277 = vpop.f32.mrf.mxu0
    %v2278 = vadd.f32 %v2229, %v2277
    %v2279 = vpop.f32.mrf.mxu0
    %v2280 = vadd.f32 %v2231, %v2279
    %2281 = vmatmul.bf16.gmra.mxu0 %v1358
    %v2282 = vpop.f32.mrf.mxu0
    %v2283 = vadd.f32 %v2234, %v2282
    %v2284 = vpop.f32.mrf.mxu0
    %v2285 = vadd.f32 %v2236, %v2284
    %2286 = vmatmul.bf16.gmra.mxu0 %v1363
    %v2287 = vpop.f32.mrf.mxu0
    %v2288 = vadd.f32 %v2239, %v2287
    %v2289 = vpop.f32.mrf.mxu0
    %v2290 = vadd.f32 %v2241, %v2289
    %2291 = vmatmul.bf16.gmra.mxu0 %v1368
    %v2292 = vpop.f32.mrf.mxu0
    %v2293 = vadd.f32 %v2244, %v2292
    %v2294 = vpop.f32.mrf.mxu0
    %v2295 = vadd.f32 %v2246, %v2294
    %2296 = vmatmul.bf16.gmra.mxu0 %v1373
    %v2297 = vpop.f32.mrf.mxu0
    %v2298 = vadd.f32 %v2249, %v2297
    %v2299 = vpop.f32.mrf.mxu0
    %v2300 = vadd.f32 %v2251, %v2299
    %2301 = vmatmul.bf16.gmra.mxu0 %v1378
    %v2302 = vpop.f32.mrf.mxu0
    %v2303 = vadd.f32 %v2254, %v2302
    %v2304 = vpop.f32.mrf.mxu0
    %v2305 = vadd.f32 %v2256, %v2304
    %2306 = vmatmul.bf16.gmra.mxu0 %v1383
    %v2307 = vpop.f32.mrf.mxu0
    %v2308 = vadd.f32 %v2259, %v2307
    %v2309 = vpop.f32.mrf.mxu0
    %v2310 = vadd.f32 %v2261, %v2309
    %2311 = vdwg.mxu0
    %2312 = vmatpush.bf16.msra.mxu0 %v1790
    %2313 = vmatpush.bf16.msra.mxu0 %v1788
    %2314 = vmatpush.bf16.msra.mxu0 %v1786
    %2315 = vmatpush.bf16.msra.mxu0 %v1784
    %2316 = vmatpush.bf16.msra.mxu0 %v1782
    %2317 = vmatpush.bf16.msra.mxu0 %v1780
    %2318 = vmatpush.bf16.msra.mxu0 %v1778
    %2319 = vmatpush.bf16.msra.mxu0 %v1776
    %2320 = vmatmul.bf16.gmra.mxu0 %v1349
    %v2321 = vpop.f32.mrf.mxu0
    %v2322 = vadd.f32 %v2273, %v2321
    %v2323 = vpop.f32.mrf.mxu0
    %v2324 = vadd.f32 %v2275, %v2323
    %2325 = vmatmul.bf16.gmra.mxu0 %v1354
    %v2326 = vpop.f32.mrf.mxu0
    %v2327 = vadd.f32 %v2278, %v2326
    %v2328 = vpop.f32.mrf.mxu0
    %v2329 = vadd.f32 %v2280, %v2328
    %2330 = vmatmul.bf16.gmra.mxu0 %v1359
    %v2331 = vpop.f32.mrf.mxu0
    %v2332 = vadd.f32 %v2283, %v2331
    %v2333 = vpop.f32.mrf.mxu0
    %v2334 = vadd.f32 %v2285, %v2333
    %2335 = vmatmul.bf16.gmra.mxu0 %v1364
    %v2336 = vpop.f32.mrf.mxu0
    %v2337 = vadd.f32 %v2288, %v2336
    %v2338 = vpop.f32.mrf.mxu0
    %v2339 = vadd.f32 %v2290, %v2338
    %2340 = vmatmul.bf16.gmra.mxu0 %v1369
    %v2341 = vpop.f32.mrf.mxu0
    %v2342 = vadd.f32 %v2293, %v2341
    %v2343 = vpop.f32.mrf.mxu0
    %v2344 = vadd.f32 %v2295, %v2343
    %2345 = vmatmul.bf16.gmra.mxu0 %v1374
    %v2346 = vpop.f32.mrf.mxu0
    %v2347 = vadd.f32 %v2298, %v2346
    %v2348 = vpop.f32.mrf.mxu0
    %v2349 = vadd.f32 %v2300, %v2348
    %2350 = vmatmul.bf16.gmra.mxu0 %v1379
    %v2351 = vpop.f32.mrf.mxu0
    %v2352 = vadd.f32 %v2303, %v2351
    %v2353 = vpop.f32.mrf.mxu0
    %v2354 = vadd.f32 %v2305, %v2353
    %2355 = vmatmul.bf16.gmra.mxu0 %v1384
    %v2356 = vpop.f32.mrf.mxu0
    %v2357 = vadd.f32 %v2308, %v2356
    %v2358 = vpop.f32.mrf.mxu0
    %v2359 = vadd.f32 %v2310, %v2358
    %2360 = vdwg.mxu0
    %v2361 = vtanh.pop %v2077
    %v2362 = vtanh.pop %v2322
    %v2363 = vtanh.pop %v2079
    %v2364 = vtanh.pop %v2324
    %v2365 = vtanh.pop %v2082
    %v2366 = vtanh.pop %v2327
    %v2367 = vtanh.pop %v2084
    %v2368 = vtanh.pop %v2329
    %v2369 = vtanh.pop %v2087
    %v2370 = vtanh.pop %v2332
    %v2371 = vtanh.pop %v2089
    %v2372 = vtanh.pop %v2334
    %v2373 = vtanh.pop %v2092
    %v2374 = vtanh.pop %v2337
    %v2375 = vtanh.pop %v2094
    %v2376 = vtanh.pop %v2339
    %v2377 = vtanh.pop %v2097
    %v2378 = vtanh.pop %v2342
    %v2379 = vtanh.pop %v2099
    %v2380 = vtanh.pop %v2344
    %v2381 = vtanh.pop %v2102
    %v2382 = vtanh.pop %v2347
    %v2383 = vtanh.pop %v2104
    %v2384 = vtanh.pop %v2349
    %v2385 = vtanh.pop %v2107
    %v2386 = vtanh.pop %v2352
    %v2387 = vtanh.pop %v2109
    %v2388 = vtanh.pop %v2354
    %v2389 = vtanh.pop %v2112
    %v2390 = vtanh.pop %v2357
    %v2391 = vtanh.pop %v2114
    %v2392 = vtanh.pop %v2359
    %v2393 = vpack.c.bf16 %v2363, %v2361
    %v2394 = vpack.c.bf16 %v2364, %v2362
    %v2395 = vpack.c.bf16 %v2367, %v2365
    %v2396 = vpack.c.bf16 %v2368, %v2366
    %v2397 = vpack.c.bf16 %v2371, %v2369
    %v2398 = vpack.c.bf16 %v2372, %v2370
    %v2399 = vpack.c.bf16 %v2375, %v2373
    %v2400 = vpack.c.bf16 %v2376, %v2374
    %v2401 = vpack.c.bf16 %v2379, %v2377
    %v2402 = vpack.c.bf16 %v2380, %v2378
    %v2403 = vpack.c.bf16 %v2383, %v2381
    %v2404 = vpack.c.bf16 %v2384, %v2382
    %v2405 = vpack.c.bf16 %v2387, %v2385
    %v2406 = vpack.c.bf16 %v2388, %v2386
    %v2407 = vpack.c.bf16 %v2391, %v2389
    %v2408 = vpack.c.bf16 %v2392, %v2390
    %v2409 = vld [vmem:[#allocation11] sm:$0xff]
    %v2410 = vld [vmem:[#allocation11 + $0x8] sm:$0xff]
    %v2411 = vld [vmem:[#allocation11 + $0x10] sm:$0xff]
    %v2412 = vld [vmem:[#allocation11 + $0x18] sm:$0xff]
    %v2413 = vld [vmem:[#allocation11 + $0x20] sm:$0xff]
    %v2414 = vld [vmem:[#allocation11 + $0x28] sm:$0xff]
    %v2415 = vld [vmem:[#allocation11 + $0x30] sm:$0xff]
    %v2416 = vld [vmem:[#allocation11 + $0x38] sm:$0xff]
    %v2417 = vld [vmem:[#allocation11 + $0x40] sm:$0xff]
    %v2418 = vld [vmem:[#allocation11 + $0x48] sm:$0xff]
    %v2419 = vld [vmem:[#allocation11 + $0x50] sm:$0xff]
    %v2420 = vld [vmem:[#allocation11 + $0x58] sm:$0xff]
    %v2421 = vld [vmem:[#allocation11 + $0x60] sm:$0xff]
    %v2422 = vld [vmem:[#allocation11 + $0x68] sm:$0xff]
    %v2423 = vld [vmem:[#allocation11 + $0x70] sm:$0xff]
    %v2424 = vld [vmem:[#allocation11 + $0x78] sm:$0xff]
    %v2425 = vld [vmem:[#allocation11 + $0x80] sm:$0xff]
    %v2426 = vld [vmem:[#allocation11 + $0x88] sm:$0xff]
    %v2427 = vld [vmem:[#allocation11 + $0x90] sm:$0xff]
    %v2428 = vld [vmem:[#allocation11 + $0x98] sm:$0xff]
    %v2429 = vld [vmem:[#allocation11 + $0xa0] sm:$0xff]
    %v2430 = vld [vmem:[#allocation11 + $0xa8] sm:$0xff]
    %v2431 = vld [vmem:[#allocation11 + $0xb0] sm:$0xff]
    %v2432 = vld [vmem:[#allocation11 + $0xb8] sm:$0xff]
    %v2433 = vld [vmem:[#allocation11 + $0xc0] sm:$0xff]
    %v2434 = vld [vmem:[#allocation11 + $0xc8] sm:$0xff]
    %v2435 = vld [vmem:[#allocation11 + $0xd0] sm:$0xff]
    %v2436 = vld [vmem:[#allocation11 + $0xd8] sm:$0xff]
    %v2437 = vld [vmem:[#allocation11 + $0xe0] sm:$0xff]
    %v2438 = vld [vmem:[#allocation11 + $0xe8] sm:$0xff]
    %v2439 = vld [vmem:[#allocation11 + $0xf0] sm:$0xff]
    %v2440 = vld [vmem:[#allocation11 + $0xf8] sm:$0xff]
    %v2441 = vld [vmem:[%s7] sm:$0x3]
    %v2443 = vperm.slane %v2441, 0
    %v2444 = vperm.slane %v2441, 1
    %v2479 = vunpack.c.l.b16 %v2409
    %v2480 = vunpack.c.h.b16 %v2409
    %v2481 = vunpack.c.l.b16 %v2410
    %v2482 = vunpack.c.h.b16 %v2410
    %v2483 = vunpack.c.l.b16 %v2411
    %v2484 = vunpack.c.h.b16 %v2411
    %v2485 = vunpack.c.l.b16 %v2412
    %v2486 = vunpack.c.h.b16 %v2412
    %v2487 = vunpack.c.l.b16 %v2413
    %v2488 = vunpack.c.h.b16 %v2413
    %v2489 = vunpack.c.l.b16 %v2414
    %v2490 = vunpack.c.h.b16 %v2414
    %v2491 = vunpack.c.l.b16 %v2415
    %v2492 = vunpack.c.h.b16 %v2415
    %v2493 = vunpack.c.l.b16 %v2416
    %v2494 = vunpack.c.h.b16 %v2416
    %v2495 = vunpack.c.l.b16 %v2417
    %v2496 = vunpack.c.h.b16 %v2417
    %v2497 = vunpack.c.l.b16 %v2418
    %v2498 = vunpack.c.h.b16 %v2418
    %v2499 = vunpack.c.l.b16 %v2419
    %v2500 = vunpack.c.h.b16 %v2419
    %v2501 = vunpack.c.l.b16 %v2420
    %v2502 = vunpack.c.h.b16 %v2420
    %v2503 = vunpack.c.l.b16 %v2421
    %v2504 = vunpack.c.h.b16 %v2421
    %v2505 = vunpack.c.l.b16 %v2422
    %v2506 = vunpack.c.h.b16 %v2422
    %v2507 = vunpack.c.l.b16 %v2423
    %v2508 = vunpack.c.h.b16 %v2423
    %v2509 = vunpack.c.l.b16 %v2424
    %v2510 = vunpack.c.h.b16 %v2424
    %v2511 = vunpack.c.l.b16 %v2425
    %v2512 = vunpack.c.h.b16 %v2425
    %v2513 = vunpack.c.l.b16 %v2426
    %v2514 = vunpack.c.h.b16 %v2426
    %v2515 = vunpack.c.l.b16 %v2427
    %v2516 = vunpack.c.h.b16 %v2427
    %v2517 = vunpack.c.l.b16 %v2428
    %v2518 = vunpack.c.h.b16 %v2428
    %v2519 = vunpack.c.l.b16 %v2429
    %v2520 = vunpack.c.h.b16 %v2429
    %v2521 = vunpack.c.l.b16 %v2430
    %v2522 = vunpack.c.h.b16 %v2430
    %v2523 = vunpack.c.l.b16 %v2431
    %v2524 = vunpack.c.h.b16 %v2431
    %v2525 = vunpack.c.l.b16 %v2432
    %v2526 = vunpack.c.h.b16 %v2432
    %v2527 = vunpack.c.l.b16 %v2433
    %v2528 = vunpack.c.h.b16 %v2433
    %v2529 = vunpack.c.l.b16 %v2434
    %v2530 = vunpack.c.h.b16 %v2434
    %v2531 = vunpack.c.l.b16 %v2435
    %v2532 = vunpack.c.h.b16 %v2435
    %v2533 = vunpack.c.l.b16 %v2436
    %v2534 = vunpack.c.h.b16 %v2436
    %v2535 = vunpack.c.l.b16 %v2437
    %v2536 = vunpack.c.h.b16 %v2437
    %v2537 = vunpack.c.l.b16 %v2438
    %v2538 = vunpack.c.h.b16 %v2438
    %v2539 = vunpack.c.l.b16 %v2439
    %v2540 = vunpack.c.h.b16 %v2439
    %v2541 = vunpack.c.l.b16 %v2440
    %v2542 = vunpack.c.h.b16 %v2440
    %v2543 = vpack.c.b16 %v2481, %v2479
    %v2544 = vpack.c.b16 %v2482, %v2480
    %v2545 = vpack.c.b16 %v2485, %v2483
    %v2546 = vpack.c.b16 %v2486, %v2484
    %v2547 = vpack.c.b16 %v2489, %v2487
    %v2548 = vpack.c.b16 %v2490, %v2488
    %v2549 = vpack.c.b16 %v2493, %v2491
    %v2550 = vpack.c.b16 %v2494, %v2492
    %v2551 = vpack.c.b16 %v2497, %v2495
    %v2552 = vpack.c.b16 %v2498, %v2496
    %v2553 = vpack.c.b16 %v2501, %v2499
    %v2554 = vpack.c.b16 %v2502, %v2500
    %v2555 = vpack.c.b16 %v2505, %v2503
    %v2556 = vpack.c.b16 %v2506, %v2504
    %v2557 = vpack.c.b16 %v2509, %v2507
    %v2558 = vpack.c.b16 %v2510, %v2508
    %v2559 = vpack.c.b16 %v2513, %v2511
    %v2560 = vpack.c.b16 %v2514, %v2512
    %v2561 = vpack.c.b16 %v2517, %v2515
    %v2562 = vpack.c.b16 %v2518, %v2516
    %v2563 = vpack.c.b16 %v2521, %v2519
    %v2564 = vpack.c.b16 %v2522, %v2520
    %v2565 = vpack.c.b16 %v2525, %v2523
    %v2566 = vpack.c.b16 %v2526, %v2524
    %v2567 = vpack.c.b16 %v2529, %v2527
    %v2568 = vpack.c.b16 %v2530, %v2528
    %v2569 = vpack.c.b16 %v2533, %v2531
    %v2570 = vpack.c.b16 %v2534, %v2532
    %v2571 = vpack.c.b16 %v2537, %v2535
    %v2572 = vpack.c.b16 %v2538, %v2536
    %v2573 = vpack.c.b16 %v2541, %v2539
    %v2574 = vpack.c.b16 %v2542, %v2540
    %2607 = vmatpush.bf16.msra.mxu0 %v2557
    %2608 = vmatpush.bf16.msra.mxu0 %v2555
    %2609 = vmatpush.bf16.msra.mxu0 %v2553
    %2610 = vmatpush.bf16.msra.mxu0 %v2551
    %2611 = vmatpush.bf16.msra.mxu0 %v2549
    %2612 = vmatpush.bf16.msra.mxu0 %v2547
    %2613 = vmatpush.bf16.msra.mxu0 %v2545
    %2614 = vmatpush.bf16.msra.mxu0 %v2543
    %2615 = vmatmul.bf16.gmra.mxu0 %v2393
    %v2616 = vpop.f32.mrf.mxu0
    %v2617 = vadd.f32 %v2443, %v2616
    %v2618 = vpop.f32.mrf.mxu0
    %v2619 = vadd.f32 %v2443, %v2618
    %2620 = vmatmul.bf16.gmra.mxu0 %v2395
    %v2621 = vpop.f32.mrf.mxu0
    %v2622 = vadd.f32 %v2443, %v2621
    %v2623 = vpop.f32.mrf.mxu0
    %v2624 = vadd.f32 %v2443, %v2623
    %2625 = vmatmul.bf16.gmra.mxu0 %v2397
    %v2626 = vpop.f32.mrf.mxu0
    %v2627 = vadd.f32 %v2443, %v2626
    %v2628 = vpop.f32.mrf.mxu0
    %v2629 = vadd.f32 %v2443, %v2628
    %2630 = vmatmul.bf16.gmra.mxu0 %v2399
    %v2631 = vpop.f32.mrf.mxu0
    %v2632 = vadd.f32 %v2443, %v2631
    %v2633 = vpop.f32.mrf.mxu0
    %v2634 = vadd.f32 %v2443, %v2633
    %2635 = vmatmul.bf16.gmra.mxu0 %v2401
    %v2636 = vpop.f32.mrf.mxu0
    %v2637 = vadd.f32 %v2443, %v2636
    %v2638 = vpop.f32.mrf.mxu0
    %v2639 = vadd.f32 %v2443, %v2638
    %2640 = vmatmul.bf16.gmra.mxu0 %v2403
    %v2641 = vpop.f32.mrf.mxu0
    %v2642 = vadd.f32 %v2443, %v2641
    %v2643 = vpop.f32.mrf.mxu0
    %v2644 = vadd.f32 %v2443, %v2643
    %2645 = vmatmul.bf16.gmra.mxu0 %v2405
    %v2646 = vpop.f32.mrf.mxu0
    %v2647 = vadd.f32 %v2443, %v2646
    %v2648 = vpop.f32.mrf.mxu0
    %v2649 = vadd.f32 %v2443, %v2648
    %2650 = vmatmul.bf16.gmra.mxu0 %v2407
    %v2651 = vpop.f32.mrf.mxu0
    %v2652 = vadd.f32 %v2443, %v2651
    %v2653 = vpop.f32.mrf.mxu0
    %v2654 = vadd.f32 %v2443, %v2653
    %2655 = vdwg.mxu0
    %2656 = vmatpush.bf16.msra.mxu0 %v2573
    %2657 = vmatpush.bf16.msra.mxu0 %v2571
    %2658 = vmatpush.bf16.msra.mxu0 %v2569
    %2659 = vmatpush.bf16.msra.mxu0 %v2567
    %2660 = vmatpush.bf16.msra.mxu0 %v2565
    %2661 = vmatpush.bf16.msra.mxu0 %v2563
    %2662 = vmatpush.bf16.msra.mxu0 %v2561
    %2663 = vmatpush.bf16.msra.mxu0 %v2559
    %2664 = vmatmul.bf16.gmra.mxu0 %v2394
    %v2665 = vpop.f32.mrf.mxu0
    %v2666 = vadd.f32 %v2617, %v2665
    %v2667 = vpop.f32.mrf.mxu0
    %v2668 = vadd.f32 %v2619, %v2667
    %2669 = vmatmul.bf16.gmra.mxu0 %v2396
    %v2670 = vpop.f32.mrf.mxu0
    %v2671 = vadd.f32 %v2622, %v2670
    %v2672 = vpop.f32.mrf.mxu0
    %v2673 = vadd.f32 %v2624, %v2672
    %2674 = vmatmul.bf16.gmra.mxu0 %v2398
    %v2675 = vpop.f32.mrf.mxu0
    %v2676 = vadd.f32 %v2627, %v2675
    %v2677 = vpop.f32.mrf.mxu0
    %v2678 = vadd.f32 %v2629, %v2677
    %2679 = vmatmul.bf16.gmra.mxu0 %v2400
    %v2680 = vpop.f32.mrf.mxu0
    %v2681 = vadd.f32 %v2632, %v2680
    %v2682 = vpop.f32.mrf.mxu0
    %v2683 = vadd.f32 %v2634, %v2682
    %2684 = vmatmul.bf16.gmra.mxu0 %v2402
    %v2685 = vpop.f32.mrf.mxu0
    %v2686 = vadd.f32 %v2637, %v2685
    %v2687 = vpop.f32.mrf.mxu0
    %v2688 = vadd.f32 %v2639, %v2687
    %2689 = vmatmul.bf16.gmra.mxu0 %v2404
    %v2690 = vpop.f32.mrf.mxu0
    %v2691 = vadd.f32 %v2642, %v2690
    %v2692 = vpop.f32.mrf.mxu0
    %v2693 = vadd.f32 %v2644, %v2692
    %2694 = vmatmul.bf16.gmra.mxu0 %v2406
    %v2695 = vpop.f32.mrf.mxu0
    %v2696 = vadd.f32 %v2647, %v2695
    %v2697 = vpop.f32.mrf.mxu0
    %v2698 = vadd.f32 %v2649, %v2697
    %2699 = vmatmul.bf16.gmra.mxu0 %v2408
    %v2700 = vpop.f32.mrf.mxu0
    %v2701 = vadd.f32 %v2652, %v2700
    %v2702 = vpop.f32.mrf.mxu0
    %v2703 = vadd.f32 %v2654, %v2702
    %2704 = vdwg.mxu0
    %2705 = vmatpush.bf16.msra.mxu0 %v2558
    %2706 = vmatpush.bf16.msra.mxu0 %v2556
    %2707 = vmatpush.bf16.msra.mxu0 %v2554
    %2708 = vmatpush.bf16.msra.mxu0 %v2552
    %2709 = vmatpush.bf16.msra.mxu0 %v2550
    %2710 = vmatpush.bf16.msra.mxu0 %v2548
    %2711 = vmatpush.bf16.msra.mxu0 %v2546
    %2712 = vmatpush.bf16.msra.mxu0 %v2544
    %2713 = vmatmul.bf16.gmra.mxu0 %v2393
    %v2714 = vpop.f32.mrf.mxu0
    %v2715 = vadd.f32 %v2444, %v2714
    %v2716 = vpop.f32.mrf.mxu0
    %v2717 = vadd.f32 %v2444, %v2716
    %2718 = vmatmul.bf16.gmra.mxu0 %v2395
    %v2719 = vpop.f32.mrf.mxu0
    %v2720 = vadd.f32 %v2444, %v2719
    %v2721 = vpop.f32.mrf.mxu0
    %v2722 = vadd.f32 %v2444, %v2721
    %2723 = vmatmul.bf16.gmra.mxu0 %v2397
    %v2724 = vpop.f32.mrf.mxu0
    %v2725 = vadd.f32 %v2444, %v2724
    %v2726 = vpop.f32.mrf.mxu0
    %v2727 = vadd.f32 %v2444, %v2726
    %2728 = vmatmul.bf16.gmra.mxu0 %v2399
    %v2729 = vpop.f32.mrf.mxu0
    %v2730 = vadd.f32 %v2444, %v2729
    %v2731 = vpop.f32.mrf.mxu0
    %v2732 = vadd.f32 %v2444, %v2731
    %2733 = vmatmul.bf16.gmra.mxu0 %v2401
    %v2734 = vpop.f32.mrf.mxu0
    %v2735 = vadd.f32 %v2444, %v2734
    %v2736 = vpop.f32.mrf.mxu0
    %v2737 = vadd.f32 %v2444, %v2736
    %2738 = vmatmul.bf16.gmra.mxu0 %v2403
    %v2739 = vpop.f32.mrf.mxu0
    %v2740 = vadd.f32 %v2444, %v2739
    %v2741 = vpop.f32.mrf.mxu0
    %v2742 = vadd.f32 %v2444, %v2741
    %2743 = vmatmul.bf16.gmra.mxu0 %v2405
    %v2744 = vpop.f32.mrf.mxu0
    %v2745 = vadd.f32 %v2444, %v2744
    %v2746 = vpop.f32.mrf.mxu0
    %v2747 = vadd.f32 %v2444, %v2746
    %2748 = vmatmul.bf16.gmra.mxu0 %v2407
    %v2749 = vpop.f32.mrf.mxu0
    %v2750 = vadd.f32 %v2444, %v2749
    %v2751 = vpop.f32.mrf.mxu0
    %v2752 = vadd.f32 %v2444, %v2751
    %2753 = vdwg.mxu0
    %2754 = vmatpush.bf16.msra.mxu0 %v2574
    %2755 = vmatpush.bf16.msra.mxu0 %v2572
    %2756 = vmatpush.bf16.msra.mxu0 %v2570
    %2757 = vmatpush.bf16.msra.mxu0 %v2568
    %2758 = vmatpush.bf16.msra.mxu0 %v2566
    %2759 = vmatpush.bf16.msra.mxu0 %v2564
    %2760 = vmatpush.bf16.msra.mxu0 %v2562
    %2761 = vmatpush.bf16.msra.mxu0 %v2560
    %2762 = vmatmul.bf16.gmra.mxu0 %v2394
    %v2763 = vpop.f32.mrf.mxu0
    %v2764 = vadd.f32 %v2715, %v2763
    %v2765 = vpop.f32.mrf.mxu0
    %v2766 = vadd.f32 %v2717, %v2765
    %2767 = vmatmul.bf16.gmra.mxu0 %v2396
    %v2768 = vpop.f32.mrf.mxu0
    %v2769 = vadd.f32 %v2720, %v2768
    %v2770 = vpop.f32.mrf.mxu0
    %v2771 = vadd.f32 %v2722, %v2770
    %2772 = vmatmul.bf16.gmra.mxu0 %v2398
    %v2773 = vpop.f32.mrf.mxu0
    %v2774 = vadd.f32 %v2725, %v2773
    %v2775 = vpop.f32.mrf.mxu0
    %v2776 = vadd.f32 %v2727, %v2775
    %2777 = vmatmul.bf16.gmra.mxu0 %v2400
    %v2778 = vpop.f32.mrf.mxu0
    %v2779 = vadd.f32 %v2730, %v2778
    %v2780 = vpop.f32.mrf.mxu0
    %v2781 = vadd.f32 %v2732, %v2780
    %2782 = vmatmul.bf16.gmra.mxu0 %v2402
    %v2783 = vpop.f32.mrf.mxu0
    %v2784 = vadd.f32 %v2735, %v2783
    %v2785 = vpop.f32.mrf.mxu0
    %v2786 = vadd.f32 %v2737, %v2785
    %2787 = vmatmul.bf16.gmra.mxu0 %v2404
    %v2788 = vpop.f32.mrf.mxu0
    %v2789 = vadd.f32 %v2740, %v2788
    %v2790 = vpop.f32.mrf.mxu0
    %v2791 = vadd.f32 %v2742, %v2790
    %2792 = vmatmul.bf16.gmra.mxu0 %v2406
    %v2793 = vpop.f32.mrf.mxu0
    %v2794 = vadd.f32 %v2745, %v2793
    %v2795 = vpop.f32.mrf.mxu0
    %v2796 = vadd.f32 %v2747, %v2795
    %2797 = vmatmul.bf16.gmra.mxu0 %v2408
    %v2798 = vpop.f32.mrf.mxu0
    %v2799 = vadd.f32 %v2750, %v2798
    %v2800 = vpop.f32.mrf.mxu0
    %v2801 = vadd.f32 %v2752, %v2800
    %2802 = vdwg.mxu0
    %v2803 = vld [vmem:[#allocation5] sm:$0xff]
    %v2804 = vld [vmem:[#allocation5 + $0x8] sm:$0xff]
    %v2805 = vld [vmem:[#allocation5 + $0x10] sm:$0xff]
    %v2806 = vld [vmem:[#allocation5 + $0x18] sm:$0xff]
    %v2807 = vld [vmem:[#allocation5 + $0x20] sm:$0xff]
    %v2808 = vld [vmem:[#allocation5 + $0x28] sm:$0xff]
    %v2809 = vld [vmem:[#allocation5 + $0x30] sm:$0xff]
    %v2810 = vld [vmem:[#allocation5 + $0x38] sm:$0xff]
    %v2811 = vld [vmem:[#allocation5 + $0x40] sm:$0xff]
    %v2812 = vld [vmem:[#allocation5 + $0x48] sm:$0xff]
    %v2813 = vld [vmem:[#allocation5 + $0x50] sm:$0xff]
    %v2814 = vld [vmem:[#allocation5 + $0x58] sm:$0xff]
    %v2815 = vld [vmem:[#allocation5 + $0x60] sm:$0xff]
    %v2816 = vld [vmem:[#allocation5 + $0x68] sm:$0xff]
    %v2817 = vld [vmem:[#allocation5 + $0x70] sm:$0xff]
    %v2818 = vld [vmem:[#allocation5 + $0x78] sm:$0xff]
    %v2819 = vmul.f32 %v2764, 0.5
    %v2820 = vmul.f32 %v2766, 0.5
    %v2821 = vmul.f32 %v2769, 0.5
    %v2822 = vmul.f32 %v2771, 0.5
    %v2823 = vmul.f32 %v2774, 0.5
    %v2824 = vmul.f32 %v2776, 0.5
    %v2825 = vmul.f32 %v2779, 0.5
    %v2826 = vmul.f32 %v2781, 0.5
    %v2827 = vmul.f32 %v2784, 0.5
    %v2828 = vmul.f32 %v2786, 0.5
    %v2829 = vmul.f32 %v2789, 0.5
    %v2830 = vmul.f32 %v2791, 0.5
    %v2831 = vmul.f32 %v2794, 0.5
    %v2832 = vmul.f32 %v2796, 0.5
    %v2833 = vmul.f32 %v2799, 0.5
    %v2834 = vmul.f32 %v2801, 0.5
    %v2835 = vmul.f32 %v2819, 1.442695
    %v2836 = vpow.pop %v2835
    %v2837 = vmul.f32 %v2820, 1.442695
    %v2838 = vpow.pop %v2837
    %v2839 = vmul.f32 %v2821, 1.442695
    %v2840 = vpow.pop %v2839
    %v2841 = vmul.f32 %v2822, 1.442695
    %v2842 = vpow.pop %v2841
    %v2843 = vmul.f32 %v2823, 1.442695
    %v2844 = vpow.pop %v2843
    %v2845 = vmul.f32 %v2824, 1.442695
    %v2846 = vpow.pop %v2845
    %v2847 = vmul.f32 %v2825, 1.442695
    %v2848 = vpow.pop %v2847
    %v2849 = vmul.f32 %v2826, 1.442695
    %v2850 = vpow.pop %v2849
    %v2851 = vmul.f32 %v2827, 1.442695
    %v2852 = vpow.pop %v2851
    %v2853 = vmul.f32 %v2828, 1.442695
    %v2854 = vpow.pop %v2853
    %v2855 = vmul.f32 %v2829, 1.442695
    %v2856 = vpow.pop %v2855
    %v2857 = vmul.f32 %v2830, 1.442695
    %v2858 = vpow.pop %v2857
    %v2859 = vmul.f32 %v2831, 1.442695
    %v2860 = vpow.pop %v2859
    %v2861 = vmul.f32 %v2832, 1.442695
    %v2862 = vpow.pop %v2861
    %v2863 = vmul.f32 %v2833, 1.442695
    %v2864 = vpow.pop %v2863
    %v2865 = vmul.f32 %v2834, 1.442695
    %v2866 = vpow.pop %v2865
    %v2867 = vmul.f32 %v2803, %v2836
    %v2868 = vmul.f32 %v2804, %v2838
    %v2869 = vmul.f32 %v2805, %v2840
    %v2870 = vmul.f32 %v2806, %v2842
    %v2871 = vmul.f32 %v2807, %v2844
    %v2872 = vmul.f32 %v2808, %v2846
    %v2873 = vmul.f32 %v2809, %v2848
    %v2874 = vmul.f32 %v2810, %v2850
    %v2875 = vmul.f32 %v2811, %v2852
    %v2876 = vmul.f32 %v2812, %v2854
    %v2877 = vmul.f32 %v2813, %v2856
    %v2878 = vmul.f32 %v2814, %v2858
    %v2879 = vmul.f32 %v2815, %v2860
    %v2880 = vmul.f32 %v2816, %v2862
    %v2881 = vmul.f32 %v2817, %v2864
    %v2882 = vmul.f32 %v2818, %v2866
    %v2883 = vadd.f32 %v2666, %v2867
    %v2884 = vadd.f32 %v2668, %v2868
    %v2885 = vadd.f32 %v2671, %v2869
    %v2886 = vadd.f32 %v2673, %v2870
    %v2887 = vadd.f32 %v2676, %v2871
    %v2888 = vadd.f32 %v2678, %v2872
    %v2889 = vadd.f32 %v2681, %v2873
    %v2890 = vadd.f32 %v2683, %v2874
    %v2891 = vadd.f32 %v2686, %v2875
    %v2892 = vadd.f32 %v2688, %v2876
    %v2893 = vadd.f32 %v2691, %v2877
    %v2894 = vadd.f32 %v2693, %v2878
    %v2895 = vadd.f32 %v2696, %v2879
    %v2896 = vadd.f32 %v2698, %v2880
    %v2897 = vadd.f32 %v2701, %v2881
    %v2898 = vadd.f32 %v2703, %v2882
    %v2899 = vpack.c.bf16 %v2884, %v2883
    %v2900 = vpack.c.bf16 %v2886, %v2885
    %v2901 = vpack.c.bf16 %v2888, %v2887
    %v2902 = vpack.c.bf16 %v2890, %v2889
    %v2903 = vpack.c.bf16 %v2892, %v2891
    %v2904 = vpack.c.bf16 %v2894, %v2893
    %v2905 = vpack.c.bf16 %v2896, %v2895
    %v2906 = vpack.c.bf16 %v2898, %v2897
    %v2907 = vld [vmem:[#allocation13] sm:$0xff]
    %v2908 = vld [vmem:[#allocation13 + $0x8] sm:$0xff]
    %v2909 = vld [vmem:[#allocation13 + $0x10] sm:$0xff]
    %v2910 = vld [vmem:[#allocation13 + $0x18] sm:$0xff]
    %v2911 = vld [vmem:[#allocation13 + $0x20] sm:$0xff]
    %v2912 = vld [vmem:[#allocation13 + $0x28] sm:$0xff]
    %v2913 = vld [vmem:[#allocation13 + $0x30] sm:$0xff]
    %v2914 = vld [vmem:[#allocation13 + $0x38] sm:$0xff]
    %v2915 = vld [vmem:[#allocation13 + $0x40] sm:$0xff]
    %v2916 = vld [vmem:[#allocation13 + $0x48] sm:$0xff]
    %v2917 = vld [vmem:[#allocation13 + $0x50] sm:$0xff]
    %v2918 = vld [vmem:[#allocation13 + $0x58] sm:$0xff]
    %v2919 = vld [vmem:[#allocation13 + $0x60] sm:$0xff]
    %v2920 = vld [vmem:[#allocation13 + $0x68] sm:$0xff]
    %v2921 = vld [vmem:[#allocation13 + $0x70] sm:$0xff]
    %v2922 = vld [vmem:[#allocation13 + $0x78] sm:$0xff]
    %v2923 = vld [vmem:[#allocation14] sm:$0x3]
    %v2925 = vperm.slane %v2923, 0
    %v2926 = vperm.slane %v2923, 1
    %v2945 = vunpack.c.l.b16 %v2907
    %v2946 = vunpack.c.h.b16 %v2907
    %v2947 = vunpack.c.l.b16 %v2908
    %v2948 = vunpack.c.h.b16 %v2908
    %v2949 = vunpack.c.l.b16 %v2909
    %v2950 = vunpack.c.h.b16 %v2909
    %v2951 = vunpack.c.l.b16 %v2910
    %v2952 = vunpack.c.h.b16 %v2910
    %v2953 = vunpack.c.l.b16 %v2911
    %v2954 = vunpack.c.h.b16 %v2911
    %v2955 = vunpack.c.l.b16 %v2912
    %v2956 = vunpack.c.h.b16 %v2912
    %v2957 = vunpack.c.l.b16 %v2913
    %v2958 = vunpack.c.h.b16 %v2913
    %v2959 = vunpack.c.l.b16 %v2914
    %v2960 = vunpack.c.h.b16 %v2914
    %v2961 = vunpack.c.l.b16 %v2915
    %v2962 = vunpack.c.h.b16 %v2915
    %v2963 = vunpack.c.l.b16 %v2916
    %v2964 = vunpack.c.h.b16 %v2916
    %v2965 = vunpack.c.l.b16 %v2917
    %v2966 = vunpack.c.h.b16 %v2917
    %v2967 = vunpack.c.l.b16 %v2918
    %v2968 = vunpack.c.h.b16 %v2918
    %v2969 = vunpack.c.l.b16 %v2919
    %v2970 = vunpack.c.h.b16 %v2919
    %v2971 = vunpack.c.l.b16 %v2920
    %v2972 = vunpack.c.h.b16 %v2920
    %v2973 = vunpack.c.l.b16 %v2921
    %v2974 = vunpack.c.h.b16 %v2921
    %v2975 = vunpack.c.l.b16 %v2922
    %v2976 = vunpack.c.h.b16 %v2922
    %v2977 = vpack.c.b16 %v2947, %v2945
    %v2978 = vpack.c.b16 %v2948, %v2946
    %v2979 = vpack.c.b16 %v2951, %v2949
    %v2980 = vpack.c.b16 %v2952, %v2950
    %v2981 = vpack.c.b16 %v2955, %v2953
    %v2982 = vpack.c.b16 %v2956, %v2954
    %v2983 = vpack.c.b16 %v2959, %v2957
    %v2984 = vpack.c.b16 %v2960, %v2958
    %v2985 = vpack.c.b16 %v2963, %v2961
    %v2986 = vpack.c.b16 %v2964, %v2962
    %v2987 = vpack.c.b16 %v2967, %v2965
    %v2988 = vpack.c.b16 %v2968, %v2966
    %v2989 = vpack.c.b16 %v2971, %v2969
    %v2990 = vpack.c.b16 %v2972, %v2970
    %v2991 = vpack.c.b16 %v2975, %v2973
    %v2992 = vpack.c.b16 %v2976, %v2974
    %3009 = vmatpush.bf16.msra.mxu0 %v2991
    %3010 = vmatpush.bf16.msra.mxu0 %v2989
    %3011 = vmatpush.bf16.msra.mxu0 %v2987
    %3012 = vmatpush.bf16.msra.mxu0 %v2985
    %3013 = vmatpush.bf16.msra.mxu0 %v2983
    %3014 = vmatpush.bf16.msra.mxu0 %v2981
    %3015 = vmatpush.bf16.msra.mxu0 %v2979
    %3016 = vmatpush.bf16.msra.mxu0 %v2977
    %3017 = vmatmul.bf16.gmra.mxu0 %v2899
    %v3018 = vpop.f32.mrf.mxu0
    %v3019 = vadd.f32 %v2925, %v3018
    %v3020 = vpop.f32.mrf.mxu0
    %v3021 = vadd.f32 %v2925, %v3020
    %3022 = vmatmul.bf16.gmra.mxu0 %v2900
    %v3023 = vpop.f32.mrf.mxu0
    %v3024 = vadd.f32 %v2925, %v3023
    %v3025 = vpop.f32.mrf.mxu0
    %v3026 = vadd.f32 %v2925, %v3025
    %3027 = vmatmul.bf16.gmra.mxu0 %v2901
    %v3028 = vpop.f32.mrf.mxu0
    %v3029 = vadd.f32 %v2925, %v3028
    %v3030 = vpop.f32.mrf.mxu0
    %v3031 = vadd.f32 %v2925, %v3030
    %3032 = vmatmul.bf16.gmra.mxu0 %v2902
    %v3033 = vpop.f32.mrf.mxu0
    %v3034 = vadd.f32 %v2925, %v3033
    %v3035 = vpop.f32.mrf.mxu0
    %v3036 = vadd.f32 %v2925, %v3035
    %3037 = vmatmul.bf16.gmra.mxu0 %v2903
    %v3038 = vpop.f32.mrf.mxu0
    %v3039 = vadd.f32 %v2925, %v3038
    %v3040 = vpop.f32.mrf.mxu0
    %v3041 = vadd.f32 %v2925, %v3040
    %3042 = vmatmul.bf16.gmra.mxu0 %v2904
    %v3043 = vpop.f32.mrf.mxu0
    %v3044 = vadd.f32 %v2925, %v3043
    %v3045 = vpop.f32.mrf.mxu0
    %v3046 = vadd.f32 %v2925, %v3045
    %3047 = vmatmul.bf16.gmra.mxu0 %v2905
    %v3048 = vpop.f32.mrf.mxu0
    %v3049 = vadd.f32 %v2925, %v3048
    %v3050 = vpop.f32.mrf.mxu0
    %v3051 = vadd.f32 %v2925, %v3050
    %3052 = vmatmul.bf16.gmra.mxu0 %v2906
    %v3053 = vpop.f32.mrf.mxu0
    %v3054 = vadd.f32 %v2925, %v3053
    %v3055 = vpop.f32.mrf.mxu0
    %v3056 = vadd.f32 %v2925, %v3055
    %3057 = vdwg.mxu0
    %3058 = vmatpush.bf16.msra.mxu0 %v2992
    %3059 = vmatpush.bf16.msra.mxu0 %v2990
    %3060 = vmatpush.bf16.msra.mxu0 %v2988
    %3061 = vmatpush.bf16.msra.mxu0 %v2986
    %3062 = vmatpush.bf16.msra.mxu0 %v2984
    %3063 = vmatpush.bf16.msra.mxu0 %v2982
    %3064 = vmatpush.bf16.msra.mxu0 %v2980
    %3065 = vmatpush.bf16.msra.mxu0 %v2978
    %3066 = vmatmul.bf16.gmra.mxu0 %v2899
    %v3067 = vpop.f32.mrf.mxu0
    %v3068 = vadd.f32 %v2926, %v3067
    %v3069 = vpop.f32.mrf.mxu0
    %v3070 = vadd.f32 %v2926, %v3069
    %3071 = vmatmul.bf16.gmra.mxu0 %v2900
    %v3072 = vpop.f32.mrf.mxu0
    %v3073 = vadd.f32 %v2926, %v3072
    %v3074 = vpop.f32.mrf.mxu0
    %v3075 = vadd.f32 %v2926, %v3074
    %3076 = vmatmul.bf16.gmra.mxu0 %v2901
    %v3077 = vpop.f32.mrf.mxu0
    %v3078 = vadd.f32 %v2926, %v3077
    %v3079 = vpop.f32.mrf.mxu0
    %v3080 = vadd.f32 %v2926, %v3079
    %3081 = vmatmul.bf16.gmra.mxu0 %v2902
    %v3082 = vpop.f32.mrf.mxu0
    %v3083 = vadd.f32 %v2926, %v3082
    %v3084 = vpop.f32.mrf.mxu0
    %v3085 = vadd.f32 %v2926, %v3084
    %3086 = vmatmul.bf16.gmra.mxu0 %v2903
    %v3087 = vpop.f32.mrf.mxu0
    %v3088 = vadd.f32 %v2926, %v3087
    %v3089 = vpop.f32.mrf.mxu0
    %v3090 = vadd.f32 %v2926, %v3089
    %3091 = vmatmul.bf16.gmra.mxu0 %v2904
    %v3092 = vpop.f32.mrf.mxu0
    %v3093 = vadd.f32 %v2926, %v3092
    %v3094 = vpop.f32.mrf.mxu0
    %v3095 = vadd.f32 %v2926, %v3094
    %3096 = vmatmul.bf16.gmra.mxu0 %v2905
    %v3097 = vpop.f32.mrf.mxu0
    %v3098 = vadd.f32 %v2926, %v3097
    %v3099 = vpop.f32.mrf.mxu0
    %v3100 = vadd.f32 %v2926, %v3099
    %3101 = vmatmul.bf16.gmra.mxu0 %v2906
    %v3102 = vpop.f32.mrf.mxu0
    %v3103 = vadd.f32 %v2926, %v3102
    %v3104 = vpop.f32.mrf.mxu0
    %v3105 = vadd.f32 %v2926, %v3104
    %3106 = vdwg.mxu0
    %v3107 = vtanh.pop %v3019
    %v3108 = vtanh.pop %v3068
    %v3109 = vtanh.pop %v3021
    %v3110 = vtanh.pop %v3070
    %v3111 = vtanh.pop %v3024
    %v3112 = vtanh.pop %v3073
    %v3113 = vtanh.pop %v3026
    %v3114 = vtanh.pop %v3075
    %v3115 = vtanh.pop %v3029
    %v3116 = vtanh.pop %v3078
    %v3117 = vtanh.pop %v3031
    %v3118 = vtanh.pop %v3080
    %v3119 = vtanh.pop %v3034
    %v3120 = vtanh.pop %v3083
    %v3121 = vtanh.pop %v3036
    %v3122 = vtanh.pop %v3085
    %v3123 = vtanh.pop %v3039
    %v3124 = vtanh.pop %v3088
    %v3125 = vtanh.pop %v3041
    %v3126 = vtanh.pop %v3090
    %v3127 = vtanh.pop %v3044
    %v3128 = vtanh.pop %v3093
    %v3129 = vtanh.pop %v3046
    %v3130 = vtanh.pop %v3095
    %v3131 = vtanh.pop %v3049
    %v3132 = vtanh.pop %v3098
    %v3133 = vtanh.pop %v3051
    %v3134 = vtanh.pop %v3100
    %v3135 = vtanh.pop %v3054
    %v3136 = vtanh.pop %v3103
    %v3137 = vtanh.pop %v3056
    %v3138 = vtanh.pop %v3105
    %v3139 = vpack.c.bf16 %v3109, %v3107
    %v3140 = vpack.c.bf16 %v3110, %v3108
    %v3141 = vpack.c.bf16 %v3113, %v3111
    %v3142 = vpack.c.bf16 %v3114, %v3112
    %v3143 = vpack.c.bf16 %v3117, %v3115
    %v3144 = vpack.c.bf16 %v3118, %v3116
    %v3145 = vpack.c.bf16 %v3121, %v3119
    %v3146 = vpack.c.bf16 %v3122, %v3120
    %v3147 = vpack.c.bf16 %v3125, %v3123
    %v3148 = vpack.c.bf16 %v3126, %v3124
    %v3149 = vpack.c.bf16 %v3129, %v3127
    %v3150 = vpack.c.bf16 %v3130, %v3128
    %v3151 = vpack.c.bf16 %v3133, %v3131
    %v3152 = vpack.c.bf16 %v3134, %v3132
    %v3153 = vpack.c.bf16 %v3137, %v3135
    %v3154 = vpack.c.bf16 %v3138, %v3136
    %v3155 = vld [vmem:[#allocation16] sm:$0xff]
    %v3156 = vld [vmem:[#allocation16 + $0x8] sm:$0xff]
    %v3157 = vld [vmem:[#allocation16 + $0x10] sm:$0xf]
    %v3158 = vld [vmem:[#allocation16 + $0x14] sm:$0xff]
    %v3159 = vld [vmem:[#allocation16 + $0x1c] sm:$0xff]
    %v3160 = vld [vmem:[#allocation16 + $0x24] sm:$0xf]
    %v3161 = vld [vmem:[#allocation16 + $0x28] sm:$0xff]
    %v3162 = vld [vmem:[#allocation16 + $0x30] sm:$0xff]
    %v3163 = vld [vmem:[#allocation16 + $0x38] sm:$0xf]
    %v3164 = vld [vmem:[#allocation16 + $0x3c] sm:$0xff]
    %v3165 = vld [vmem:[#allocation16 + $0x44] sm:$0xff]
    %v3166 = vld [vmem:[#allocation16 + $0x4c] sm:$0xf]
    %v3167 = vld [vmem:[#allocation16 + $0x50] sm:$0xff]
    %v3168 = vld [vmem:[#allocation16 + $0x58] sm:$0xff]
    %v3169 = vld [vmem:[#allocation16 + $0x60] sm:$0xf]
    %v3170 = vld [vmem:[#allocation16 + $0x64] sm:$0xff]
    %v3171 = vld [vmem:[#allocation16 + $0x6c] sm:$0xff]
    %v3172 = vld [vmem:[#allocation16 + $0x74] sm:$0xf]
    %v3173 = vld [vmem:[#allocation16 + $0x78] sm:$0xff]
    %v3174 = vld [vmem:[#allocation16 + $0x80] sm:$0xff]
    %v3175 = vld [vmem:[#allocation16 + $0x88] sm:$0xf]
    %v3176 = vld [vmem:[#allocation16 + $0x8c] sm:$0xff]
    %v3177 = vld [vmem:[#allocation16 + $0x94] sm:$0xff]
    %v3178 = vld [vmem:[#allocation16 + $0x9c] sm:$0xf]
    %v3179 = vld [vmem:[#allocation16 + $0xa0] sm:$0xff]
    %v3180 = vld [vmem:[#allocation16 + $0xa8] sm:$0xff]
    %v3181 = vld [vmem:[#allocation16 + $0xb0] sm:$0xf]
    %v3182 = vld [vmem:[#allocation16 + $0xb4] sm:$0xff]
    %v3183 = vld [vmem:[#allocation16 + $0xbc] sm:$0xff]
    %v3184 = vld [vmem:[#allocation16 + $0xc4] sm:$0xf]
    %v3185 = vld [vmem:[#allocation16 + $0xc8] sm:$0xff]
    %v3186 = vld [vmem:[#allocation16 + $0xd0] sm:$0xff]
    %v3187 = vld [vmem:[#allocation16 + $0xd8] sm:$0xf]
    %v3188 = vld [vmem:[#allocation16 + $0xdc] sm:$0xff]
    %v3189 = vld [vmem:[#allocation16 + $0xe4] sm:$0xff]
    %v3190 = vld [vmem:[#allocation16 + $0xec] sm:$0xf]
    %v3191 = vld [vmem:[#allocation16 + $0xf0] sm:$0xff]
    %v3192 = vld [vmem:[#allocation16 + $0xf8] sm:$0xff]
    %v3193 = vld [vmem:[#allocation16 + $0x100] sm:$0xf]
    %v3194 = vld [vmem:[#allocation16 + $0x104] sm:$0xff]
    %v3195 = vld [vmem:[#allocation16 + $0x10c] sm:$0xff]
    %v3196 = vld [vmem:[#allocation16 + $0x114] sm:$0xf]
    %v3197 = vld [vmem:[#allocation16 + $0x118] sm:$0xff]
    %v3198 = vld [vmem:[#allocation16 + $0x120] sm:$0xff]
    %v3199 = vld [vmem:[#allocation16 + $0x128] sm:$0xf]
    %v3200 = vld [vmem:[#allocation16 + $0x12c] sm:$0xff]
    %v3201 = vld [vmem:[#allocation16 + $0x134] sm:$0xff]
    %v3202 = vld [vmem:[#allocation16 + $0x13c] sm:$0xf]
    %v3203 = vld [vmem:[#allocation16 + $0x140] sm:$0xff]
    %v3204 = vld [vmem:[#allocation16 + $0x148] sm:$0xff]
    %v3205 = vld [vmem:[#allocation16 + $0x150] sm:$0xf]
    %v3206 = vld [vmem:[#allocation16 + $0x154] sm:$0xff]
    %v3207 = vld [vmem:[#allocation16 + $0x15c] sm:$0xff]
    %v3208 = vld [vmem:[#allocation16 + $0x164] sm:$0xf]
    %v3209 = vld [vmem:[#allocation16 + $0x168] sm:$0xff]
    %v3210 = vld [vmem:[#allocation16 + $0x170] sm:$0xff]
    %v3211 = vld [vmem:[#allocation16 + $0x178] sm:$0xf]
    %v3212 = vld [vmem:[#allocation16 + $0x17c] sm:$0xff]
    %v3213 = vld [vmem:[#allocation16 + $0x184] sm:$0xff]
    %v3214 = vld [vmem:[#allocation16 + $0x18c] sm:$0xf]
    %v3215 = vld [vmem:[#allocation16 + $0x190] sm:$0xff]
    %v3216 = vld [vmem:[#allocation16 + $0x198] sm:$0xff]
    %v3217 = vld [vmem:[#allocation16 + $0x1a0] sm:$0xf]
    %v3218 = vld [vmem:[#allocation16 + $0x1a4] sm:$0xff]
    %v3219 = vld [vmem:[#allocation16 + $0x1ac] sm:$0xff]
    %v3220 = vld [vmem:[#allocation16 + $0x1b4] sm:$0xf]
    %v3221 = vld [vmem:[#allocation16 + $0x1b8] sm:$0xff]
    %v3222 = vld [vmem:[#allocation16 + $0x1c0] sm:$0xff]
    %v3223 = vld [vmem:[#allocation16 + $0x1c8] sm:$0xf]
    %v3224 = vld [vmem:[#allocation16 + $0x1cc] sm:$0xff]
    %v3225 = vld [vmem:[#allocation16 + $0x1d4] sm:$0xff]
    %v3226 = vld [vmem:[#allocation16 + $0x1dc] sm:$0xf]
    %v3227 = vld [vmem:[#allocation16 + $0x1e0] sm:$0xff]
    %v3228 = vld [vmem:[#allocation16 + $0x1e8] sm:$0xff]
    %v3229 = vld [vmem:[#allocation16 + $0x1f0] sm:$0xf]
    %v3230 = vld [vmem:[#allocation16 + $0x1f4] sm:$0xff]
    %v3231 = vld [vmem:[#allocation16 + $0x1fc] sm:$0xff]
    %v3232 = vld [vmem:[#allocation16 + $0x204] sm:$0xf]
    %v3233 = vld [vmem:[#allocation16 + $0x208] sm:$0xff]
    %v3234 = vld [vmem:[#allocation16 + $0x210] sm:$0xff]
    %v3235 = vld [vmem:[#allocation16 + $0x218] sm:$0xf]
    %v3236 = vld [vmem:[#allocation16 + $0x21c] sm:$0xff]
    %v3237 = vld [vmem:[#allocation16 + $0x224] sm:$0xff]
    %v3238 = vld [vmem:[#allocation16 + $0x22c] sm:$0xf]
    %v3239 = vld [vmem:[#allocation16 + $0x230] sm:$0xff]
    %v3240 = vld [vmem:[#allocation16 + $0x238] sm:$0xff]
    %v3241 = vld [vmem:[#allocation16 + $0x240] sm:$0xf]
    %v3242 = vld [vmem:[#allocation16 + $0x244] sm:$0xff]
    %v3243 = vld [vmem:[#allocation16 + $0x24c] sm:$0xff]
    %v3244 = vld [vmem:[#allocation16 + $0x254] sm:$0xf]
    %v3245 = vld [vmem:[#allocation16 + $0x258] sm:$0xff]
    %v3246 = vld [vmem:[#allocation16 + $0x260] sm:$0xff]
    %v3247 = vld [vmem:[#allocation16 + $0x268] sm:$0xf]
    %v3248 = vld [vmem:[#allocation16 + $0x26c] sm:$0xff]
    %v3249 = vld [vmem:[#allocation16 + $0x274] sm:$0xff]
    %v3250 = vld [vmem:[#allocation16 + $0x27c] sm:$0xf]
    %v3251 = vld [vmem:[%s11] sm:$0x1f]
    %v3253 = vperm.slane %v3251, 0
    %v3254 = vperm.slane %v3251, 1
    %v3255 = vperm.slane %v3251, 2
    %v3256 = vperm.slane %v3251, 3
    %v3257 = vperm.slane %v3251, 4
    %v3359 = vunpack.c.l.b16 %v3155
    %v3360 = vunpack.c.h.b16 %v3155
    %v3361 = vunpack.c.l.b16 %v3156
    %v3362 = vunpack.c.h.b16 %v3156
    %v3363 = vunpack.c.l.b16 %v3157
    %v3364 = vunpack.c.l.b16 %v3158
    %v3365 = vunpack.c.h.b16 %v3158
    %v3366 = vunpack.c.l.b16 %v3159
    %v3367 = vunpack.c.h.b16 %v3159
    %v3368 = vunpack.c.l.b16 %v3160
    %v3369 = vunpack.c.l.b16 %v3161
    %v3370 = vunpack.c.h.b16 %v3161
    %v3371 = vunpack.c.l.b16 %v3162
    %v3372 = vunpack.c.h.b16 %v3162
    %v3373 = vunpack.c.l.b16 %v3163
    %v3374 = vunpack.c.l.b16 %v3164
    %v3375 = vunpack.c.h.b16 %v3164
    %v3376 = vunpack.c.l.b16 %v3165
    %v3377 = vunpack.c.h.b16 %v3165
    %v3378 = vunpack.c.l.b16 %v3166
    %v3379 = vunpack.c.l.b16 %v3167
    %v3380 = vunpack.c.h.b16 %v3167
    %v3381 = vunpack.c.l.b16 %v3168
    %v3382 = vunpack.c.h.b16 %v3168
    %v3383 = vunpack.c.l.b16 %v3169
    %v3384 = vunpack.c.l.b16 %v3170
    %v3385 = vunpack.c.h.b16 %v3170
    %v3386 = vunpack.c.l.b16 %v3171
    %v3387 = vunpack.c.h.b16 %v3171
    %v3388 = vunpack.c.l.b16 %v3172
    %v3389 = vunpack.c.l.b16 %v3173
    %v3390 = vunpack.c.h.b16 %v3173
    %v3391 = vunpack.c.l.b16 %v3174
    %v3392 = vunpack.c.h.b16 %v3174
    %v3393 = vunpack.c.l.b16 %v3175
    %v3394 = vunpack.c.l.b16 %v3176
    %v3395 = vunpack.c.h.b16 %v3176
    %v3396 = vunpack.c.l.b16 %v3177
    %v3397 = vunpack.c.h.b16 %v3177
    %v3398 = vunpack.c.l.b16 %v3178
    %v3399 = vunpack.c.l.b16 %v3179
    %v3400 = vunpack.c.h.b16 %v3179
    %v3401 = vunpack.c.l.b16 %v3180
    %v3402 = vunpack.c.h.b16 %v3180
    %v3403 = vunpack.c.l.b16 %v3181
    %v3404 = vunpack.c.l.b16 %v3182
    %v3405 = vunpack.c.h.b16 %v3182
    %v3406 = vunpack.c.l.b16 %v3183
    %v3407 = vunpack.c.h.b16 %v3183
    %v3408 = vunpack.c.l.b16 %v3184
    %v3409 = vunpack.c.l.b16 %v3185
    %v3410 = vunpack.c.h.b16 %v3185
    %v3411 = vunpack.c.l.b16 %v3186
    %v3412 = vunpack.c.h.b16 %v3186
    %v3413 = vunpack.c.l.b16 %v3187
    %v3414 = vunpack.c.l.b16 %v3188
    %v3415 = vunpack.c.h.b16 %v3188
    %v3416 = vunpack.c.l.b16 %v3189
    %v3417 = vunpack.c.h.b16 %v3189
    %v3418 = vunpack.c.l.b16 %v3190
    %v3419 = vunpack.c.l.b16 %v3191
    %v3420 = vunpack.c.h.b16 %v3191
    %v3421 = vunpack.c.l.b16 %v3192
    %v3422 = vunpack.c.h.b16 %v3192
    %v3423 = vunpack.c.l.b16 %v3193
    %v3424 = vunpack.c.l.b16 %v3194
    %v3425 = vunpack.c.h.b16 %v3194
    %v3426 = vunpack.c.l.b16 %v3195
    %v3427 = vunpack.c.h.b16 %v3195
    %v3428 = vunpack.c.l.b16 %v3196
    %v3429 = vunpack.c.l.b16 %v3197
    %v3430 = vunpack.c.h.b16 %v3197
    %v3431 = vunpack.c.l.b16 %v3198
    %v3432 = vunpack.c.h.b16 %v3198
    %v3433 = vunpack.c.l.b16 %v3199
    %v3434 = vunpack.c.l.b16 %v3200
    %v3435 = vunpack.c.h.b16 %v3200
    %v3436 = vunpack.c.l.b16 %v3201
    %v3437 = vunpack.c.h.b16 %v3201
    %v3438 = vunpack.c.l.b16 %v3202
    %v3439 = vunpack.c.l.b16 %v3203
    %v3440 = vunpack.c.h.b16 %v3203
    %v3441 = vunpack.c.l.b16 %v3204
    %v3442 = vunpack.c.h.b16 %v3204
    %v3443 = vunpack.c.l.b16 %v3205
    %v3444 = vunpack.c.l.b16 %v3206
    %v3445 = vunpack.c.h.b16 %v3206
    %v3446 = vunpack.c.l.b16 %v3207
    %v3447 = vunpack.c.h.b16 %v3207
    %v3448 = vunpack.c.l.b16 %v3208
    %v3449 = vunpack.c.l.b16 %v3209
    %v3450 = vunpack.c.h.b16 %v3209
    %v3451 = vunpack.c.l.b16 %v3210
    %v3452 = vunpack.c.h.b16 %v3210
    %v3453 = vunpack.c.l.b16 %v3211
    %v3454 = vunpack.c.l.b16 %v3212
    %v3455 = vunpack.c.h.b16 %v3212
    %v3456 = vunpack.c.l.b16 %v3213
    %v3457 = vunpack.c.h.b16 %v3213
    %v3458 = vunpack.c.l.b16 %v3214
    %v3459 = vunpack.c.l.b16 %v3215
    %v3460 = vunpack.c.h.b16 %v3215
    %v3461 = vunpack.c.l.b16 %v3216
    %v3462 = vunpack.c.h.b16 %v3216
    %v3463 = vunpack.c.l.b16 %v3217
    %v3464 = vunpack.c.l.b16 %v3218
    %v3465 = vunpack.c.h.b16 %v3218
    %v3466 = vunpack.c.l.b16 %v3219
    %v3467 = vunpack.c.h.b16 %v3219
    %v3468 = vunpack.c.l.b16 %v3220
    %v3469 = vunpack.c.l.b16 %v3221
    %v3470 = vunpack.c.h.b16 %v3221
    %v3471 = vunpack.c.l.b16 %v3222
    %v3472 = vunpack.c.h.b16 %v3222
    %v3473 = vunpack.c.l.b16 %v3223
    %v3474 = vunpack.c.l.b16 %v3224
    %v3475 = vunpack.c.h.b16 %v3224
    %v3476 = vunpack.c.l.b16 %v3225
    %v3477 = vunpack.c.h.b16 %v3225
    %v3478 = vunpack.c.l.b16 %v3226
    %v3479 = vunpack.c.l.b16 %v3227
    %v3480 = vunpack.c.h.b16 %v3227
    %v3481 = vunpack.c.l.b16 %v3228
    %v3482 = vunpack.c.h.b16 %v3228
    %v3483 = vunpack.c.l.b16 %v3229
    %v3484 = vunpack.c.l.b16 %v3230
    %v3485 = vunpack.c.h.b16 %v3230
    %v3486 = vunpack.c.l.b16 %v3231
    %v3487 = vunpack.c.h.b16 %v3231
    %v3488 = vunpack.c.l.b16 %v3232
    %v3489 = vunpack.c.l.b16 %v3233
    %v3490 = vunpack.c.h.b16 %v3233
    %v3491 = vunpack.c.l.b16 %v3234
    %v3492 = vunpack.c.h.b16 %v3234
    %v3493 = vunpack.c.l.b16 %v3235
    %v3494 = vunpack.c.l.b16 %v3236
    %v3495 = vunpack.c.h.b16 %v3236
    %v3496 = vunpack.c.l.b16 %v3237
    %v3497 = vunpack.c.h.b16 %v3237
    %v3498 = vunpack.c.l.b16 %v3238
    %v3499 = vunpack.c.l.b16 %v3239
    %v3500 = vunpack.c.h.b16 %v3239
    %v3501 = vunpack.c.l.b16 %v3240
    %v3502 = vunpack.c.h.b16 %v3240
    %v3503 = vunpack.c.l.b16 %v3241
    %v3504 = vunpack.c.l.b16 %v3242
    %v3505 = vunpack.c.h.b16 %v3242
    %v3506 = vunpack.c.l.b16 %v3243
    %v3507 = vunpack.c.h.b16 %v3243
    %v3508 = vunpack.c.l.b16 %v3244
    %v3509 = vunpack.c.l.b16 %v3245
    %v3510 = vunpack.c.h.b16 %v3245
    %v3511 = vunpack.c.l.b16 %v3246
    %v3512 = vunpack.c.h.b16 %v3246
    %v3513 = vunpack.c.l.b16 %v3247
    %v3514 = vunpack.c.l.b16 %v3248
    %v3515 = vunpack.c.h.b16 %v3248
    %v3516 = vunpack.c.l.b16 %v3249
    %v3517 = vunpack.c.h.b16 %v3249
    %v3518 = vunpack.c.l.b16 %v3250
    %v3519 = vpack.c.b16 %v3364, %v3359
    %v3520 = vpack.c.b16 %v3365, %v3360
    %v3521 = vpack.c.b16 %v3366, %v3361
    %v3522 = vpack.c.b16 %v3367, %v3362
    %v3523 = vpack.c.b16 %v3368, %v3363
    %v3524 = vpack.c.b16 %v3374, %v3369
    %v3525 = vpack.c.b16 %v3375, %v3370
    %v3526 = vpack.c.b16 %v3376, %v3371
    %v3527 = vpack.c.b16 %v3377, %v3372
    %v3528 = vpack.c.b16 %v3378, %v3373
    %v3529 = vpack.c.b16 %v3384, %v3379
    %v3530 = vpack.c.b16 %v3385, %v3380
    %v3531 = vpack.c.b16 %v3386, %v3381
    %v3532 = vpack.c.b16 %v3387, %v3382
    %v3533 = vpack.c.b16 %v3388, %v3383
    %v3534 = vpack.c.b16 %v3394, %v3389
    %v3535 = vpack.c.b16 %v3395, %v3390
    %v3536 = vpack.c.b16 %v3396, %v3391
    %v3537 = vpack.c.b16 %v3397, %v3392
    %v3538 = vpack.c.b16 %v3398, %v3393
    %v3539 = vpack.c.b16 %v3404, %v3399
    %v3540 = vpack.c.b16 %v3405, %v3400
    %v3541 = vpack.c.b16 %v3406, %v3401
    %v3542 = vpack.c.b16 %v3407, %v3402
    %v3543 = vpack.c.b16 %v3408, %v3403
    %v3544 = vpack.c.b16 %v3414, %v3409
    %v3545 = vpack.c.b16 %v3415, %v3410
    %v3546 = vpack.c.b16 %v3416, %v3411
    %v3547 = vpack.c.b16 %v3417, %v3412
    %v3548 = vpack.c.b16 %v3418, %v3413
    %v3549 = vpack.c.b16 %v3424, %v3419
    %v3550 = vpack.c.b16 %v3425, %v3420
    %v3551 = vpack.c.b16 %v3426, %v3421
    %v3552 = vpack.c.b16 %v3427, %v3422
    %v3553 = vpack.c.b16 %v3428, %v3423
    %v3554 = vpack.c.b16 %v3434, %v3429
    %v3555 = vpack.c.b16 %v3435, %v3430
    %v3556 = vpack.c.b16 %v3436, %v3431
    %v3557 = vpack.c.b16 %v3437, %v3432
    %v3558 = vpack.c.b16 %v3438, %v3433
    %v3559 = vpack.c.b16 %v3444, %v3439
    %v3560 = vpack.c.b16 %v3445, %v3440
    %v3561 = vpack.c.b16 %v3446, %v3441
    %v3562 = vpack.c.b16 %v3447, %v3442
    %v3563 = vpack.c.b16 %v3448, %v3443
    %v3564 = vpack.c.b16 %v3454, %v3449
    %v3565 = vpack.c.b16 %v3455, %v3450
    %v3566 = vpack.c.b16 %v3456, %v3451
    %v3567 = vpack.c.b16 %v3457, %v3452
    %v3568 = vpack.c.b16 %v3458, %v3453
    %v3569 = vpack.c.b16 %v3464, %v3459
    %v3570 = vpack.c.b16 %v3465, %v3460
    %v3571 = vpack.c.b16 %v3466, %v3461
    %v3572 = vpack.c.b16 %v3467, %v3462
    %v3573 = vpack.c.b16 %v3468, %v3463
    %v3574 = vpack.c.b16 %v3474, %v3469
    %v3575 = vpack.c.b16 %v3475, %v3470
    %v3576 = vpack.c.b16 %v3476, %v3471
    %v3577 = vpack.c.b16 %v3477, %v3472
    %v3578 = vpack.c.b16 %v3478, %v3473
    %v3579 = vpack.c.b16 %v3484, %v3479
    %v3580 = vpack.c.b16 %v3485, %v3480
    %v3581 = vpack.c.b16 %v3486, %v3481
    %v3582 = vpack.c.b16 %v3487, %v3482
    %v3583 = vpack.c.b16 %v3488, %v3483
    %v3584 = vpack.c.b16 %v3494, %v3489
    %v3585 = vpack.c.b16 %v3495, %v3490
    %v3586 = vpack.c.b16 %v3496, %v3491
    %v3587 = vpack.c.b16 %v3497, %v3492
    %v3588 = vpack.c.b16 %v3498, %v3493
    %v3589 = vpack.c.b16 %v3504, %v3499
    %v3590 = vpack.c.b16 %v3505, %v3500
    %v3591 = vpack.c.b16 %v3506, %v3501
    %v3592 = vpack.c.b16 %v3507, %v3502
    %v3593 = vpack.c.b16 %v3508, %v3503
    %v3594 = vpack.c.b16 %v3514, %v3509
    %v3595 = vpack.c.b16 %v3515, %v3510
    %v3596 = vpack.c.b16 %v3516, %v3511
    %v3597 = vpack.c.b16 %v3517, %v3512
    %v3598 = vpack.c.b16 %v3518, %v3513
    %3679 = vmatpush.bf16.msra.mxu0 %v3554
    %3680 = vmatpush.bf16.msra.mxu0 %v3549
    %3681 = vmatpush.bf16.msra.mxu0 %v3544
    %3682 = vmatpush.bf16.msra.mxu0 %v3539
    %3683 = vmatpush.bf16.msra.mxu0 %v3534
    %3684 = vmatpush.bf16.msra.mxu0 %v3529
    %3685 = vmatpush.bf16.msra.mxu0 %v3524
    %3686 = vmatpush.bf16.msra.mxu0 %v3519
    %3687 = vmatmul.bf16.gmra.mxu0 %v3139
    %v3688 = vpop.f32.mrf.mxu0
    %v3689 = vadd.f32 %v3253, %v3688
    %v3690 = vpop.f32.mrf.mxu0
    %v3691 = vadd.f32 %v3253, %v3690
    %3692 = vmatmul.bf16.gmra.mxu0 %v3141
    %v3693 = vpop.f32.mrf.mxu0
    %v3694 = vadd.f32 %v3253, %v3693
    %v3695 = vpop.f32.mrf.mxu0
    %v3696 = vadd.f32 %v3253, %v3695
    %3697 = vmatmul.bf16.gmra.mxu0 %v3143
    %v3698 = vpop.f32.mrf.mxu0
    %v3699 = vadd.f32 %v3253, %v3698
    %v3700 = vpop.f32.mrf.mxu0
    %v3701 = vadd.f32 %v3253, %v3700
    %3702 = vmatmul.bf16.gmra.mxu0 %v3145
    %v3703 = vpop.f32.mrf.mxu0
    %v3704 = vadd.f32 %v3253, %v3703
    %v3705 = vpop.f32.mrf.mxu0
    %v3706 = vadd.f32 %v3253, %v3705
    %3707 = vmatmul.bf16.gmra.mxu0 %v3147
    %v3708 = vpop.f32.mrf.mxu0
    %v3709 = vadd.f32 %v3253, %v3708
    %v3710 = vpop.f32.mrf.mxu0
    %v3711 = vadd.f32 %v3253, %v3710
    %3712 = vmatmul.bf16.gmra.mxu0 %v3149
    %v3713 = vpop.f32.mrf.mxu0
    %v3714 = vadd.f32 %v3253, %v3713
    %v3715 = vpop.f32.mrf.mxu0
    %v3716 = vadd.f32 %v3253, %v3715
    %3717 = vmatmul.bf16.gmra.mxu0 %v3151
    %v3718 = vpop.f32.mrf.mxu0
    %v3719 = vadd.f32 %v3253, %v3718
    %v3720 = vpop.f32.mrf.mxu0
    %v3721 = vadd.f32 %v3253, %v3720
    %3722 = vmatmul.bf16.gmra.mxu0 %v3153
    %v3723 = vpop.f32.mrf.mxu0
    %v3724 = vadd.f32 %v3253, %v3723
    %v3725 = vpop.f32.mrf.mxu0
    %v3726 = vadd.f32 %v3253, %v3725
    %3727 = vdwg.mxu0
    %3728 = vmatpush.bf16.msra.mxu0 %v3594
    %3729 = vmatpush.bf16.msra.mxu0 %v3589
    %3730 = vmatpush.bf16.msra.mxu0 %v3584
    %3731 = vmatpush.bf16.msra.mxu0 %v3579
    %3732 = vmatpush.bf16.msra.mxu0 %v3574
    %3733 = vmatpush.bf16.msra.mxu0 %v3569
    %3734 = vmatpush.bf16.msra.mxu0 %v3564
    %3735 = vmatpush.bf16.msra.mxu0 %v3559
    %3736 = vmatmul.bf16.gmra.mxu0 %v3140
    %v3737 = vpop.f32.mrf.mxu0
    %v3738 = vadd.f32 %v3689, %v3737
    %v3739 = vpop.f32.mrf.mxu0
    %v3740 = vadd.f32 %v3691, %v3739
    %3741 = vmatmul.bf16.gmra.mxu0 %v3142
    %v3742 = vpop.f32.mrf.mxu0
    %v3743 = vadd.f32 %v3694, %v3742
    %v3744 = vpop.f32.mrf.mxu0
    %v3745 = vadd.f32 %v3696, %v3744
    %3746 = vmatmul.bf16.gmra.mxu0 %v3144
    %v3747 = vpop.f32.mrf.mxu0
    %v3748 = vadd.f32 %v3699, %v3747
    %v3749 = vpop.f32.mrf.mxu0
    %v3750 = vadd.f32 %v3701, %v3749
    %3751 = vmatmul.bf16.gmra.mxu0 %v3146
    %v3752 = vpop.f32.mrf.mxu0
    %v3753 = vadd.f32 %v3704, %v3752
    %v3754 = vpop.f32.mrf.mxu0
    %v3755 = vadd.f32 %v3706, %v3754
    %3756 = vmatmul.bf16.gmra.mxu0 %v3148
    %v3757 = vpop.f32.mrf.mxu0
    %v3758 = vadd.f32 %v3709, %v3757
    %v3759 = vpop.f32.mrf.mxu0
    %v3760 = vadd.f32 %v3711, %v3759
    %3761 = vmatmul.bf16.gmra.mxu0 %v3150
    %v3762 = vpop.f32.mrf.mxu0
    %v3763 = vadd.f32 %v3714, %v3762
    %v3764 = vpop.f32.mrf.mxu0
    %v3765 = vadd.f32 %v3716, %v3764
    %3766 = vmatmul.bf16.gmra.mxu0 %v3152
    %v3767 = vpop.f32.mrf.mxu0
    %v3768 = vadd.f32 %v3719, %v3767
    %v3769 = vpop.f32.mrf.mxu0
    %v3770 = vadd.f32 %v3721, %v3769
    %3771 = vmatmul.bf16.gmra.mxu0 %v3154
    %v3772 = vpop.f32.mrf.mxu0
    %v3773 = vadd.f32 %v3724, %v3772
    %v3774 = vpop.f32.mrf.mxu0
    %v3775 = vadd.f32 %v3726, %v3774
    %3776 = vdwg.mxu0
    %3777 = vmatpush.bf16.msra.mxu0 %v3555
    %3778 = vmatpush.bf16.msra.mxu0 %v3550
    %3779 = vmatpush.bf16.msra.mxu0 %v3545
    %3780 = vmatpush.bf16.msra.mxu0 %v3540
    %3781 = vmatpush.bf16.msra.mxu0 %v3535
    %3782 = vmatpush.bf16.msra.mxu0 %v3530
    %3783 = vmatpush.bf16.msra.mxu0 %v3525
    %3784 = vmatpush.bf16.msra.mxu0 %v3520
    %3785 = vmatmul.bf16.gmra.mxu0 %v3139
    %v3786 = vpop.f32.mrf.mxu0
    %v3787 = vadd.f32 %v3254, %v3786
    %v3788 = vpop.f32.mrf.mxu0
    %v3789 = vadd.f32 %v3254, %v3788
    %3790 = vmatmul.bf16.gmra.mxu0 %v3141
    %v3791 = vpop.f32.mrf.mxu0
    %v3792 = vadd.f32 %v3254, %v3791
    %v3793 = vpop.f32.mrf.mxu0
    %v3794 = vadd.f32 %v3254, %v3793
    %3795 = vmatmul.bf16.gmra.mxu0 %v3143
    %v3796 = vpop.f32.mrf.mxu0
    %v3797 = vadd.f32 %v3254, %v3796
    %v3798 = vpop.f32.mrf.mxu0
    %v3799 = vadd.f32 %v3254, %v3798
    %3800 = vmatmul.bf16.gmra.mxu0 %v3145
    %v3801 = vpop.f32.mrf.mxu0
    %v3802 = vadd.f32 %v3254, %v3801
    %v3803 = vpop.f32.mrf.mxu0
    %v3804 = vadd.f32 %v3254, %v3803
    %3805 = vmatmul.bf16.gmra.mxu0 %v3147
    %v3806 = vpop.f32.mrf.mxu0
    %v3807 = vadd.f32 %v3254, %v3806
    %v3808 = vpop.f32.mrf.mxu0
    %v3809 = vadd.f32 %v3254, %v3808
    %3810 = vmatmul.bf16.gmra.mxu0 %v3149
    %v3811 = vpop.f32.mrf.mxu0
    %v3812 = vadd.f32 %v3254, %v3811
    %v3813 = vpop.f32.mrf.mxu0
    %v3814 = vadd.f32 %v3254, %v3813
    %3815 = vmatmul.bf16.gmra.mxu0 %v3151
    %v3816 = vpop.f32.mrf.mxu0
    %v3817 = vadd.f32 %v3254, %v3816
    %v3818 = vpop.f32.mrf.mxu0
    %v3819 = vadd.f32 %v3254, %v3818
    %3820 = vmatmul.bf16.gmra.mxu0 %v3153
    %v3821 = vpop.f32.mrf.mxu0
    %v3822 = vadd.f32 %v3254, %v3821
    %v3823 = vpop.f32.mrf.mxu0
    %v3824 = vadd.f32 %v3254, %v3823
    %3825 = vdwg.mxu0
    %3826 = vmatpush.bf16.msra.mxu0 %v3595
    %3827 = vmatpush.bf16.msra.mxu0 %v3590
    %3828 = vmatpush.bf16.msra.mxu0 %v3585
    %3829 = vmatpush.bf16.msra.mxu0 %v3580
    %3830 = vmatpush.bf16.msra.mxu0 %v3575
    %3831 = vmatpush.bf16.msra.mxu0 %v3570
    %3832 = vmatpush.bf16.msra.mxu0 %v3565
    %3833 = vmatpush.bf16.msra.mxu0 %v3560
    %3834 = vmatmul.bf16.gmra.mxu0 %v3140
    %v3835 = vpop.f32.mrf.mxu0
    %v3836 = vadd.f32 %v3787, %v3835
    %v3837 = vpop.f32.mrf.mxu0
    %v3838 = vadd.f32 %v3789, %v3837
    %3839 = vmatmul.bf16.gmra.mxu0 %v3142
    %v3840 = vpop.f32.mrf.mxu0
    %v3841 = vadd.f32 %v3792, %v3840
    %v3842 = vpop.f32.mrf.mxu0
    %v3843 = vadd.f32 %v3794, %v3842
    %3844 = vmatmul.bf16.gmra.mxu0 %v3144
    %v3845 = vpop.f32.mrf.mxu0
    %v3846 = vadd.f32 %v3797, %v3845
    %v3847 = vpop.f32.mrf.mxu0
    %v3848 = vadd.f32 %v3799, %v3847
    %3849 = vmatmul.bf16.gmra.mxu0 %v3146
    %v3850 = vpop.f32.mrf.mxu0
    %v3851 = vadd.f32 %v3802, %v3850
    %v3852 = vpop.f32.mrf.mxu0
    %v3853 = vadd.f32 %v3804, %v3852
    %3854 = vmatmul.bf16.gmra.mxu0 %v3148
    %v3855 = vpop.f32.mrf.mxu0
    %v3856 = vadd.f32 %v3807, %v3855
    %v3857 = vpop.f32.mrf.mxu0
    %v3858 = vadd.f32 %v3809, %v3857
    %3859 = vmatmul.bf16.gmra.mxu0 %v3150
    %v3860 = vpop.f32.mrf.mxu0
    %v3861 = vadd.f32 %v3812, %v3860
    %v3862 = vpop.f32.mrf.mxu0
    %v3863 = vadd.f32 %v3814, %v3862
    %3864 = vmatmul.bf16.gmra.mxu0 %v3152
    %v3865 = vpop.f32.mrf.mxu0
    %v3866 = vadd.f32 %v3817, %v3865
    %v3867 = vpop.f32.mrf.mxu0
    %v3868 = vadd.f32 %v3819, %v3867
    %3869 = vmatmul.bf16.gmra.mxu0 %v3154
    %v3870 = vpop.f32.mrf.mxu0
    %v3871 = vadd.f32 %v3822, %v3870
    %v3872 = vpop.f32.mrf.mxu0
    %v3873 = vadd.f32 %v3824, %v3872
    %3874 = vdwg.mxu0
    %3875 = vmatpush.bf16.msra.mxu0 %v3556
    %3876 = vmatpush.bf16.msra.mxu0 %v3551
    %3877 = vmatpush.bf16.msra.mxu0 %v3546
    %3878 = vmatpush.bf16.msra.mxu0 %v3541
    %3879 = vmatpush.bf16.msra.mxu0 %v3536
    %3880 = vmatpush.bf16.msra.mxu0 %v3531
    %3881 = vmatpush.bf16.msra.mxu0 %v3526
    %3882 = vmatpush.bf16.msra.mxu0 %v3521
    %3883 = vmatmul.bf16.gmra.mxu0 %v3139
    %v3884 = vpop.f32.mrf.mxu0
    %v3885 = vadd.f32 %v3255, %v3884
    %v3886 = vpop.f32.mrf.mxu0
    %v3887 = vadd.f32 %v3255, %v3886
    %3888 = vmatmul.bf16.gmra.mxu0 %v3141
    %v3889 = vpop.f32.mrf.mxu0
    %v3890 = vadd.f32 %v3255, %v3889
    %v3891 = vpop.f32.mrf.mxu0
    %v3892 = vadd.f32 %v3255, %v3891
    %3893 = vmatmul.bf16.gmra.mxu0 %v3143
    %v3894 = vpop.f32.mrf.mxu0
    %v3895 = vadd.f32 %v3255, %v3894
    %v3896 = vpop.f32.mrf.mxu0
    %v3897 = vadd.f32 %v3255, %v3896
    %3898 = vmatmul.bf16.gmra.mxu0 %v3145
    %v3899 = vpop.f32.mrf.mxu0
    %v3900 = vadd.f32 %v3255, %v3899
    %v3901 = vpop.f32.mrf.mxu0
    %v3902 = vadd.f32 %v3255, %v3901
    %3903 = vmatmul.bf16.gmra.mxu0 %v3147
    %v3904 = vpop.f32.mrf.mxu0
    %v3905 = vadd.f32 %v3255, %v3904
    %v3906 = vpop.f32.mrf.mxu0
    %v3907 = vadd.f32 %v3255, %v3906
    %3908 = vmatmul.bf16.gmra.mxu0 %v3149
    %v3909 = vpop.f32.mrf.mxu0
    %v3910 = vadd.f32 %v3255, %v3909
    %v3911 = vpop.f32.mrf.mxu0
    %v3912 = vadd.f32 %v3255, %v3911
    %3913 = vmatmul.bf16.gmra.mxu0 %v3151
    %v3914 = vpop.f32.mrf.mxu0
    %v3915 = vadd.f32 %v3255, %v3914
    %v3916 = vpop.f32.mrf.mxu0
    %v3917 = vadd.f32 %v3255, %v3916
    %3918 = vmatmul.bf16.gmra.mxu0 %v3153
    %v3919 = vpop.f32.mrf.mxu0
    %v3920 = vadd.f32 %v3255, %v3919
    %v3921 = vpop.f32.mrf.mxu0
    %v3922 = vadd.f32 %v3255, %v3921
    %3923 = vdwg.mxu0
    %3924 = vmatpush.bf16.msra.mxu0 %v3596
    %3925 = vmatpush.bf16.msra.mxu0 %v3591
    %3926 = vmatpush.bf16.msra.mxu0 %v3586
    %3927 = vmatpush.bf16.msra.mxu0 %v3581
    %3928 = vmatpush.bf16.msra.mxu0 %v3576
    %3929 = vmatpush.bf16.msra.mxu0 %v3571
    %3930 = vmatpush.bf16.msra.mxu0 %v3566
    %3931 = vmatpush.bf16.msra.mxu0 %v3561
    %3932 = vmatmul.bf16.gmra.mxu0 %v3140
    %v3933 = vpop.f32.mrf.mxu0
    %v3934 = vadd.f32 %v3885, %v3933
    %v3935 = vpop.f32.mrf.mxu0
    %v3936 = vadd.f32 %v3887, %v3935
    %3937 = vmatmul.bf16.gmra.mxu0 %v3142
    %v3938 = vpop.f32.mrf.mxu0
    %v3939 = vadd.f32 %v3890, %v3938
    %v3940 = vpop.f32.mrf.mxu0
    %v3941 = vadd.f32 %v3892, %v3940
    %3942 = vmatmul.bf16.gmra.mxu0 %v3144
    %v3943 = vpop.f32.mrf.mxu0
    %v3944 = vadd.f32 %v3895, %v3943
    %v3945 = vpop.f32.mrf.mxu0
    %v3946 = vadd.f32 %v3897, %v3945
    %3947 = vmatmul.bf16.gmra.mxu0 %v3146
    %v3948 = vpop.f32.mrf.mxu0
    %v3949 = vadd.f32 %v3900, %v3948
    %v3950 = vpop.f32.mrf.mxu0
    %v3951 = vadd.f32 %v3902, %v3950
    %3952 = vmatmul.bf16.gmra.mxu0 %v3148
    %v3953 = vpop.f32.mrf.mxu0
    %v3954 = vadd.f32 %v3905, %v3953
    %v3955 = vpop.f32.mrf.mxu0
    %v3956 = vadd.f32 %v3907, %v3955
    %3957 = vmatmul.bf16.gmra.mxu0 %v3150
    %v3958 = vpop.f32.mrf.mxu0
    %v3959 = vadd.f32 %v3910, %v3958
    %v3960 = vpop.f32.mrf.mxu0
    %v3961 = vadd.f32 %v3912, %v3960
    %3962 = vmatmul.bf16.gmra.mxu0 %v3152
    %v3963 = vpop.f32.mrf.mxu0
    %v3964 = vadd.f32 %v3915, %v3963
    %v3965 = vpop.f32.mrf.mxu0
    %v3966 = vadd.f32 %v3917, %v3965
    %3967 = vmatmul.bf16.gmra.mxu0 %v3154
    %v3968 = vpop.f32.mrf.mxu0
    %v3969 = vadd.f32 %v3920, %v3968
    %v3970 = vpop.f32.mrf.mxu0
    %v3971 = vadd.f32 %v3922, %v3970
    %3972 = vdwg.mxu0
    %3973 = vmatpush.bf16.msra.mxu0 %v3557
    %3974 = vmatpush.bf16.msra.mxu0 %v3552
    %3975 = vmatpush.bf16.msra.mxu0 %v3547
    %3976 = vmatpush.bf16.msra.mxu0 %v3542
    %3977 = vmatpush.bf16.msra.mxu0 %v3537
    %3978 = vmatpush.bf16.msra.mxu0 %v3532
    %3979 = vmatpush.bf16.msra.mxu0 %v3527
    %3980 = vmatpush.bf16.msra.mxu0 %v3522
    %3981 = vmatmul.bf16.gmra.mxu0 %v3139
    %v3982 = vpop.f32.mrf.mxu0
    %v3983 = vadd.f32 %v3256, %v3982
    %v3984 = vpop.f32.mrf.mxu0
    %v3985 = vadd.f32 %v3256, %v3984
    %3986 = vmatmul.bf16.gmra.mxu0 %v3141
    %v3987 = vpop.f32.mrf.mxu0
    %v3988 = vadd.f32 %v3256, %v3987
    %v3989 = vpop.f32.mrf.mxu0
    %v3990 = vadd.f32 %v3256, %v3989
    %3991 = vmatmul.bf16.gmra.mxu0 %v3143
    %v3992 = vpop.f32.mrf.mxu0
    %v3993 = vadd.f32 %v3256, %v3992
    %v3994 = vpop.f32.mrf.mxu0
    %v3995 = vadd.f32 %v3256, %v3994
    %3996 = vmatmul.bf16.gmra.mxu0 %v3145
    %v3997 = vpop.f32.mrf.mxu0
    %v3998 = vadd.f32 %v3256, %v3997
    %v3999 = vpop.f32.mrf.mxu0
    %v4000 = vadd.f32 %v3256, %v3999
    %4001 = vmatmul.bf16.gmra.mxu0 %v3147
    %v4002 = vpop.f32.mrf.mxu0
    %v4003 = vadd.f32 %v3256, %v4002
    %v4004 = vpop.f32.mrf.mxu0
    %v4005 = vadd.f32 %v3256, %v4004
    %4006 = vmatmul.bf16.gmra.mxu0 %v3149
    %v4007 = vpop.f32.mrf.mxu0
    %v4008 = vadd.f32 %v3256, %v4007
    %v4009 = vpop.f32.mrf.mxu0
    %v4010 = vadd.f32 %v3256, %v4009
    %4011 = vmatmul.bf16.gmra.mxu0 %v3151
    %v4012 = vpop.f32.mrf.mxu0
    %v4013 = vadd.f32 %v3256, %v4012
    %v4014 = vpop.f32.mrf.mxu0
    %v4015 = vadd.f32 %v3256, %v4014
    %4016 = vmatmul.bf16.gmra.mxu0 %v3153
    %v4017 = vpop.f32.mrf.mxu0
    %v4018 = vadd.f32 %v3256, %v4017
    %v4019 = vpop.f32.mrf.mxu0
    %v4020 = vadd.f32 %v3256, %v4019
    %4021 = vdwg.mxu0
    %4022 = vmatpush.bf16.msra.mxu0 %v3597
    %4023 = vmatpush.bf16.msra.mxu0 %v3592
    %4024 = vmatpush.bf16.msra.mxu0 %v3587
    %4025 = vmatpush.bf16.msra.mxu0 %v3582
    %4026 = vmatpush.bf16.msra.mxu0 %v3577
    %4027 = vmatpush.bf16.msra.mxu0 %v3572
    %4028 = vmatpush.bf16.msra.mxu0 %v3567
    %4029 = vmatpush.bf16.msra.mxu0 %v3562
    %4030 = vmatmul.bf16.gmra.mxu0 %v3140
    %v4031 = vpop.f32.mrf.mxu0
    %v4032 = vadd.f32 %v3983, %v4031
    %v4033 = vpop.f32.mrf.mxu0
    %v4034 = vadd.f32 %v3985, %v4033
    %4035 = vmatmul.bf16.gmra.mxu0 %v3142
    %v4036 = vpop.f32.mrf.mxu0
    %v4037 = vadd.f32 %v3988, %v4036
    %v4038 = vpop.f32.mrf.mxu0
    %v4039 = vadd.f32 %v3990, %v4038
    %4040 = vmatmul.bf16.gmra.mxu0 %v3144
    %v4041 = vpop.f32.mrf.mxu0
    %v4042 = vadd.f32 %v3993, %v4041
    %v4043 = vpop.f32.mrf.mxu0
    %v4044 = vadd.f32 %v3995, %v4043
    %4045 = vmatmul.bf16.gmra.mxu0 %v3146
    %v4046 = vpop.f32.mrf.mxu0
    %v4047 = vadd.f32 %v3998, %v4046
    %v4048 = vpop.f32.mrf.mxu0
    %v4049 = vadd.f32 %v4000, %v4048
    %4050 = vmatmul.bf16.gmra.mxu0 %v3148
    %v4051 = vpop.f32.mrf.mxu0
    %v4052 = vadd.f32 %v4003, %v4051
    %v4053 = vpop.f32.mrf.mxu0
    %v4054 = vadd.f32 %v4005, %v4053
    %4055 = vmatmul.bf16.gmra.mxu0 %v3150
    %v4056 = vpop.f32.mrf.mxu0
    %v4057 = vadd.f32 %v4008, %v4056
    %v4058 = vpop.f32.mrf.mxu0
    %v4059 = vadd.f32 %v4010, %v4058
    %4060 = vmatmul.bf16.gmra.mxu0 %v3152
    %v4061 = vpop.f32.mrf.mxu0
    %v4062 = vadd.f32 %v4013, %v4061
    %v4063 = vpop.f32.mrf.mxu0
    %v4064 = vadd.f32 %v4015, %v4063
    %4065 = vmatmul.bf16.gmra.mxu0 %v3154
    %v4066 = vpop.f32.mrf.mxu0
    %v4067 = vadd.f32 %v4018, %v4066
    %v4068 = vpop.f32.mrf.mxu0
    %v4069 = vadd.f32 %v4020, %v4068
    %4070 = vdwg.mxu0
    %4071 = vmatpush.bf16.msra.mxu0 %v3558
    %4072 = vmatpush.bf16.msra.mxu0 %v3553
    %4073 = vmatpush.bf16.msra.mxu0 %v3548
    %4074 = vmatpush.bf16.msra.mxu0 %v3543
    %4075 = vmatpush.bf16.msra.mxu0 %v3538
    %4076 = vmatpush.bf16.msra.mxu0 %v3533
    %4077 = vmatpush.bf16.msra.mxu0 %v3528
    %4078 = vmatpush.bf16.msra.mxu0 %v3523
    %4079 = vmatmul.bf16.gmra.mxu0 %v3139
    %v4080 = vpop.f32.mrf.mxu0
    %v4081 = vadd.f32 %v3257, %v4080
    %v4082 = vpop.f32.mrf.mxu0
    %v4083 = vadd.f32 %v3257, %v4082
    %4084 = vmatmul.bf16.gmra.mxu0 %v3141
    %v4085 = vpop.f32.mrf.mxu0
    %v4086 = vadd.f32 %v3257, %v4085
    %v4087 = vpop.f32.mrf.mxu0
    %v4088 = vadd.f32 %v3257, %v4087
    %4089 = vmatmul.bf16.gmra.mxu0 %v3143
    %v4090 = vpop.f32.mrf.mxu0
    %v4091 = vadd.f32 %v3257, %v4090
    %v4092 = vpop.f32.mrf.mxu0
    %v4093 = vadd.f32 %v3257, %v4092
    %4094 = vmatmul.bf16.gmra.mxu0 %v3145
    %v4095 = vpop.f32.mrf.mxu0
    %v4096 = vadd.f32 %v3257, %v4095
    %v4097 = vpop.f32.mrf.mxu0
    %v4098 = vadd.f32 %v3257, %v4097
    %4099 = vmatmul.bf16.gmra.mxu0 %v3147
    %v4100 = vpop.f32.mrf.mxu0
    %v4101 = vadd.f32 %v3257, %v4100
    %v4102 = vpop.f32.mrf.mxu0
    %v4103 = vadd.f32 %v3257, %v4102
    %4104 = vmatmul.bf16.gmra.mxu0 %v3149
    %v4105 = vpop.f32.mrf.mxu0
    %v4106 = vadd.f32 %v3257, %v4105
    %v4107 = vpop.f32.mrf.mxu0
    %v4108 = vadd.f32 %v3257, %v4107
    %4109 = vmatmul.bf16.gmra.mxu0 %v3151
    %v4110 = vpop.f32.mrf.mxu0
    %v4111 = vadd.f32 %v3257, %v4110
    %v4112 = vpop.f32.mrf.mxu0
    %v4113 = vadd.f32 %v3257, %v4112
    %4114 = vmatmul.bf16.gmra.mxu0 %v3153
    %v4115 = vpop.f32.mrf.mxu0
    %v4116 = vadd.f32 %v3257, %v4115
    %v4117 = vpop.f32.mrf.mxu0
    %v4118 = vadd.f32 %v3257, %v4117
    %4119 = vdwg.mxu0
    %4120 = vmatpush.bf16.msra.mxu0 %v3598
    %4121 = vmatpush.bf16.msra.mxu0 %v3593
    %4122 = vmatpush.bf16.msra.mxu0 %v3588
    %4123 = vmatpush.bf16.msra.mxu0 %v3583
    %4124 = vmatpush.bf16.msra.mxu0 %v3578
    %4125 = vmatpush.bf16.msra.mxu0 %v3573
    %4126 = vmatpush.bf16.msra.mxu0 %v3568
    %4127 = vmatpush.bf16.msra.mxu0 %v3563
    %4128 = vmatmul.bf16.gmra.mxu0 %v3140
    %v4129 = vpop.f32.mrf.mxu0
    %v4130 = vadd.f32 %v4081, %v4129
    %v4131 = vpop.f32.mrf.mxu0
    %v4132 = vadd.f32 %v4083, %v4131
    %4133 = vmatmul.bf16.gmra.mxu0 %v3142
    %v4134 = vpop.f32.mrf.mxu0
    %v4135 = vadd.f32 %v4086, %v4134
    %v4136 = vpop.f32.mrf.mxu0
    %v4137 = vadd.f32 %v4088, %v4136
    %4138 = vmatmul.bf16.gmra.mxu0 %v3144
    %v4139 = vpop.f32.mrf.mxu0
    %v4140 = vadd.f32 %v4091, %v4139
    %v4141 = vpop.f32.mrf.mxu0
    %v4142 = vadd.f32 %v4093, %v4141
    %4143 = vmatmul.bf16.gmra.mxu0 %v3146
    %v4144 = vpop.f32.mrf.mxu0
    %v4145 = vadd.f32 %v4096, %v4144
    %v4146 = vpop.f32.mrf.mxu0
    %v4147 = vadd.f32 %v4098, %v4146
    %4148 = vmatmul.bf16.gmra.mxu0 %v3148
    %v4149 = vpop.f32.mrf.mxu0
    %v4150 = vadd.f32 %v4101, %v4149
    %v4151 = vpop.f32.mrf.mxu0
    %v4152 = vadd.f32 %v4103, %v4151
    %4153 = vmatmul.bf16.gmra.mxu0 %v3150
    %v4154 = vpop.f32.mrf.mxu0
    %v4155 = vadd.f32 %v4106, %v4154
    %v4156 = vpop.f32.mrf.mxu0
    %v4157 = vadd.f32 %v4108, %v4156
    %4158 = vmatmul.bf16.gmra.mxu0 %v3152
    %v4159 = vpop.f32.mrf.mxu0
    %v4160 = vadd.f32 %v4111, %v4159
    %v4161 = vpop.f32.mrf.mxu0
    %v4162 = vadd.f32 %v4113, %v4161
    %4163 = vmatmul.bf16.gmra.mxu0 %v3154
    %v4164 = vpop.f32.mrf.mxu0
    %v4165 = vadd.f32 %v4116, %v4164
    %v4166 = vpop.f32.mrf.mxu0
    %v4167 = vadd.f32 %v4118, %v4166
    %4168 = vdwg.mxu0
    %v4169 = vtanh.pop %v3738
    %v4170 = vtanh.pop %v3836
    %v4171 = vtanh.pop %v3934
    %v4172 = vtanh.pop %v4032
    %v4173 = vtanh.pop %v4130
    %v4174 = vtanh.pop %v3740
    %v4175 = vtanh.pop %v3838
    %v4176 = vtanh.pop %v3936
    %v4177 = vtanh.pop %v4034
    %v4178 = vtanh.pop %v4132
    %v4179 = vtanh.pop %v3743
    %v4180 = vtanh.pop %v3841
    %v4181 = vtanh.pop %v3939
    %v4182 = vtanh.pop %v4037
    %v4183 = vtanh.pop %v4135
    %v4184 = vtanh.pop %v3745
    %v4185 = vtanh.pop %v3843
    %v4186 = vtanh.pop %v3941
    %v4187 = vtanh.pop %v4039
    %v4188 = vtanh.pop %v4137
    %v4189 = vtanh.pop %v3748
    %v4190 = vtanh.pop %v3846
    %v4191 = vtanh.pop %v3944
    %v4192 = vtanh.pop %v4042
    %v4193 = vtanh.pop %v4140
    %v4194 = vtanh.pop %v3750
    %v4195 = vtanh.pop %v3848
    %v4196 = vtanh.pop %v3946
    %v4197 = vtanh.pop %v4044
    %v4198 = vtanh.pop %v4142
    %v4199 = vtanh.pop %v3753
    %v4200 = vtanh.pop %v3851
    %v4201 = vtanh.pop %v3949
    %v4202 = vtanh.pop %v4047
    %v4203 = vtanh.pop %v4145
    %v4204 = vtanh.pop %v3755
    %v4205 = vtanh.pop %v3853
    %v4206 = vtanh.pop %v3951
    %v4207 = vtanh.pop %v4049
    %v4208 = vtanh.pop %v4147
    %v4209 = vtanh.pop %v3758
    %v4210 = vtanh.pop %v3856
    %v4211 = vtanh.pop %v3954
    %v4212 = vtanh.pop %v4052
    %v4213 = vtanh.pop %v4150
    %v4214 = vtanh.pop %v3760
    %v4215 = vtanh.pop %v3858
    %v4216 = vtanh.pop %v3956
    %v4217 = vtanh.pop %v4054
    %v4218 = vtanh.pop %v4152
    %v4219 = vtanh.pop %v3763
    %v4220 = vtanh.pop %v3861
    %v4221 = vtanh.pop %v3959
    %v4222 = vtanh.pop %v4057
    %v4223 = vtanh.pop %v4155
    %v4224 = vtanh.pop %v3765
    %v4225 = vtanh.pop %v3863
    %v4226 = vtanh.pop %v3961
    %v4227 = vtanh.pop %v4059
    %v4228 = vtanh.pop %v4157
    %v4229 = vtanh.pop %v3768
    %v4230 = vtanh.pop %v3866
    %v4231 = vtanh.pop %v3964
    %v4232 = vtanh.pop %v4062
    %v4233 = vtanh.pop %v4160
    %v4234 = vtanh.pop %v3770
    %v4235 = vtanh.pop %v3868
    %v4236 = vtanh.pop %v3966
    %v4237 = vtanh.pop %v4064
    %v4238 = vtanh.pop %v4162
    %v4239 = vtanh.pop %v3773
    %v4240 = vtanh.pop %v3871
    %v4241 = vtanh.pop %v3969
    %v4242 = vtanh.pop %v4067
    %v4243 = vtanh.pop %v4165
    %v4244 = vtanh.pop %v3775
    %v4245 = vtanh.pop %v3873
    %v4246 = vtanh.pop %v3971
    %v4247 = vtanh.pop %v4069
    %v4248 = vtanh.pop %v4167
    %v4249 = vpack.c.bf16 %v4174, %v4169
    %v4250 = vpack.c.bf16 %v4175, %v4170
    %v4251 = vpack.c.bf16 %v4176, %v4171
    %v4252 = vpack.c.bf16 %v4177, %v4172
    %v4253 = vpack.c.bf16 %v4178, %v4173
    %v4254 = vpack.c.bf16 %v4184, %v4179
    %v4255 = vpack.c.bf16 %v4185, %v4180
    %v4256 = vpack.c.bf16 %v4186, %v4181
    %v4257 = vpack.c.bf16 %v4187, %v4182
    %v4258 = vpack.c.bf16 %v4188, %v4183
    %v4259 = vpack.c.bf16 %v4194, %v4189
    %v4260 = vpack.c.bf16 %v4195, %v4190
    %v4261 = vpack.c.bf16 %v4196, %v4191
    %v4262 = vpack.c.bf16 %v4197, %v4192
    %v4263 = vpack.c.bf16 %v4198, %v4193
    %v4264 = vpack.c.bf16 %v4204, %v4199
    %v4265 = vpack.c.bf16 %v4205, %v4200
    %v4266 = vpack.c.bf16 %v4206, %v4201
    %v4267 = vpack.c.bf16 %v4207, %v4202
    %v4268 = vpack.c.bf16 %v4208, %v4203
    %v4269 = vpack.c.bf16 %v4214, %v4209
    %v4270 = vpack.c.bf16 %v4215, %v4210
    %v4271 = vpack.c.bf16 %v4216, %v4211
    %v4272 = vpack.c.bf16 %v4217, %v4212
    %v4273 = vpack.c.bf16 %v4218, %v4213
    %v4274 = vpack.c.bf16 %v4224, %v4219
    %v4275 = vpack.c.bf16 %v4225, %v4220
    %v4276 = vpack.c.bf16 %v4226, %v4221
    %v4277 = vpack.c.bf16 %v4227, %v4222
    %v4278 = vpack.c.bf16 %v4228, %v4223
    %v4279 = vpack.c.bf16 %v4234, %v4229
    %v4280 = vpack.c.bf16 %v4235, %v4230
    %v4281 = vpack.c.bf16 %v4236, %v4231
    %v4282 = vpack.c.bf16 %v4237, %v4232
    %v4283 = vpack.c.bf16 %v4238, %v4233
    %v4284 = vpack.c.bf16 %v4244, %v4239
    %v4285 = vpack.c.bf16 %v4245, %v4240
    %v4286 = vpack.c.bf16 %v4246, %v4241
    %v4287 = vpack.c.bf16 %v4247, %v4242
    %v4288 = vpack.c.bf16 %v4248, %v4243
    %v4289 = vld [vmem:[#allocation17] sm:$0xff]
    %v4290 = vld [vmem:[#allocation17 + $0x8] sm:$0xff]
    %v4291 = vld [vmem:[#allocation17 + $0x10] sm:$0xff]
    %v4292 = vld [vmem:[#allocation17 + $0x18] sm:$0xff]
    %v4293 = vld [vmem:[#allocation17 + $0x20] sm:$0xff]
    %v4294 = vld [vmem:[#allocation17 + $0x28] sm:$0xff]
    %v4295 = vld [vmem:[#allocation17 + $0x30] sm:$0xff]
    %v4296 = vld [vmem:[#allocation17 + $0x38] sm:$0xff]
    %v4297 = vld [vmem:[#allocation17 + $0x40] sm:$0xff]
    %v4298 = vld [vmem:[#allocation17 + $0x48] sm:$0xff]
    %v4299 = vld [vmem:[#allocation17 + $0x50] sm:$0xff]
    %v4300 = vld [vmem:[#allocation17 + $0x58] sm:$0xff]
    %v4301 = vld [vmem:[#allocation17 + $0x60] sm:$0xff]
    %v4302 = vld [vmem:[#allocation17 + $0x68] sm:$0xff]
    %v4303 = vld [vmem:[#allocation17 + $0x70] sm:$0xff]
    %v4304 = vld [vmem:[#allocation17 + $0x78] sm:$0xff]
    %v4305 = vld [vmem:[#allocation17 + $0x80] sm:$0xff]
    %v4306 = vld [vmem:[#allocation17 + $0x88] sm:$0xff]
    %v4307 = vld [vmem:[#allocation17 + $0x90] sm:$0xff]
    %v4308 = vld [vmem:[#allocation17 + $0x98] sm:$0xff]
    %v4309 = vld [vmem:[#allocation17 + $0xa0] sm:$0xff]
    %v4310 = vld [vmem:[#allocation17 + $0xa8] sm:$0xff]
    %v4311 = vld [vmem:[#allocation17 + $0xb0] sm:$0xff]
    %v4312 = vld [vmem:[#allocation17 + $0xb8] sm:$0xff]
    %v4313 = vld [vmem:[#allocation17 + $0xc0] sm:$0xff]
    %v4314 = vld [vmem:[#allocation17 + $0xc8] sm:$0xff]
    %v4315 = vld [vmem:[#allocation17 + $0xd0] sm:$0xff]
    %v4316 = vld [vmem:[#allocation17 + $0xd8] sm:$0xff]
    %v4317 = vld [vmem:[#allocation17 + $0xe0] sm:$0xff]
    %v4318 = vld [vmem:[#allocation17 + $0xe8] sm:$0xff]
    %v4319 = vld [vmem:[#allocation17 + $0xf0] sm:$0xff]
    %v4320 = vld [vmem:[#allocation17 + $0xf8] sm:$0xff]
    %v4321 = vld [vmem:[#allocation17 + $0x100] sm:$0xff]
    %v4322 = vld [vmem:[#allocation17 + $0x108] sm:$0xff]
    %v4323 = vld [vmem:[#allocation17 + $0x110] sm:$0xff]
    %v4324 = vld [vmem:[#allocation17 + $0x118] sm:$0xff]
    %v4325 = vld [vmem:[#allocation17 + $0x120] sm:$0xff]
    %v4326 = vld [vmem:[#allocation17 + $0x128] sm:$0xff]
    %v4327 = vld [vmem:[#allocation17 + $0x130] sm:$0xff]
    %v4328 = vld [vmem:[#allocation17 + $0x138] sm:$0xff]
    %v4329 = vld [vmem:[#allocation17 + $0x140] sm:$0xff]
    %v4330 = vld [vmem:[#allocation17 + $0x148] sm:$0xff]
    %v4331 = vld [vmem:[#allocation17 + $0x150] sm:$0xff]
    %v4332 = vld [vmem:[#allocation17 + $0x158] sm:$0xff]
    %v4333 = vld [vmem:[#allocation17 + $0x160] sm:$0xff]
    %v4334 = vld [vmem:[#allocation17 + $0x168] sm:$0xff]
    %v4335 = vld [vmem:[#allocation17 + $0x170] sm:$0xff]
    %v4336 = vld [vmem:[#allocation17 + $0x178] sm:$0xff]
    %v4337 = vld [vmem:[#allocation17 + $0x180] sm:$0xff]
    %v4338 = vld [vmem:[#allocation17 + $0x188] sm:$0xff]
    %v4339 = vld [vmem:[#allocation17 + $0x190] sm:$0xff]
    %v4340 = vld [vmem:[#allocation17 + $0x198] sm:$0xff]
    %v4341 = vld [vmem:[#allocation17 + $0x1a0] sm:$0xff]
    %v4342 = vld [vmem:[#allocation17 + $0x1a8] sm:$0xff]
    %v4343 = vld [vmem:[#allocation17 + $0x1b0] sm:$0xff]
    %v4344 = vld [vmem:[#allocation17 + $0x1b8] sm:$0xff]
    %v4345 = vld [vmem:[#allocation17 + $0x1c0] sm:$0xff]
    %v4346 = vld [vmem:[#allocation17 + $0x1c8] sm:$0xff]
    %v4347 = vld [vmem:[#allocation17 + $0x1d0] sm:$0xff]
    %v4348 = vld [vmem:[#allocation17 + $0x1d8] sm:$0xff]
    %v4349 = vld [vmem:[#allocation17 + $0x1e0] sm:$0xff]
    %v4350 = vld [vmem:[#allocation17 + $0x1e8] sm:$0xff]
    %v4351 = vld [vmem:[#allocation17 + $0x1f0] sm:$0xff]
    %v4352 = vld [vmem:[#allocation17 + $0x1f8] sm:$0xff]
    %v4353 = vld [vmem:[#allocation17 + $0x200] sm:$0xff]
    %v4354 = vld [vmem:[#allocation17 + $0x208] sm:$0xff]
    %v4355 = vld [vmem:[#allocation17 + $0x210] sm:$0xff]
    %v4356 = vld [vmem:[#allocation17 + $0x218] sm:$0xff]
    %v4357 = vld [vmem:[#allocation17 + $0x220] sm:$0xff]
    %v4358 = vld [vmem:[#allocation17 + $0x228] sm:$0xff]
    %v4359 = vld [vmem:[#allocation17 + $0x230] sm:$0xff]
    %v4360 = vld [vmem:[#allocation17 + $0x238] sm:$0xff]
    %v4361 = vld [vmem:[#allocation17 + $0x240] sm:$0xff]
    %v4362 = vld [vmem:[#allocation17 + $0x248] sm:$0xff]
    %v4363 = vld [vmem:[#allocation17 + $0x250] sm:$0xff]
    %v4364 = vld [vmem:[#allocation17 + $0x258] sm:$0xff]
    %v4365 = vld [vmem:[#allocation17 + $0x260] sm:$0xff]
    %v4366 = vld [vmem:[#allocation17 + $0x268] sm:$0xff]
    %v4367 = vld [vmem:[#allocation17 + $0x270] sm:$0xff]
    %v4368 = vld [vmem:[#allocation17 + $0x278] sm:$0xff]
    %v4369 = vld [vmem:[%s13] sm:$0x3]
    %v4371 = vperm.slane %v4369, 0
    %v4372 = vperm.slane %v4369, 1
    %v4455 = vunpack.c.l.b16 %v4289
    %v4456 = vunpack.c.h.b16 %v4289
    %v4457 = vunpack.c.l.b16 %v4290
    %v4458 = vunpack.c.h.b16 %v4290
    %v4459 = vunpack.c.l.b16 %v4291
    %v4460 = vunpack.c.h.b16 %v4291
    %v4461 = vunpack.c.l.b16 %v4292
    %v4462 = vunpack.c.h.b16 %v4292
    %v4463 = vunpack.c.l.b16 %v4293
    %v4464 = vunpack.c.h.b16 %v4293
    %v4465 = vunpack.c.l.b16 %v4294
    %v4466 = vunpack.c.h.b16 %v4294
    %v4467 = vunpack.c.l.b16 %v4295
    %v4468 = vunpack.c.h.b16 %v4295
    %v4469 = vunpack.c.l.b16 %v4296
    %v4470 = vunpack.c.h.b16 %v4296
    %v4471 = vunpack.c.l.b16 %v4297
    %v4472 = vunpack.c.h.b16 %v4297
    %v4473 = vunpack.c.l.b16 %v4298
    %v4474 = vunpack.c.h.b16 %v4298
    %v4475 = vunpack.c.l.b16 %v4299
    %v4476 = vunpack.c.h.b16 %v4299
    %v4477 = vunpack.c.l.b16 %v4300
    %v4478 = vunpack.c.h.b16 %v4300
    %v4479 = vunpack.c.l.b16 %v4301
    %v4480 = vunpack.c.h.b16 %v4301
    %v4481 = vunpack.c.l.b16 %v4302
    %v4482 = vunpack.c.h.b16 %v4302
    %v4483 = vunpack.c.l.b16 %v4303
    %v4484 = vunpack.c.h.b16 %v4303
    %v4485 = vunpack.c.l.b16 %v4304
    %v4486 = vunpack.c.h.b16 %v4304
    %v4487 = vunpack.c.l.b16 %v4305
    %v4488 = vunpack.c.h.b16 %v4305
    %v4489 = vunpack.c.l.b16 %v4306
    %v4490 = vunpack.c.h.b16 %v4306
    %v4491 = vunpack.c.l.b16 %v4307
    %v4492 = vunpack.c.h.b16 %v4307
    %v4493 = vunpack.c.l.b16 %v4308
    %v4494 = vunpack.c.h.b16 %v4308
    %v4495 = vunpack.c.l.b16 %v4309
    %v4496 = vunpack.c.h.b16 %v4309
    %v4497 = vunpack.c.l.b16 %v4310
    %v4498 = vunpack.c.h.b16 %v4310
    %v4499 = vunpack.c.l.b16 %v4311
    %v4500 = vunpack.c.h.b16 %v4311
    %v4501 = vunpack.c.l.b16 %v4312
    %v4502 = vunpack.c.h.b16 %v4312
    %v4503 = vunpack.c.l.b16 %v4313
    %v4504 = vunpack.c.h.b16 %v4313
    %v4505 = vunpack.c.l.b16 %v4314
    %v4506 = vunpack.c.h.b16 %v4314
    %v4507 = vunpack.c.l.b16 %v4315
    %v4508 = vunpack.c.h.b16 %v4315
    %v4509 = vunpack.c.l.b16 %v4316
    %v4510 = vunpack.c.h.b16 %v4316
    %v4511 = vunpack.c.l.b16 %v4317
    %v4512 = vunpack.c.h.b16 %v4317
    %v4513 = vunpack.c.l.b16 %v4318
    %v4514 = vunpack.c.h.b16 %v4318
    %v4515 = vunpack.c.l.b16 %v4319
    %v4516 = vunpack.c.h.b16 %v4319
    %v4517 = vunpack.c.l.b16 %v4320
    %v4518 = vunpack.c.h.b16 %v4320
    %v4519 = vunpack.c.l.b16 %v4321
    %v4520 = vunpack.c.h.b16 %v4321
    %v4521 = vunpack.c.l.b16 %v4322
    %v4522 = vunpack.c.h.b16 %v4322
    %v4523 = vunpack.c.l.b16 %v4323
    %v4524 = vunpack.c.h.b16 %v4323
    %v4525 = vunpack.c.l.b16 %v4324
    %v4526 = vunpack.c.h.b16 %v4324
    %v4527 = vunpack.c.l.b16 %v4325
    %v4528 = vunpack.c.h.b16 %v4325
    %v4529 = vunpack.c.l.b16 %v4326
    %v4530 = vunpack.c.h.b16 %v4326
    %v4531 = vunpack.c.l.b16 %v4327
    %v4532 = vunpack.c.h.b16 %v4327
    %v4533 = vunpack.c.l.b16 %v4328
    %v4534 = vunpack.c.h.b16 %v4328
    %v4535 = vunpack.c.l.b16 %v4329
    %v4536 = vunpack.c.h.b16 %v4329
    %v4537 = vunpack.c.l.b16 %v4330
    %v4538 = vunpack.c.h.b16 %v4330
    %v4539 = vunpack.c.l.b16 %v4331
    %v4540 = vunpack.c.h.b16 %v4331
    %v4541 = vunpack.c.l.b16 %v4332
    %v4542 = vunpack.c.h.b16 %v4332
    %v4543 = vunpack.c.l.b16 %v4333
    %v4544 = vunpack.c.h.b16 %v4333
    %v4545 = vunpack.c.l.b16 %v4334
    %v4546 = vunpack.c.h.b16 %v4334
    %v4547 = vunpack.c.l.b16 %v4335
    %v4548 = vunpack.c.h.b16 %v4335
    %v4549 = vunpack.c.l.b16 %v4336
    %v4550 = vunpack.c.h.b16 %v4336
    %v4551 = vunpack.c.l.b16 %v4337
    %v4552 = vunpack.c.h.b16 %v4337
    %v4553 = vunpack.c.l.b16 %v4338
    %v4554 = vunpack.c.h.b16 %v4338
    %v4555 = vunpack.c.l.b16 %v4339
    %v4556 = vunpack.c.h.b16 %v4339
    %v4557 = vunpack.c.l.b16 %v4340
    %v4558 = vunpack.c.h.b16 %v4340
    %v4559 = vunpack.c.l.b16 %v4341
    %v4560 = vunpack.c.h.b16 %v4341
    %v4561 = vunpack.c.l.b16 %v4342
    %v4562 = vunpack.c.h.b16 %v4342
    %v4563 = vunpack.c.l.b16 %v4343
    %v4564 = vunpack.c.h.b16 %v4343
    %v4565 = vunpack.c.l.b16 %v4344
    %v4566 = vunpack.c.h.b16 %v4344
    %v4567 = vunpack.c.l.b16 %v4345
    %v4568 = vunpack.c.h.b16 %v4345
    %v4569 = vunpack.c.l.b16 %v4346
    %v4570 = vunpack.c.h.b16 %v4346
    %v4571 = vunpack.c.l.b16 %v4347
    %v4572 = vunpack.c.h.b16 %v4347
    %v4573 = vunpack.c.l.b16 %v4348
    %v4574 = vunpack.c.h.b16 %v4348
    %v4575 = vunpack.c.l.b16 %v4349
    %v4576 = vunpack.c.h.b16 %v4349
    %v4577 = vunpack.c.l.b16 %v4350
    %v4578 = vunpack.c.h.b16 %v4350
    %v4579 = vunpack.c.l.b16 %v4351
    %v4580 = vunpack.c.h.b16 %v4351
    %v4581 = vunpack.c.l.b16 %v4352
    %v4582 = vunpack.c.h.b16 %v4352
    %v4583 = vunpack.c.l.b16 %v4353
    %v4584 = vunpack.c.h.b16 %v4353
    %v4585 = vunpack.c.l.b16 %v4354
    %v4586 = vunpack.c.h.b16 %v4354
    %v4587 = vunpack.c.l.b16 %v4355
    %v4588 = vunpack.c.h.b16 %v4355
    %v4589 = vunpack.c.l.b16 %v4356
    %v4590 = vunpack.c.h.b16 %v4356
    %v4591 = vunpack.c.l.b16 %v4357
    %v4592 = vunpack.c.h.b16 %v4357
    %v4593 = vunpack.c.l.b16 %v4358
    %v4594 = vunpack.c.h.b16 %v4358
    %v4595 = vunpack.c.l.b16 %v4359
    %v4596 = vunpack.c.h.b16 %v4359
    %v4597 = vunpack.c.l.b16 %v4360
    %v4598 = vunpack.c.h.b16 %v4360
    %v4599 = vunpack.c.l.b16 %v4361
    %v4600 = vunpack.c.h.b16 %v4361
    %v4601 = vunpack.c.l.b16 %v4362
    %v4602 = vunpack.c.h.b16 %v4362
    %v4603 = vunpack.c.l.b16 %v4363
    %v4604 = vunpack.c.h.b16 %v4363
    %v4605 = vunpack.c.l.b16 %v4364
    %v4606 = vunpack.c.h.b16 %v4364
    %v4607 = vunpack.c.l.b16 %v4365
    %v4608 = vunpack.c.h.b16 %v4365
    %v4609 = vunpack.c.l.b16 %v4366
    %v4610 = vunpack.c.h.b16 %v4366
    %v4611 = vunpack.c.l.b16 %v4367
    %v4612 = vunpack.c.h.b16 %v4367
    %v4613 = vunpack.c.l.b16 %v4368
    %v4614 = vunpack.c.h.b16 %v4368
    %v4615 = vpack.c.b16 %v4457, %v4455
    %v4616 = vpack.c.b16 %v4458, %v4456
    %v4617 = vpack.c.b16 %v4461, %v4459
    %v4618 = vpack.c.b16 %v4462, %v4460
    %v4619 = vpack.c.b16 %v4465, %v4463
    %v4620 = vpack.c.b16 %v4466, %v4464
    %v4621 = vpack.c.b16 %v4469, %v4467
    %v4622 = vpack.c.b16 %v4470, %v4468
    %v4623 = vpack.c.b16 %v4473, %v4471
    %v4624 = vpack.c.b16 %v4474, %v4472
    %v4625 = vpack.c.b16 %v4477, %v4475
    %v4626 = vpack.c.b16 %v4478, %v4476
    %v4627 = vpack.c.b16 %v4481, %v4479
    %v4628 = vpack.c.b16 %v4482, %v4480
    %v4629 = vpack.c.b16 %v4485, %v4483
    %v4630 = vpack.c.b16 %v4486, %v4484
    %v4631 = vpack.c.b16 %v4489, %v4487
    %v4632 = vpack.c.b16 %v4490, %v4488
    %v4633 = vpack.c.b16 %v4493, %v4491
    %v4634 = vpack.c.b16 %v4494, %v4492
    %v4635 = vpack.c.b16 %v4497, %v4495
    %v4636 = vpack.c.b16 %v4498, %v4496
    %v4637 = vpack.c.b16 %v4501, %v4499
    %v4638 = vpack.c.b16 %v4502, %v4500
    %v4639 = vpack.c.b16 %v4505, %v4503
    %v4640 = vpack.c.b16 %v4506, %v4504
    %v4641 = vpack.c.b16 %v4509, %v4507
    %v4642 = vpack.c.b16 %v4510, %v4508
    %v4643 = vpack.c.b16 %v4513, %v4511
    %v4644 = vpack.c.b16 %v4514, %v4512
    %v4645 = vpack.c.b16 %v4517, %v4515
    %v4646 = vpack.c.b16 %v4518, %v4516
    %v4647 = vpack.c.b16 %v4521, %v4519
    %v4648 = vpack.c.b16 %v4522, %v4520
    %v4649 = vpack.c.b16 %v4525, %v4523
    %v4650 = vpack.c.b16 %v4526, %v4524
    %v4651 = vpack.c.b16 %v4529, %v4527
    %v4652 = vpack.c.b16 %v4530, %v4528
    %v4653 = vpack.c.b16 %v4533, %v4531
    %v4654 = vpack.c.b16 %v4534, %v4532
    %v4655 = vpack.c.b16 %v4537, %v4535
    %v4656 = vpack.c.b16 %v4538, %v4536
    %v4657 = vpack.c.b16 %v4541, %v4539
    %v4658 = vpack.c.b16 %v4542, %v4540
    %v4659 = vpack.c.b16 %v4545, %v4543
    %v4660 = vpack.c.b16 %v4546, %v4544
    %v4661 = vpack.c.b16 %v4549, %v4547
    %v4662 = vpack.c.b16 %v4550, %v4548
    %v4663 = vpack.c.b16 %v4553, %v4551
    %v4664 = vpack.c.b16 %v4554, %v4552
    %v4665 = vpack.c.b16 %v4557, %v4555
    %v4666 = vpack.c.b16 %v4558, %v4556
    %v4667 = vpack.c.b16 %v4561, %v4559
    %v4668 = vpack.c.b16 %v4562, %v4560
    %v4669 = vpack.c.b16 %v4565, %v4563
    %v4670 = vpack.c.b16 %v4566, %v4564
    %v4671 = vpack.c.b16 %v4569, %v4567
    %v4672 = vpack.c.b16 %v4570, %v4568
    %v4673 = vpack.c.b16 %v4573, %v4571
    %v4674 = vpack.c.b16 %v4574, %v4572
    %v4675 = vpack.c.b16 %v4577, %v4575
    %v4676 = vpack.c.b16 %v4578, %v4576
    %v4677 = vpack.c.b16 %v4581, %v4579
    %v4678 = vpack.c.b16 %v4582, %v4580
    %v4679 = vpack.c.b16 %v4585, %v4583
    %v4680 = vpack.c.b16 %v4586, %v4584
    %v4681 = vpack.c.b16 %v4589, %v4587
    %v4682 = vpack.c.b16 %v4590, %v4588
    %v4683 = vpack.c.b16 %v4593, %v4591
    %v4684 = vpack.c.b16 %v4594, %v4592
    %v4685 = vpack.c.b16 %v4597, %v4595
    %v4686 = vpack.c.b16 %v4598, %v4596
    %v4687 = vpack.c.b16 %v4601, %v4599
    %v4688 = vpack.c.b16 %v4602, %v4600
    %v4689 = vpack.c.b16 %v4605, %v4603
    %v4690 = vpack.c.b16 %v4606, %v4604
    %v4691 = vpack.c.b16 %v4609, %v4607
    %v4692 = vpack.c.b16 %v4610, %v4608
    %v4693 = vpack.c.b16 %v4613, %v4611
    %v4694 = vpack.c.b16 %v4614, %v4612
    %4775 = vmatpush.bf16.msra.mxu0 %v4629
    %4776 = vmatpush.bf16.msra.mxu0 %v4627
    %4777 = vmatpush.bf16.msra.mxu0 %v4625
    %4778 = vmatpush.bf16.msra.mxu0 %v4623
    %4779 = vmatpush.bf16.msra.mxu0 %v4621
    %4780 = vmatpush.bf16.msra.mxu0 %v4619
    %4781 = vmatpush.bf16.msra.mxu0 %v4617
    %4782 = vmatpush.bf16.msra.mxu0 %v4615
    %4783 = vmatmul.bf16.gmra.mxu0 %v4249
    %v4784 = vpop.f32.mrf.mxu0
    %v4785 = vadd.f32 %v4371, %v4784
    %v4786 = vpop.f32.mrf.mxu0
    %v4787 = vadd.f32 %v4371, %v4786
    %4788 = vmatmul.bf16.gmra.mxu0 %v4254
    %v4789 = vpop.f32.mrf.mxu0
    %v4790 = vadd.f32 %v4371, %v4789
    %v4791 = vpop.f32.mrf.mxu0
    %v4792 = vadd.f32 %v4371, %v4791
    %4793 = vmatmul.bf16.gmra.mxu0 %v4259
    %v4794 = vpop.f32.mrf.mxu0
    %v4795 = vadd.f32 %v4371, %v4794
    %v4796 = vpop.f32.mrf.mxu0
    %v4797 = vadd.f32 %v4371, %v4796
    %4798 = vmatmul.bf16.gmra.mxu0 %v4264
    %v4799 = vpop.f32.mrf.mxu0
    %v4800 = vadd.f32 %v4371, %v4799
    %v4801 = vpop.f32.mrf.mxu0
    %v4802 = vadd.f32 %v4371, %v4801
    %4803 = vmatmul.bf16.gmra.mxu0 %v4269
    %v4804 = vpop.f32.mrf.mxu0
    %v4805 = vadd.f32 %v4371, %v4804
    %v4806 = vpop.f32.mrf.mxu0
    %v4807 = vadd.f32 %v4371, %v4806
    %4808 = vmatmul.bf16.gmra.mxu0 %v4274
    %v4809 = vpop.f32.mrf.mxu0
    %v4810 = vadd.f32 %v4371, %v4809
    %v4811 = vpop.f32.mrf.mxu0
    %v4812 = vadd.f32 %v4371, %v4811
    %4813 = vmatmul.bf16.gmra.mxu0 %v4279
    %v4814 = vpop.f32.mrf.mxu0
    %v4815 = vadd.f32 %v4371, %v4814
    %v4816 = vpop.f32.mrf.mxu0
    %v4817 = vadd.f32 %v4371, %v4816
    %4818 = vmatmul.bf16.gmra.mxu0 %v4284
    %v4819 = vpop.f32.mrf.mxu0
    %v4820 = vadd.f32 %v4371, %v4819
    %v4821 = vpop.f32.mrf.mxu0
    %v4822 = vadd.f32 %v4371, %v4821
    %4823 = vdwg.mxu0
    %4824 = vmatpush.bf16.msra.mxu0 %v4645
    %4825 = vmatpush.bf16.msra.mxu0 %v4643
    %4826 = vmatpush.bf16.msra.mxu0 %v4641
    %4827 = vmatpush.bf16.msra.mxu0 %v4639
    %4828 = vmatpush.bf16.msra.mxu0 %v4637
    %4829 = vmatpush.bf16.msra.mxu0 %v4635
    %4830 = vmatpush.bf16.msra.mxu0 %v4633
    %4831 = vmatpush.bf16.msra.mxu0 %v4631
    %4832 = vmatmul.bf16.gmra.mxu0 %v4250
    %v4833 = vpop.f32.mrf.mxu0
    %v4834 = vadd.f32 %v4785, %v4833
    %v4835 = vpop.f32.mrf.mxu0
    %v4836 = vadd.f32 %v4787, %v4835
    %4837 = vmatmul.bf16.gmra.mxu0 %v4255
    %v4838 = vpop.f32.mrf.mxu0
    %v4839 = vadd.f32 %v4790, %v4838
    %v4840 = vpop.f32.mrf.mxu0
    %v4841 = vadd.f32 %v4792, %v4840
    %4842 = vmatmul.bf16.gmra.mxu0 %v4260
    %v4843 = vpop.f32.mrf.mxu0
    %v4844 = vadd.f32 %v4795, %v4843
    %v4845 = vpop.f32.mrf.mxu0
    %v4846 = vadd.f32 %v4797, %v4845
    %4847 = vmatmul.bf16.gmra.mxu0 %v4265
    %v4848 = vpop.f32.mrf.mxu0
    %v4849 = vadd.f32 %v4800, %v4848
    %v4850 = vpop.f32.mrf.mxu0
    %v4851 = vadd.f32 %v4802, %v4850
    %4852 = vmatmul.bf16.gmra.mxu0 %v4270
    %v4853 = vpop.f32.mrf.mxu0
    %v4854 = vadd.f32 %v4805, %v4853
    %v4855 = vpop.f32.mrf.mxu0
    %v4856 = vadd.f32 %v4807, %v4855
    %4857 = vmatmul.bf16.gmra.mxu0 %v4275
    %v4858 = vpop.f32.mrf.mxu0
    %v4859 = vadd.f32 %v4810, %v4858
    %v4860 = vpop.f32.mrf.mxu0
    %v4861 = vadd.f32 %v4812, %v4860
    %4862 = vmatmul.bf16.gmra.mxu0 %v4280
    %v4863 = vpop.f32.mrf.mxu0
    %v4864 = vadd.f32 %v4815, %v4863
    %v4865 = vpop.f32.mrf.mxu0
    %v4866 = vadd.f32 %v4817, %v4865
    %4867 = vmatmul.bf16.gmra.mxu0 %v4285
    %v4868 = vpop.f32.mrf.mxu0
    %v4869 = vadd.f32 %v4820, %v4868
    %v4870 = vpop.f32.mrf.mxu0
    %v4871 = vadd.f32 %v4822, %v4870
    %4872 = vdwg.mxu0
    %4873 = vmatpush.bf16.msra.mxu0 %v4661
    %4874 = vmatpush.bf16.msra.mxu0 %v4659
    %4875 = vmatpush.bf16.msra.mxu0 %v4657
    %4876 = vmatpush.bf16.msra.mxu0 %v4655
    %4877 = vmatpush.bf16.msra.mxu0 %v4653
    %4878 = vmatpush.bf16.msra.mxu0 %v4651
    %4879 = vmatpush.bf16.msra.mxu0 %v4649
    %4880 = vmatpush.bf16.msra.mxu0 %v4647
    %4881 = vmatmul.bf16.gmra.mxu0 %v4251
    %v4882 = vpop.f32.mrf.mxu0
    %v4883 = vadd.f32 %v4834, %v4882
    %v4884 = vpop.f32.mrf.mxu0
    %v4885 = vadd.f32 %v4836, %v4884
    %4886 = vmatmul.bf16.gmra.mxu0 %v4256
    %v4887 = vpop.f32.mrf.mxu0
    %v4888 = vadd.f32 %v4839, %v4887
    %v4889 = vpop.f32.mrf.mxu0
    %v4890 = vadd.f32 %v4841, %v4889
    %4891 = vmatmul.bf16.gmra.mxu0 %v4261
    %v4892 = vpop.f32.mrf.mxu0
    %v4893 = vadd.f32 %v4844, %v4892
    %v4894 = vpop.f32.mrf.mxu0
    %v4895 = vadd.f32 %v4846, %v4894
    %4896 = vmatmul.bf16.gmra.mxu0 %v4266
    %v4897 = vpop.f32.mrf.mxu0
    %v4898 = vadd.f32 %v4849, %v4897
    %v4899 = vpop.f32.mrf.mxu0
    %v4900 = vadd.f32 %v4851, %v4899
    %4901 = vmatmul.bf16.gmra.mxu0 %v4271
    %v4902 = vpop.f32.mrf.mxu0
    %v4903 = vadd.f32 %v4854, %v4902
    %v4904 = vpop.f32.mrf.mxu0
    %v4905 = vadd.f32 %v4856, %v4904
    %4906 = vmatmul.bf16.gmra.mxu0 %v4276
    %v4907 = vpop.f32.mrf.mxu0
    %v4908 = vadd.f32 %v4859, %v4907
    %v4909 = vpop.f32.mrf.mxu0
    %v4910 = vadd.f32 %v4861, %v4909
    %4911 = vmatmul.bf16.gmra.mxu0 %v4281
    %v4912 = vpop.f32.mrf.mxu0
    %v4913 = vadd.f32 %v4864, %v4912
    %v4914 = vpop.f32.mrf.mxu0
    %v4915 = vadd.f32 %v4866, %v4914
    %4916 = vmatmul.bf16.gmra.mxu0 %v4286
    %v4917 = vpop.f32.mrf.mxu0
    %v4918 = vadd.f32 %v4869, %v4917
    %v4919 = vpop.f32.mrf.mxu0
    %v4920 = vadd.f32 %v4871, %v4919
    %4921 = vdwg.mxu0
    %4922 = vmatpush.bf16.msra.mxu0 %v4677
    %4923 = vmatpush.bf16.msra.mxu0 %v4675
    %4924 = vmatpush.bf16.msra.mxu0 %v4673
    %4925 = vmatpush.bf16.msra.mxu0 %v4671
    %4926 = vmatpush.bf16.msra.mxu0 %v4669
    %4927 = vmatpush.bf16.msra.mxu0 %v4667
    %4928 = vmatpush.bf16.msra.mxu0 %v4665
    %4929 = vmatpush.bf16.msra.mxu0 %v4663
    %4930 = vmatmul.bf16.gmra.mxu0 %v4252
    %v4931 = vpop.f32.mrf.mxu0
    %v4932 = vadd.f32 %v4883, %v4931
    %v4933 = vpop.f32.mrf.mxu0
    %v4934 = vadd.f32 %v4885, %v4933
    %4935 = vmatmul.bf16.gmra.mxu0 %v4257
    %v4936 = vpop.f32.mrf.mxu0
    %v4937 = vadd.f32 %v4888, %v4936
    %v4938 = vpop.f32.mrf.mxu0
    %v4939 = vadd.f32 %v4890, %v4938
    %4940 = vmatmul.bf16.gmra.mxu0 %v4262
    %v4941 = vpop.f32.mrf.mxu0
    %v4942 = vadd.f32 %v4893, %v4941
    %v4943 = vpop.f32.mrf.mxu0
    %v4944 = vadd.f32 %v4895, %v4943
    %4945 = vmatmul.bf16.gmra.mxu0 %v4267
    %v4946 = vpop.f32.mrf.mxu0
    %v4947 = vadd.f32 %v4898, %v4946
    %v4948 = vpop.f32.mrf.mxu0
    %v4949 = vadd.f32 %v4900, %v4948
    %4950 = vmatmul.bf16.gmra.mxu0 %v4272
    %v4951 = vpop.f32.mrf.mxu0
    %v4952 = vadd.f32 %v4903, %v4951
    %v4953 = vpop.f32.mrf.mxu0
    %v4954 = vadd.f32 %v4905, %v4953
    %4955 = vmatmul.bf16.gmra.mxu0 %v4277
    %v4956 = vpop.f32.mrf.mxu0
    %v4957 = vadd.f32 %v4908, %v4956
    %v4958 = vpop.f32.mrf.mxu0
    %v4959 = vadd.f32 %v4910, %v4958
    %4960 = vmatmul.bf16.gmra.mxu0 %v4282
    %v4961 = vpop.f32.mrf.mxu0
    %v4962 = vadd.f32 %v4913, %v4961
    %v4963 = vpop.f32.mrf.mxu0
    %v4964 = vadd.f32 %v4915, %v4963
    %4965 = vmatmul.bf16.gmra.mxu0 %v4287
    %v4966 = vpop.f32.mrf.mxu0
    %v4967 = vadd.f32 %v4918, %v4966
    %v4968 = vpop.f32.mrf.mxu0
    %v4969 = vadd.f32 %v4920, %v4968
    %4970 = vdwg.mxu0
    %4971 = vmatpush.bf16.msra.mxu0 %v4693
    %4972 = vmatpush.bf16.msra.mxu0 %v4691
    %4973 = vmatpush.bf16.msra.mxu0 %v4689
    %4974 = vmatpush.bf16.msra.mxu0 %v4687
    %4975 = vmatpush.bf16.msra.mxu0 %v4685
    %4976 = vmatpush.bf16.msra.mxu0 %v4683
    %4977 = vmatpush.bf16.msra.mxu0 %v4681
    %4978 = vmatpush.bf16.msra.mxu0 %v4679
    %4979 = vmatmul.bf16.gmra.mxu0 %v4253
    %v4980 = vpop.f32.mrf.mxu0
    %v4981 = vadd.f32 %v4932, %v4980
    %v4982 = vpop.f32.mrf.mxu0
    %v4983 = vadd.f32 %v4934, %v4982
    %4984 = vmatmul.bf16.gmra.mxu0 %v4258
    %v4985 = vpop.f32.mrf.mxu0
    %v4986 = vadd.f32 %v4937, %v4985
    %v4987 = vpop.f32.mrf.mxu0
    %v4988 = vadd.f32 %v4939, %v4987
    %4989 = vmatmul.bf16.gmra.mxu0 %v4263
    %v4990 = vpop.f32.mrf.mxu0
    %v4991 = vadd.f32 %v4942, %v4990
    %v4992 = vpop.f32.mrf.mxu0
    %v4993 = vadd.f32 %v4944, %v4992
    %4994 = vmatmul.bf16.gmra.mxu0 %v4268
    %v4995 = vpop.f32.mrf.mxu0
    %v4996 = vadd.f32 %v4947, %v4995
    %v4997 = vpop.f32.mrf.mxu0
    %v4998 = vadd.f32 %v4949, %v4997
    %4999 = vmatmul.bf16.gmra.mxu0 %v4273
    %v5000 = vpop.f32.mrf.mxu0
    %v5001 = vadd.f32 %v4952, %v5000
    %v5002 = vpop.f32.mrf.mxu0
    %v5003 = vadd.f32 %v4954, %v5002
    %5004 = vmatmul.bf16.gmra.mxu0 %v4278
    %v5005 = vpop.f32.mrf.mxu0
    %v5006 = vadd.f32 %v4957, %v5005
    %v5007 = vpop.f32.mrf.mxu0
    %v5008 = vadd.f32 %v4959, %v5007
    %5009 = vmatmul.bf16.gmra.mxu0 %v4283
    %v5010 = vpop.f32.mrf.mxu0
    %v5011 = vadd.f32 %v4962, %v5010
    %v5012 = vpop.f32.mrf.mxu0
    %v5013 = vadd.f32 %v4964, %v5012
    %5014 = vmatmul.bf16.gmra.mxu0 %v4288
    %v5015 = vpop.f32.mrf.mxu0
    %v5016 = vadd.f32 %v4967, %v5015
    %v5017 = vpop.f32.mrf.mxu0
    %v5018 = vadd.f32 %v4969, %v5017
    %5019 = vdwg.mxu0
    %5020 = vmatpush.bf16.msra.mxu0 %v4630
    %5021 = vmatpush.bf16.msra.mxu0 %v4628
    %5022 = vmatpush.bf16.msra.mxu0 %v4626
    %5023 = vmatpush.bf16.msra.mxu0 %v4624
    %5024 = vmatpush.bf16.msra.mxu0 %v4622
    %5025 = vmatpush.bf16.msra.mxu0 %v4620
    %5026 = vmatpush.bf16.msra.mxu0 %v4618
    %5027 = vmatpush.bf16.msra.mxu0 %v4616
    %5028 = vmatmul.bf16.gmra.mxu0 %v4249
    %v5029 = vpop.f32.mrf.mxu0
    %v5030 = vadd.f32 %v4372, %v5029
    %v5031 = vpop.f32.mrf.mxu0
    %v5032 = vadd.f32 %v4372, %v5031
    %5033 = vmatmul.bf16.gmra.mxu0 %v4254
    %v5034 = vpop.f32.mrf.mxu0
    %v5035 = vadd.f32 %v4372, %v5034
    %v5036 = vpop.f32.mrf.mxu0
    %v5037 = vadd.f32 %v4372, %v5036
    %5038 = vmatmul.bf16.gmra.mxu0 %v4259
    %v5039 = vpop.f32.mrf.mxu0
    %v5040 = vadd.f32 %v4372, %v5039
    %v5041 = vpop.f32.mrf.mxu0
    %v5042 = vadd.f32 %v4372, %v5041
    %5043 = vmatmul.bf16.gmra.mxu0 %v4264
    %v5044 = vpop.f32.mrf.mxu0
    %v5045 = vadd.f32 %v4372, %v5044
    %v5046 = vpop.f32.mrf.mxu0
    %v5047 = vadd.f32 %v4372, %v5046
    %5048 = vmatmul.bf16.gmra.mxu0 %v4269
    %v5049 = vpop.f32.mrf.mxu0
    %v5050 = vadd.f32 %v4372, %v5049
    %v5051 = vpop.f32.mrf.mxu0
    %v5052 = vadd.f32 %v4372, %v5051
    %5053 = vmatmul.bf16.gmra.mxu0 %v4274
    %v5054 = vpop.f32.mrf.mxu0
    %v5055 = vadd.f32 %v4372, %v5054
    %v5056 = vpop.f32.mrf.mxu0
    %v5057 = vadd.f32 %v4372, %v5056
    %5058 = vmatmul.bf16.gmra.mxu0 %v4279
    %v5059 = vpop.f32.mrf.mxu0
    %v5060 = vadd.f32 %v4372, %v5059
    %v5061 = vpop.f32.mrf.mxu0
    %v5062 = vadd.f32 %v4372, %v5061
    %5063 = vmatmul.bf16.gmra.mxu0 %v4284
    %v5064 = vpop.f32.mrf.mxu0
    %v5065 = vadd.f32 %v4372, %v5064
    %v5066 = vpop.f32.mrf.mxu0
    %v5067 = vadd.f32 %v4372, %v5066
    %5068 = vdwg.mxu0
    %5069 = vmatpush.bf16.msra.mxu0 %v4646
    %5070 = vmatpush.bf16.msra.mxu0 %v4644
    %5071 = vmatpush.bf16.msra.mxu0 %v4642
    %5072 = vmatpush.bf16.msra.mxu0 %v4640
    %5073 = vmatpush.bf16.msra.mxu0 %v4638
    %5074 = vmatpush.bf16.msra.mxu0 %v4636
    %5075 = vmatpush.bf16.msra.mxu0 %v4634
    %5076 = vmatpush.bf16.msra.mxu0 %v4632
    %5077 = vmatmul.bf16.gmra.mxu0 %v4250
    %v5078 = vpop.f32.mrf.mxu0
    %v5079 = vadd.f32 %v5030, %v5078
    %v5080 = vpop.f32.mrf.mxu0
    %v5081 = vadd.f32 %v5032, %v5080
    %5082 = vmatmul.bf16.gmra.mxu0 %v4255
    %v5083 = vpop.f32.mrf.mxu0
    %v5084 = vadd.f32 %v5035, %v5083
    %v5085 = vpop.f32.mrf.mxu0
    %v5086 = vadd.f32 %v5037, %v5085
    %5087 = vmatmul.bf16.gmra.mxu0 %v4260
    %v5088 = vpop.f32.mrf.mxu0
    %v5089 = vadd.f32 %v5040, %v5088
    %v5090 = vpop.f32.mrf.mxu0
    %v5091 = vadd.f32 %v5042, %v5090
    %5092 = vmatmul.bf16.gmra.mxu0 %v4265
    %v5093 = vpop.f32.mrf.mxu0
    %v5094 = vadd.f32 %v5045, %v5093
    %v5095 = vpop.f32.mrf.mxu0
    %v5096 = vadd.f32 %v5047, %v5095
    %5097 = vmatmul.bf16.gmra.mxu0 %v4270
    %v5098 = vpop.f32.mrf.mxu0
    %v5099 = vadd.f32 %v5050, %v5098
    %v5100 = vpop.f32.mrf.mxu0
    %v5101 = vadd.f32 %v5052, %v5100
    %5102 = vmatmul.bf16.gmra.mxu0 %v4275
    %v5103 = vpop.f32.mrf.mxu0
    %v5104 = vadd.f32 %v5055, %v5103
    %v5105 = vpop.f32.mrf.mxu0
    %v5106 = vadd.f32 %v5057, %v5105
    %5107 = vmatmul.bf16.gmra.mxu0 %v4280
    %v5108 = vpop.f32.mrf.mxu0
    %v5109 = vadd.f32 %v5060, %v5108
    %v5110 = vpop.f32.mrf.mxu0
    %v5111 = vadd.f32 %v5062, %v5110
    %5112 = vmatmul.bf16.gmra.mxu0 %v4285
    %v5113 = vpop.f32.mrf.mxu0
    %v5114 = vadd.f32 %v5065, %v5113
    %v5115 = vpop.f32.mrf.mxu0
    %v5116 = vadd.f32 %v5067, %v5115
    %5117 = vdwg.mxu0
    %5118 = vmatpush.bf16.msra.mxu0 %v4662
    %5119 = vmatpush.bf16.msra.mxu0 %v4660
    %5120 = vmatpush.bf16.msra.mxu0 %v4658
    %5121 = vmatpush.bf16.msra.mxu0 %v4656
    %5122 = vmatpush.bf16.msra.mxu0 %v4654
    %5123 = vmatpush.bf16.msra.mxu0 %v4652
    %5124 = vmatpush.bf16.msra.mxu0 %v4650
    %5125 = vmatpush.bf16.msra.mxu0 %v4648
    %5126 = vmatmul.bf16.gmra.mxu0 %v4251
    %v5127 = vpop.f32.mrf.mxu0
    %v5128 = vadd.f32 %v5079, %v5127
    %v5129 = vpop.f32.mrf.mxu0
    %v5130 = vadd.f32 %v5081, %v5129
    %5131 = vmatmul.bf16.gmra.mxu0 %v4256
    %v5132 = vpop.f32.mrf.mxu0
    %v5133 = vadd.f32 %v5084, %v5132
    %v5134 = vpop.f32.mrf.mxu0
    %v5135 = vadd.f32 %v5086, %v5134
    %5136 = vmatmul.bf16.gmra.mxu0 %v4261
    %v5137 = vpop.f32.mrf.mxu0
    %v5138 = vadd.f32 %v5089, %v5137
    %v5139 = vpop.f32.mrf.mxu0
    %v5140 = vadd.f32 %v5091, %v5139
    %5141 = vmatmul.bf16.gmra.mxu0 %v4266
    %v5142 = vpop.f32.mrf.mxu0
    %v5143 = vadd.f32 %v5094, %v5142
    %v5144 = vpop.f32.mrf.mxu0
    %v5145 = vadd.f32 %v5096, %v5144
    %5146 = vmatmul.bf16.gmra.mxu0 %v4271
    %v5147 = vpop.f32.mrf.mxu0
    %v5148 = vadd.f32 %v5099, %v5147
    %v5149 = vpop.f32.mrf.mxu0
    %v5150 = vadd.f32 %v5101, %v5149
    %5151 = vmatmul.bf16.gmra.mxu0 %v4276
    %v5152 = vpop.f32.mrf.mxu0
    %v5153 = vadd.f32 %v5104, %v5152
    %v5154 = vpop.f32.mrf.mxu0
    %v5155 = vadd.f32 %v5106, %v5154
    %5156 = vmatmul.bf16.gmra.mxu0 %v4281
    %v5157 = vpop.f32.mrf.mxu0
    %v5158 = vadd.f32 %v5109, %v5157
    %v5159 = vpop.f32.mrf.mxu0
    %v5160 = vadd.f32 %v5111, %v5159
    %5161 = vmatmul.bf16.gmra.mxu0 %v4286
    %v5162 = vpop.f32.mrf.mxu0
    %v5163 = vadd.f32 %v5114, %v5162
    %v5164 = vpop.f32.mrf.mxu0
    %v5165 = vadd.f32 %v5116, %v5164
    %5166 = vdwg.mxu0
    %5167 = vmatpush.bf16.msra.mxu0 %v4678
    %5168 = vmatpush.bf16.msra.mxu0 %v4676
    %5169 = vmatpush.bf16.msra.mxu0 %v4674
    %5170 = vmatpush.bf16.msra.mxu0 %v4672
    %5171 = vmatpush.bf16.msra.mxu0 %v4670
    %5172 = vmatpush.bf16.msra.mxu0 %v4668
    %5173 = vmatpush.bf16.msra.mxu0 %v4666
    %5174 = vmatpush.bf16.msra.mxu0 %v4664
    %5175 = vmatmul.bf16.gmra.mxu0 %v4252
    %v5176 = vpop.f32.mrf.mxu0
    %v5177 = vadd.f32 %v5128, %v5176
    %v5178 = vpop.f32.mrf.mxu0
    %v5179 = vadd.f32 %v5130, %v5178
    %5180 = vmatmul.bf16.gmra.mxu0 %v4257
    %v5181 = vpop.f32.mrf.mxu0
    %v5182 = vadd.f32 %v5133, %v5181
    %v5183 = vpop.f32.mrf.mxu0
    %v5184 = vadd.f32 %v5135, %v5183
    %5185 = vmatmul.bf16.gmra.mxu0 %v4262
    %v5186 = vpop.f32.mrf.mxu0
    %v5187 = vadd.f32 %v5138, %v5186
    %v5188 = vpop.f32.mrf.mxu0
    %v5189 = vadd.f32 %v5140, %v5188
    %5190 = vmatmul.bf16.gmra.mxu0 %v4267
    %v5191 = vpop.f32.mrf.mxu0
    %v5192 = vadd.f32 %v5143, %v5191
    %v5193 = vpop.f32.mrf.mxu0
    %v5194 = vadd.f32 %v5145, %v5193
    %5195 = vmatmul.bf16.gmra.mxu0 %v4272
    %v5196 = vpop.f32.mrf.mxu0
    %v5197 = vadd.f32 %v5148, %v5196
    %v5198 = vpop.f32.mrf.mxu0
    %v5199 = vadd.f32 %v5150, %v5198
    %5200 = vmatmul.bf16.gmra.mxu0 %v4277
    %v5201 = vpop.f32.mrf.mxu0
    %v5202 = vadd.f32 %v5153, %v5201
    %v5203 = vpop.f32.mrf.mxu0
    %v5204 = vadd.f32 %v5155, %v5203
    %5205 = vmatmul.bf16.gmra.mxu0 %v4282
    %v5206 = vpop.f32.mrf.mxu0
    %v5207 = vadd.f32 %v5158, %v5206
    %v5208 = vpop.f32.mrf.mxu0
    %v5209 = vadd.f32 %v5160, %v5208
    %5210 = vmatmul.bf16.gmra.mxu0 %v4287
    %v5211 = vpop.f32.mrf.mxu0
    %v5212 = vadd.f32 %v5163, %v5211
    %v5213 = vpop.f32.mrf.mxu0
    %v5214 = vadd.f32 %v5165, %v5213
    %5215 = vdwg.mxu0
    %5216 = vmatpush.bf16.msra.mxu0 %v4694
    %5217 = vmatpush.bf16.msra.mxu0 %v4692
    %5218 = vmatpush.bf16.msra.mxu0 %v4690
    %5219 = vmatpush.bf16.msra.mxu0 %v4688
    %5220 = vmatpush.bf16.msra.mxu0 %v4686
    %5221 = vmatpush.bf16.msra.mxu0 %v4684
    %5222 = vmatpush.bf16.msra.mxu0 %v4682
    %5223 = vmatpush.bf16.msra.mxu0 %v4680
    %5224 = vmatmul.bf16.gmra.mxu0 %v4253
    %v5225 = vpop.f32.mrf.mxu0
    %v5226 = vadd.f32 %v5177, %v5225
    %v5227 = vpop.f32.mrf.mxu0
    %v5228 = vadd.f32 %v5179, %v5227
    %5229 = vmatmul.bf16.gmra.mxu0 %v4258
    %v5230 = vpop.f32.mrf.mxu0
    %v5231 = vadd.f32 %v5182, %v5230
    %v5232 = vpop.f32.mrf.mxu0
    %v5233 = vadd.f32 %v5184, %v5232
    %5234 = vmatmul.bf16.gmra.mxu0 %v4263
    %v5235 = vpop.f32.mrf.mxu0
    %v5236 = vadd.f32 %v5187, %v5235
    %v5237 = vpop.f32.mrf.mxu0
    %v5238 = vadd.f32 %v5189, %v5237
    %5239 = vmatmul.bf16.gmra.mxu0 %v4268
    %v5240 = vpop.f32.mrf.mxu0
    %v5241 = vadd.f32 %v5192, %v5240
    %v5242 = vpop.f32.mrf.mxu0
    %v5243 = vadd.f32 %v5194, %v5242
    %5244 = vmatmul.bf16.gmra.mxu0 %v4273
    %v5245 = vpop.f32.mrf.mxu0
    %v5246 = vadd.f32 %v5197, %v5245
    %v5247 = vpop.f32.mrf.mxu0
    %v5248 = vadd.f32 %v5199, %v5247
    %5249 = vmatmul.bf16.gmra.mxu0 %v4278
    %v5250 = vpop.f32.mrf.mxu0
    %v5251 = vadd.f32 %v5202, %v5250
    %v5252 = vpop.f32.mrf.mxu0
    %v5253 = vadd.f32 %v5204, %v5252
    %5254 = vmatmul.bf16.gmra.mxu0 %v4283
    %v5255 = vpop.f32.mrf.mxu0
    %v5256 = vadd.f32 %v5207, %v5255
    %v5257 = vpop.f32.mrf.mxu0
    %v5258 = vadd.f32 %v5209, %v5257
    %5259 = vmatmul.bf16.gmra.mxu0 %v4288
    %v5260 = vpop.f32.mrf.mxu0
    %v5261 = vadd.f32 %v5212, %v5260
    %v5262 = vpop.f32.mrf.mxu0
    %v5263 = vadd.f32 %v5214, %v5262
    %5264 = vdwg.mxu0
    %v5265 = vxor.u32 %v4981, 2147483648
    %v5266 = vxor.u32 %v5226, 2147483648
    %v5267 = vxor.u32 %v4983, 2147483648
    %v5268 = vxor.u32 %v5228, 2147483648
    %v5269 = vxor.u32 %v4986, 2147483648
    %v5270 = vxor.u32 %v5231, 2147483648
    %v5271 = vxor.u32 %v4988, 2147483648
    %v5272 = vxor.u32 %v5233, 2147483648
    %v5273 = vxor.u32 %v4991, 2147483648
    %v5274 = vxor.u32 %v5236, 2147483648
    %v5275 = vxor.u32 %v4993, 2147483648
    %v5276 = vxor.u32 %v5238, 2147483648
    %v5277 = vxor.u32 %v4996, 2147483648
    %v5278 = vxor.u32 %v5241, 2147483648
    %v5279 = vxor.u32 %v4998, 2147483648
    %v5280 = vxor.u32 %v5243, 2147483648
    %v5281 = vxor.u32 %v5001, 2147483648
    %v5282 = vxor.u32 %v5246, 2147483648
    %v5283 = vxor.u32 %v5003, 2147483648
    %v5284 = vxor.u32 %v5248, 2147483648
    %v5285 = vxor.u32 %v5006, 2147483648
    %v5286 = vxor.u32 %v5251, 2147483648
    %v5287 = vxor.u32 %v5008, 2147483648
    %v5288 = vxor.u32 %v5253, 2147483648
    %v5289 = vxor.u32 %v5011, 2147483648
    %v5290 = vxor.u32 %v5256, 2147483648
    %v5291 = vxor.u32 %v5013, 2147483648
    %v5292 = vxor.u32 %v5258, 2147483648
    %v5293 = vxor.u32 %v5016, 2147483648
    %v5294 = vxor.u32 %v5261, 2147483648
    %v5295 = vxor.u32 %v5018, 2147483648
    %v5296 = vxor.u32 %v5263, 2147483648
    %v5297 = vmul.f32 %v5265, 1.442695
    %v5298 = vpow.pop %v5297
    %v5299 = vmul.f32 %v5266, 1.442695
    %v5300 = vpow.pop %v5299
    %v5301 = vmul.f32 %v5267, 1.442695
    %v5302 = vpow.pop %v5301
    %v5303 = vmul.f32 %v5268, 1.442695
    %v5304 = vpow.pop %v5303
    %v5305 = vmul.f32 %v5269, 1.442695
    %v5306 = vpow.pop %v5305
    %v5307 = vmul.f32 %v5270, 1.442695
    %v5308 = vpow.pop %v5307
    %v5309 = vmul.f32 %v5271, 1.442695
    %v5310 = vpow.pop %v5309
    %v5311 = vmul.f32 %v5272, 1.442695
    %v5312 = vpow.pop %v5311
    %v5313 = vmul.f32 %v5273, 1.442695
    %v5314 = vpow.pop %v5313
    %v5315 = vmul.f32 %v5274, 1.442695
    %v5316 = vpow.pop %v5315
    %v5317 = vmul.f32 %v5275, 1.442695
    %v5318 = vpow.pop %v5317
    %v5319 = vmul.f32 %v5276, 1.442695
    %v5320 = vpow.pop %v5319
    %v5321 = vmul.f32 %v5277, 1.442695
    %v5322 = vpow.pop %v5321
    %v5323 = vmul.f32 %v5278, 1.442695
    %v5324 = vpow.pop %v5323
    %v5325 = vmul.f32 %v5279, 1.442695
    %v5326 = vpow.pop %v5325
    %v5327 = vmul.f32 %v5280, 1.442695
    %v5328 = vpow.pop %v5327
    %v5329 = vmul.f32 %v5281, 1.442695
    %v5330 = vpow.pop %v5329
    %v5331 = vmul.f32 %v5282, 1.442695
    %v5332 = vpow.pop %v5331
    %v5333 = vmul.f32 %v5283, 1.442695
    %v5334 = vpow.pop %v5333
    %v5335 = vmul.f32 %v5284, 1.442695
    %v5336 = vpow.pop %v5335
    %v5337 = vmul.f32 %v5285, 1.442695
    %v5338 = vpow.pop %v5337
    %v5339 = vmul.f32 %v5286, 1.442695
    %v5340 = vpow.pop %v5339
    %v5341 = vmul.f32 %v5287, 1.442695
    %v5342 = vpow.pop %v5341
    %v5343 = vmul.f32 %v5288, 1.442695
    %v5344 = vpow.pop %v5343
    %v5345 = vmul.f32 %v5289, 1.442695
    %v5346 = vpow.pop %v5345
    %v5347 = vmul.f32 %v5290, 1.442695
    %v5348 = vpow.pop %v5347
    %v5349 = vmul.f32 %v5291, 1.442695
    %v5350 = vpow.pop %v5349
    %v5351 = vmul.f32 %v5292, 1.442695
    %v5352 = vpow.pop %v5351
    %v5353 = vmul.f32 %v5293, 1.442695
    %v5354 = vpow.pop %v5353
    %v5355 = vmul.f32 %v5294, 1.442695
    %v5356 = vpow.pop %v5355
    %v5357 = vmul.f32 %v5295, 1.442695
    %v5358 = vpow.pop %v5357
    %v5359 = vmul.f32 %v5296, 1.442695
    %v5360 = vpow.pop %v5359
    %v5361 = vadd.f32 %v5298, 1.0
    %v5362 = vadd.f32 %v5300, 1.0
    %v5363 = vadd.f32 %v5302, 1.0
    %v5364 = vadd.f32 %v5304, 1.0
    %v5365 = vadd.f32 %v5306, 1.0
    %v5366 = vadd.f32 %v5308, 1.0
    %v5367 = vadd.f32 %v5310, 1.0
    %v5368 = vadd.f32 %v5312, 1.0
    %v5369 = vadd.f32 %v5314, 1.0
    %v5370 = vadd.f32 %v5316, 1.0
    %v5371 = vadd.f32 %v5318, 1.0
    %v5372 = vadd.f32 %v5320, 1.0
    %v5373 = vadd.f32 %v5322, 1.0
    %v5374 = vadd.f32 %v5324, 1.0
    %v5375 = vadd.f32 %v5326, 1.0
    %v5376 = vadd.f32 %v5328, 1.0
    %v5377 = vadd.f32 %v5330, 1.0
    %v5378 = vadd.f32 %v5332, 1.0
    %v5379 = vadd.f32 %v5334, 1.0
    %v5380 = vadd.f32 %v5336, 1.0
    %v5381 = vadd.f32 %v5338, 1.0
    %v5382 = vadd.f32 %v5340, 1.0
    %v5383 = vadd.f32 %v5342, 1.0
    %v5384 = vadd.f32 %v5344, 1.0
    %v5385 = vadd.f32 %v5346, 1.0
    %v5386 = vadd.f32 %v5348, 1.0
    %v5387 = vadd.f32 %v5350, 1.0
    %v5388 = vadd.f32 %v5352, 1.0
    %v5389 = vadd.f32 %v5354, 1.0
    %v5390 = vadd.f32 %v5356, 1.0
    %v5391 = vadd.f32 %v5358, 1.0
    %v5392 = vadd.f32 %v5360, 1.0
    %v5393 = vrcp.pop %v5361
    %v5394 = vmul.f32 %v5361, %v5393
    %v5395 = vsub.f32 1.0, %v5394
    %v5396 = vmul.f32 %v5393, %v5395
    %v5397 = vadd.f32 %v5393, %v5396
    %vm5398 = vweird.f32 %v5361
    %vm5399 = vweird.f32 %v5393
    %vm5400 = vmor %vm5398, %vm5399
    %v5401 = vsel %vm5400, %v5393, %v5397
    %v5402 = vand.u32 2147483647, %v5361
    %vm5403 = vcmp.eq.f32.partialorder %v5402, 8.507059e+37
    %v5404 = vand.u32 %v5361, 2147483648
    %v5405 = vor.u32 1.1754944e-38, %v5404
    %v5406 = vsel %vm5403, %v5405, %v5401
    %v5407 = vmul.f32 1.0, %v5406
    %v5408 = vrcp.pop %v5362
    %v5409 = vmul.f32 %v5362, %v5408
    %v5410 = vsub.f32 1.0, %v5409
    %v5411 = vmul.f32 %v5408, %v5410
    %v5412 = vadd.f32 %v5408, %v5411
    %vm5413 = vweird.f32 %v5362
    %vm5414 = vweird.f32 %v5408
    %vm5415 = vmor %vm5413, %vm5414
    %v5416 = vsel %vm5415, %v5408, %v5412
    %v5417 = vand.u32 2147483647, %v5362
    %vm5418 = vcmp.eq.f32.partialorder %v5417, 8.507059e+37
    %v5419 = vand.u32 %v5362, 2147483648
    %v5420 = vor.u32 1.1754944e-38, %v5419
    %v5421 = vsel %vm5418, %v5420, %v5416
    %v5422 = vmul.f32 1.0, %v5421
    %v5423 = vrcp.pop %v5363
    %v5424 = vmul.f32 %v5363, %v5423
    %v5425 = vsub.f32 1.0, %v5424
    %v5426 = vmul.f32 %v5423, %v5425
    %v5427 = vadd.f32 %v5423, %v5426
    %vm5428 = vweird.f32 %v5363
    %vm5429 = vweird.f32 %v5423
    %vm5430 = vmor %vm5428, %vm5429
    %v5431 = vsel %vm5430, %v5423, %v5427
    %v5432 = vand.u32 2147483647, %v5363
    %vm5433 = vcmp.eq.f32.partialorder %v5432, 8.507059e+37
    %v5434 = vand.u32 %v5363, 2147483648
    %v5435 = vor.u32 1.1754944e-38, %v5434
    %v5436 = vsel %vm5433, %v5435, %v5431
    %v5437 = vmul.f32 1.0, %v5436
    %v5438 = vrcp.pop %v5364
    %v5439 = vmul.f32 %v5364, %v5438
    %v5440 = vsub.f32 1.0, %v5439
    %v5441 = vmul.f32 %v5438, %v5440
    %v5442 = vadd.f32 %v5438, %v5441
    %vm5443 = vweird.f32 %v5364
    %vm5444 = vweird.f32 %v5438
    %vm5445 = vmor %vm5443, %vm5444
    %v5446 = vsel %vm5445, %v5438, %v5442
    %v5447 = vand.u32 2147483647, %v5364
    %vm5448 = vcmp.eq.f32.partialorder %v5447, 8.507059e+37
    %v5449 = vand.u32 %v5364, 2147483648
    %v5450 = vor.u32 1.1754944e-38, %v5449
    %v5451 = vsel %vm5448, %v5450, %v5446
    %v5452 = vmul.f32 1.0, %v5451
    %v5453 = vrcp.pop %v5365
    %v5454 = vmul.f32 %v5365, %v5453
    %v5455 = vsub.f32 1.0, %v5454
    %v5456 = vmul.f32 %v5453, %v5455
    %v5457 = vadd.f32 %v5453, %v5456
    %vm5458 = vweird.f32 %v5365
    %vm5459 = vweird.f32 %v5453
    %vm5460 = vmor %vm5458, %vm5459
    %v5461 = vsel %vm5460, %v5453, %v5457
    %v5462 = vand.u32 2147483647, %v5365
    %vm5463 = vcmp.eq.f32.partialorder %v5462, 8.507059e+37
    %v5464 = vand.u32 %v5365, 2147483648
    %v5465 = vor.u32 1.1754944e-38, %v5464
    %v5466 = vsel %vm5463, %v5465, %v5461
    %v5467 = vmul.f32 1.0, %v5466
    %v5468 = vrcp.pop %v5366
    %v5469 = vmul.f32 %v5366, %v5468
    %v5470 = vsub.f32 1.0, %v5469
    %v5471 = vmul.f32 %v5468, %v5470
    %v5472 = vadd.f32 %v5468, %v5471
    %vm5473 = vweird.f32 %v5366
    %vm5474 = vweird.f32 %v5468
    %vm5475 = vmor %vm5473, %vm5474
    %v5476 = vsel %vm5475, %v5468, %v5472
    %v5477 = vand.u32 2147483647, %v5366
    %vm5478 = vcmp.eq.f32.partialorder %v5477, 8.507059e+37
    %v5479 = vand.u32 %v5366, 2147483648
    %v5480 = vor.u32 1.1754944e-38, %v5479
    %v5481 = vsel %vm5478, %v5480, %v5476
    %v5482 = vmul.f32 1.0, %v5481
    %v5483 = vrcp.pop %v5367
    %v5484 = vmul.f32 %v5367, %v5483
    %v5485 = vsub.f32 1.0, %v5484
    %v5486 = vmul.f32 %v5483, %v5485
    %v5487 = vadd.f32 %v5483, %v5486
    %vm5488 = vweird.f32 %v5367
    %vm5489 = vweird.f32 %v5483
    %vm5490 = vmor %vm5488, %vm5489
    %v5491 = vsel %vm5490, %v5483, %v5487
    %v5492 = vand.u32 2147483647, %v5367
    %vm5493 = vcmp.eq.f32.partialorder %v5492, 8.507059e+37
    %v5494 = vand.u32 %v5367, 2147483648
    %v5495 = vor.u32 1.1754944e-38, %v5494
    %v5496 = vsel %vm5493, %v5495, %v5491
    %v5497 = vmul.f32 1.0, %v5496
    %v5498 = vrcp.pop %v5368
    %v5499 = vmul.f32 %v5368, %v5498
    %v5500 = vsub.f32 1.0, %v5499
    %v5501 = vmul.f32 %v5498, %v5500
    %v5502 = vadd.f32 %v5498, %v5501
    %vm5503 = vweird.f32 %v5368
    %vm5504 = vweird.f32 %v5498
    %vm5505 = vmor %vm5503, %vm5504
    %v5506 = vsel %vm5505, %v5498, %v5502
    %v5507 = vand.u32 2147483647, %v5368
    %vm5508 = vcmp.eq.f32.partialorder %v5507, 8.507059e+37
    %v5509 = vand.u32 %v5368, 2147483648
    %v5510 = vor.u32 1.1754944e-38, %v5509
    %v5511 = vsel %vm5508, %v5510, %v5506
    %v5512 = vmul.f32 1.0, %v5511
    %v5513 = vrcp.pop %v5369
    %v5514 = vmul.f32 %v5369, %v5513
    %v5515 = vsub.f32 1.0, %v5514
    %v5516 = vmul.f32 %v5513, %v5515
    %v5517 = vadd.f32 %v5513, %v5516
    %vm5518 = vweird.f32 %v5369
    %vm5519 = vweird.f32 %v5513
    %vm5520 = vmor %vm5518, %vm5519
    %v5521 = vsel %vm5520, %v5513, %v5517
    %v5522 = vand.u32 2147483647, %v5369
    %vm5523 = vcmp.eq.f32.partialorder %v5522, 8.507059e+37
    %v5524 = vand.u32 %v5369, 2147483648
    %v5525 = vor.u32 1.1754944e-38, %v5524
    %v5526 = vsel %vm5523, %v5525, %v5521
    %v5527 = vmul.f32 1.0, %v5526
    %v5528 = vrcp.pop %v5370
    %v5529 = vmul.f32 %v5370, %v5528
    %v5530 = vsub.f32 1.0, %v5529
    %v5531 = vmul.f32 %v5528, %v5530
    %v5532 = vadd.f32 %v5528, %v5531
    %vm5533 = vweird.f32 %v5370
    %vm5534 = vweird.f32 %v5528
    %vm5535 = vmor %vm5533, %vm5534
    %v5536 = vsel %vm5535, %v5528, %v5532
    %v5537 = vand.u32 2147483647, %v5370
    %vm5538 = vcmp.eq.f32.partialorder %v5537, 8.507059e+37
    %v5539 = vand.u32 %v5370, 2147483648
    %v5540 = vor.u32 1.1754944e-38, %v5539
    %v5541 = vsel %vm5538, %v5540, %v5536
    %v5542 = vmul.f32 1.0, %v5541
    %v5543 = vrcp.pop %v5371
    %v5544 = vmul.f32 %v5371, %v5543
    %v5545 = vsub.f32 1.0, %v5544
    %v5546 = vmul.f32 %v5543, %v5545
    %v5547 = vadd.f32 %v5543, %v5546
    %vm5548 = vweird.f32 %v5371
    %vm5549 = vweird.f32 %v5543
    %vm5550 = vmor %vm5548, %vm5549
    %v5551 = vsel %vm5550, %v5543, %v5547
    %v5552 = vand.u32 2147483647, %v5371
    %vm5553 = vcmp.eq.f32.partialorder %v5552, 8.507059e+37
    %v5554 = vand.u32 %v5371, 2147483648
    %v5555 = vor.u32 1.1754944e-38, %v5554
    %v5556 = vsel %vm5553, %v5555, %v5551
    %v5557 = vmul.f32 1.0, %v5556
    %v5558 = vrcp.pop %v5372
    %v5559 = vmul.f32 %v5372, %v5558
    %v5560 = vsub.f32 1.0, %v5559
    %v5561 = vmul.f32 %v5558, %v5560
    %v5562 = vadd.f32 %v5558, %v5561
    %vm5563 = vweird.f32 %v5372
    %vm5564 = vweird.f32 %v5558
    %vm5565 = vmor %vm5563, %vm5564
    %v5566 = vsel %vm5565, %v5558, %v5562
    %v5567 = vand.u32 2147483647, %v5372
    %vm5568 = vcmp.eq.f32.partialorder %v5567, 8.507059e+37
    %v5569 = vand.u32 %v5372, 2147483648
    %v5570 = vor.u32 1.1754944e-38, %v5569
    %v5571 = vsel %vm5568, %v5570, %v5566
    %v5572 = vmul.f32 1.0, %v5571
    %v5573 = vrcp.pop %v5373
    %v5574 = vmul.f32 %v5373, %v5573
    %v5575 = vsub.f32 1.0, %v5574
    %v5576 = vmul.f32 %v5573, %v5575
    %v5577 = vadd.f32 %v5573, %v5576
    %vm5578 = vweird.f32 %v5373
    %vm5579 = vweird.f32 %v5573
    %vm5580 = vmor %vm5578, %vm5579
    %v5581 = vsel %vm5580, %v5573, %v5577
    %v5582 = vand.u32 2147483647, %v5373
    %vm5583 = vcmp.eq.f32.partialorder %v5582, 8.507059e+37
    %v5584 = vand.u32 %v5373, 2147483648
    %v5585 = vor.u32 1.1754944e-38, %v5584
    %v5586 = vsel %vm5583, %v5585, %v5581
    %v5587 = vmul.f32 1.0, %v5586
    %v5588 = vrcp.pop %v5374
    %v5589 = vmul.f32 %v5374, %v5588
    %v5590 = vsub.f32 1.0, %v5589
    %v5591 = vmul.f32 %v5588, %v5590
    %v5592 = vadd.f32 %v5588, %v5591
    %vm5593 = vweird.f32 %v5374
    %vm5594 = vweird.f32 %v5588
    %vm5595 = vmor %vm5593, %vm5594
    %v5596 = vsel %vm5595, %v5588, %v5592
    %v5597 = vand.u32 2147483647, %v5374
    %vm5598 = vcmp.eq.f32.partialorder %v5597, 8.507059e+37
    %v5599 = vand.u32 %v5374, 2147483648
    %v5600 = vor.u32 1.1754944e-38, %v5599
    %v5601 = vsel %vm5598, %v5600, %v5596
    %v5602 = vmul.f32 1.0, %v5601
    %v5603 = vrcp.pop %v5375
    %v5604 = vmul.f32 %v5375, %v5603
    %v5605 = vsub.f32 1.0, %v5604
    %v5606 = vmul.f32 %v5603, %v5605
    %v5607 = vadd.f32 %v5603, %v5606
    %vm5608 = vweird.f32 %v5375
    %vm5609 = vweird.f32 %v5603
    %vm5610 = vmor %vm5608, %vm5609
    %v5611 = vsel %vm5610, %v5603, %v5607
    %v5612 = vand.u32 2147483647, %v5375
    %vm5613 = vcmp.eq.f32.partialorder %v5612, 8.507059e+37
    %v5614 = vand.u32 %v5375, 2147483648
    %v5615 = vor.u32 1.1754944e-38, %v5614
    %v5616 = vsel %vm5613, %v5615, %v5611
    %v5617 = vmul.f32 1.0, %v5616
    %v5618 = vrcp.pop %v5376
    %v5619 = vmul.f32 %v5376, %v5618
    %v5620 = vsub.f32 1.0, %v5619
    %v5621 = vmul.f32 %v5618, %v5620
    %v5622 = vadd.f32 %v5618, %v5621
    %vm5623 = vweird.f32 %v5376
    %vm5624 = vweird.f32 %v5618
    %vm5625 = vmor %vm5623, %vm5624
    %v5626 = vsel %vm5625, %v5618, %v5622
    %v5627 = vand.u32 2147483647, %v5376
    %vm5628 = vcmp.eq.f32.partialorder %v5627, 8.507059e+37
    %v5629 = vand.u32 %v5376, 2147483648
    %v5630 = vor.u32 1.1754944e-38, %v5629
    %v5631 = vsel %vm5628, %v5630, %v5626
    %v5632 = vmul.f32 1.0, %v5631
    %v5633 = vrcp.pop %v5377
    %v5634 = vmul.f32 %v5377, %v5633
    %v5635 = vsub.f32 1.0, %v5634
    %v5636 = vmul.f32 %v5633, %v5635
    %v5637 = vadd.f32 %v5633, %v5636
    %vm5638 = vweird.f32 %v5377
    %vm5639 = vweird.f32 %v5633
    %vm5640 = vmor %vm5638, %vm5639
    %v5641 = vsel %vm5640, %v5633, %v5637
    %v5642 = vand.u32 2147483647, %v5377
    %vm5643 = vcmp.eq.f32.partialorder %v5642, 8.507059e+37
    %v5644 = vand.u32 %v5377, 2147483648
    %v5645 = vor.u32 1.1754944e-38, %v5644
    %v5646 = vsel %vm5643, %v5645, %v5641
    %v5647 = vmul.f32 1.0, %v5646
    %v5648 = vrcp.pop %v5378
    %v5649 = vmul.f32 %v5378, %v5648
    %v5650 = vsub.f32 1.0, %v5649
    %v5651 = vmul.f32 %v5648, %v5650
    %v5652 = vadd.f32 %v5648, %v5651
    %vm5653 = vweird.f32 %v5378
    %vm5654 = vweird.f32 %v5648
    %vm5655 = vmor %vm5653, %vm5654
    %v5656 = vsel %vm5655, %v5648, %v5652
    %v5657 = vand.u32 2147483647, %v5378
    %vm5658 = vcmp.eq.f32.partialorder %v5657, 8.507059e+37
    %v5659 = vand.u32 %v5378, 2147483648
    %v5660 = vor.u32 1.1754944e-38, %v5659
    %v5661 = vsel %vm5658, %v5660, %v5656
    %v5662 = vmul.f32 1.0, %v5661
    %v5663 = vrcp.pop %v5379
    %v5664 = vmul.f32 %v5379, %v5663
    %v5665 = vsub.f32 1.0, %v5664
    %v5666 = vmul.f32 %v5663, %v5665
    %v5667 = vadd.f32 %v5663, %v5666
    %vm5668 = vweird.f32 %v5379
    %vm5669 = vweird.f32 %v5663
    %vm5670 = vmor %vm5668, %vm5669
    %v5671 = vsel %vm5670, %v5663, %v5667
    %v5672 = vand.u32 2147483647, %v5379
    %vm5673 = vcmp.eq.f32.partialorder %v5672, 8.507059e+37
    %v5674 = vand.u32 %v5379, 2147483648
    %v5675 = vor.u32 1.1754944e-38, %v5674
    %v5676 = vsel %vm5673, %v5675, %v5671
    %v5677 = vmul.f32 1.0, %v5676
    %v5678 = vrcp.pop %v5380
    %v5679 = vmul.f32 %v5380, %v5678
    %v5680 = vsub.f32 1.0, %v5679
    %v5681 = vmul.f32 %v5678, %v5680
    %v5682 = vadd.f32 %v5678, %v5681
    %vm5683 = vweird.f32 %v5380
    %vm5684 = vweird.f32 %v5678
    %vm5685 = vmor %vm5683, %vm5684
    %v5686 = vsel %vm5685, %v5678, %v5682
    %v5687 = vand.u32 2147483647, %v5380
    %vm5688 = vcmp.eq.f32.partialorder %v5687, 8.507059e+37
    %v5689 = vand.u32 %v5380, 2147483648
    %v5690 = vor.u32 1.1754944e-38, %v5689
    %v5691 = vsel %vm5688, %v5690, %v5686
    %v5692 = vmul.f32 1.0, %v5691
    %v5693 = vrcp.pop %v5381
    %v5694 = vmul.f32 %v5381, %v5693
    %v5695 = vsub.f32 1.0, %v5694
    %v5696 = vmul.f32 %v5693, %v5695
    %v5697 = vadd.f32 %v5693, %v5696
    %vm5698 = vweird.f32 %v5381
    %vm5699 = vweird.f32 %v5693
    %vm5700 = vmor %vm5698, %vm5699
    %v5701 = vsel %vm5700, %v5693, %v5697
    %v5702 = vand.u32 2147483647, %v5381
    %vm5703 = vcmp.eq.f32.partialorder %v5702, 8.507059e+37
    %v5704 = vand.u32 %v5381, 2147483648
    %v5705 = vor.u32 1.1754944e-38, %v5704
    %v5706 = vsel %vm5703, %v5705, %v5701
    %v5707 = vmul.f32 1.0, %v5706
    %v5708 = vrcp.pop %v5382
    %v5709 = vmul.f32 %v5382, %v5708
    %v5710 = vsub.f32 1.0, %v5709
    %v5711 = vmul.f32 %v5708, %v5710
    %v5712 = vadd.f32 %v5708, %v5711
    %vm5713 = vweird.f32 %v5382
    %vm5714 = vweird.f32 %v5708
    %vm5715 = vmor %vm5713, %vm5714
    %v5716 = vsel %vm5715, %v5708, %v5712
    %v5717 = vand.u32 2147483647, %v5382
    %vm5718 = vcmp.eq.f32.partialorder %v5717, 8.507059e+37
    %v5719 = vand.u32 %v5382, 2147483648
    %v5720 = vor.u32 1.1754944e-38, %v5719
    %v5721 = vsel %vm5718, %v5720, %v5716
    %v5722 = vmul.f32 1.0, %v5721
    %v5723 = vrcp.pop %v5383
    %v5724 = vmul.f32 %v5383, %v5723
    %v5725 = vsub.f32 1.0, %v5724
    %v5726 = vmul.f32 %v5723, %v5725
    %v5727 = vadd.f32 %v5723, %v5726
    %vm5728 = vweird.f32 %v5383
    %vm5729 = vweird.f32 %v5723
    %vm5730 = vmor %vm5728, %vm5729
    %v5731 = vsel %vm5730, %v5723, %v5727
    %v5732 = vand.u32 2147483647, %v5383
    %vm5733 = vcmp.eq.f32.partialorder %v5732, 8.507059e+37
    %v5734 = vand.u32 %v5383, 2147483648
    %v5735 = vor.u32 1.1754944e-38, %v5734
    %v5736 = vsel %vm5733, %v5735, %v5731
    %v5737 = vmul.f32 1.0, %v5736
    %v5738 = vrcp.pop %v5384
    %v5739 = vmul.f32 %v5384, %v5738
    %v5740 = vsub.f32 1.0, %v5739
    %v5741 = vmul.f32 %v5738, %v5740
    %v5742 = vadd.f32 %v5738, %v5741
    %vm5743 = vweird.f32 %v5384
    %vm5744 = vweird.f32 %v5738
    %vm5745 = vmor %vm5743, %vm5744
    %v5746 = vsel %vm5745, %v5738, %v5742
    %v5747 = vand.u32 2147483647, %v5384
    %vm5748 = vcmp.eq.f32.partialorder %v5747, 8.507059e+37
    %v5749 = vand.u32 %v5384, 2147483648
    %v5750 = vor.u32 1.1754944e-38, %v5749
    %v5751 = vsel %vm5748, %v5750, %v5746
    %v5752 = vmul.f32 1.0, %v5751
    %v5753 = vrcp.pop %v5385
    %v5754 = vmul.f32 %v5385, %v5753
    %v5755 = vsub.f32 1.0, %v5754
    %v5756 = vmul.f32 %v5753, %v5755
    %v5757 = vadd.f32 %v5753, %v5756
    %vm5758 = vweird.f32 %v5385
    %vm5759 = vweird.f32 %v5753
    %vm5760 = vmor %vm5758, %vm5759
    %v5761 = vsel %vm5760, %v5753, %v5757
    %v5762 = vand.u32 2147483647, %v5385
    %vm5763 = vcmp.eq.f32.partialorder %v5762, 8.507059e+37
    %v5764 = vand.u32 %v5385, 2147483648
    %v5765 = vor.u32 1.1754944e-38, %v5764
    %v5766 = vsel %vm5763, %v5765, %v5761
    %v5767 = vmul.f32 1.0, %v5766
    %v5768 = vrcp.pop %v5386
    %v5769 = vmul.f32 %v5386, %v5768
    %v5770 = vsub.f32 1.0, %v5769
    %v5771 = vmul.f32 %v5768, %v5770
    %v5772 = vadd.f32 %v5768, %v5771
    %vm5773 = vweird.f32 %v5386
    %vm5774 = vweird.f32 %v5768
    %vm5775 = vmor %vm5773, %vm5774
    %v5776 = vsel %vm5775, %v5768, %v5772
    %v5777 = vand.u32 2147483647, %v5386
    %vm5778 = vcmp.eq.f32.partialorder %v5777, 8.507059e+37
    %v5779 = vand.u32 %v5386, 2147483648
    %v5780 = vor.u32 1.1754944e-38, %v5779
    %v5781 = vsel %vm5778, %v5780, %v5776
    %v5782 = vmul.f32 1.0, %v5781
    %v5783 = vrcp.pop %v5387
    %v5784 = vmul.f32 %v5387, %v5783
    %v5785 = vsub.f32 1.0, %v5784
    %v5786 = vmul.f32 %v5783, %v5785
    %v5787 = vadd.f32 %v5783, %v5786
    %vm5788 = vweird.f32 %v5387
    %vm5789 = vweird.f32 %v5783
    %vm5790 = vmor %vm5788, %vm5789
    %v5791 = vsel %vm5790, %v5783, %v5787
    %v5792 = vand.u32 2147483647, %v5387
    %vm5793 = vcmp.eq.f32.partialorder %v5792, 8.507059e+37
    %v5794 = vand.u32 %v5387, 2147483648
    %v5795 = vor.u32 1.1754944e-38, %v5794
    %v5796 = vsel %vm5793, %v5795, %v5791
    %v5797 = vmul.f32 1.0, %v5796
    %v5798 = vrcp.pop %v5388
    %v5799 = vmul.f32 %v5388, %v5798
    %v5800 = vsub.f32 1.0, %v5799
    %v5801 = vmul.f32 %v5798, %v5800
    %v5802 = vadd.f32 %v5798, %v5801
    %vm5803 = vweird.f32 %v5388
    %vm5804 = vweird.f32 %v5798
    %vm5805 = vmor %vm5803, %vm5804
    %v5806 = vsel %vm5805, %v5798, %v5802
    %v5807 = vand.u32 2147483647, %v5388
    %vm5808 = vcmp.eq.f32.partialorder %v5807, 8.507059e+37
    %v5809 = vand.u32 %v5388, 2147483648
    %v5810 = vor.u32 1.1754944e-38, %v5809
    %v5811 = vsel %vm5808, %v5810, %v5806
    %v5812 = vmul.f32 1.0, %v5811
    %v5813 = vrcp.pop %v5389
    %v5814 = vmul.f32 %v5389, %v5813
    %v5815 = vsub.f32 1.0, %v5814
    %v5816 = vmul.f32 %v5813, %v5815
    %v5817 = vadd.f32 %v5813, %v5816
    %vm5818 = vweird.f32 %v5389
    %vm5819 = vweird.f32 %v5813
    %vm5820 = vmor %vm5818, %vm5819
    %v5821 = vsel %vm5820, %v5813, %v5817
    %v5822 = vand.u32 2147483647, %v5389
    %vm5823 = vcmp.eq.f32.partialorder %v5822, 8.507059e+37
    %v5824 = vand.u32 %v5389, 2147483648
    %v5825 = vor.u32 1.1754944e-38, %v5824
    %v5826 = vsel %vm5823, %v5825, %v5821
    %v5827 = vmul.f32 1.0, %v5826
    %v5828 = vrcp.pop %v5390
    %v5829 = vmul.f32 %v5390, %v5828
    %v5830 = vsub.f32 1.0, %v5829
    %v5831 = vmul.f32 %v5828, %v5830
    %v5832 = vadd.f32 %v5828, %v5831
    %vm5833 = vweird.f32 %v5390
    %vm5834 = vweird.f32 %v5828
    %vm5835 = vmor %vm5833, %vm5834
    %v5836 = vsel %vm5835, %v5828, %v5832
    %v5837 = vand.u32 2147483647, %v5390
    %vm5838 = vcmp.eq.f32.partialorder %v5837, 8.507059e+37
    %v5839 = vand.u32 %v5390, 2147483648
    %v5840 = vor.u32 1.1754944e-38, %v5839
    %v5841 = vsel %vm5838, %v5840, %v5836
    %v5842 = vmul.f32 1.0, %v5841
    %v5843 = vrcp.pop %v5391
    %v5844 = vmul.f32 %v5391, %v5843
    %v5845 = vsub.f32 1.0, %v5844
    %v5846 = vmul.f32 %v5843, %v5845
    %v5847 = vadd.f32 %v5843, %v5846
    %vm5848 = vweird.f32 %v5391
    %vm5849 = vweird.f32 %v5843
    %vm5850 = vmor %vm5848, %vm5849
    %v5851 = vsel %vm5850, %v5843, %v5847
    %v5852 = vand.u32 2147483647, %v5391
    %vm5853 = vcmp.eq.f32.partialorder %v5852, 8.507059e+37
    %v5854 = vand.u32 %v5391, 2147483648
    %v5855 = vor.u32 1.1754944e-38, %v5854
    %v5856 = vsel %vm5853, %v5855, %v5851
    %v5857 = vmul.f32 1.0, %v5856
    %v5858 = vrcp.pop %v5392
    %v5859 = vmul.f32 %v5392, %v5858
    %v5860 = vsub.f32 1.0, %v5859
    %v5861 = vmul.f32 %v5858, %v5860
    %v5862 = vadd.f32 %v5858, %v5861
    %vm5863 = vweird.f32 %v5392
    %vm5864 = vweird.f32 %v5858
    %vm5865 = vmor %vm5863, %vm5864
    %v5866 = vsel %vm5865, %v5858, %v5862
    %v5867 = vand.u32 2147483647, %v5392
    %vm5868 = vcmp.eq.f32.partialorder %v5867, 8.507059e+37
    %v5869 = vand.u32 %v5392, 2147483648
    %v5870 = vor.u32 1.1754944e-38, %v5869
    %v5871 = vsel %vm5868, %v5870, %v5866
    %v5872 = vmul.f32 1.0, %v5871
    %5873 = vst [vmem:[#allocation19] sm:$0xff] %v5407
    %5874 = vst [vmem:[#allocation19 + $0x8] sm:$0xff] %v5422
    %5875 = vst [vmem:[#allocation19 + $0x10] sm:$0xff] %v5437
    %5876 = vst [vmem:[#allocation19 + $0x18] sm:$0xff] %v5452
    %5877 = vst [vmem:[#allocation19 + $0x20] sm:$0xff] %v5467
    %5878 = vst [vmem:[#allocation19 + $0x28] sm:$0xff] %v5482
    %5879 = vst [vmem:[#allocation19 + $0x30] sm:$0xff] %v5497
    %5880 = vst [vmem:[#allocation19 + $0x38] sm:$0xff] %v5512
    %5881 = vst [vmem:[#allocation19 + $0x40] sm:$0xff] %v5527
    %5882 = vst [vmem:[#allocation19 + $0x48] sm:$0xff] %v5542
    %5883 = vst [vmem:[#allocation19 + $0x50] sm:$0xff] %v5557
    %5884 = vst [vmem:[#allocation19 + $0x58] sm:$0xff] %v5572
    %5885 = vst [vmem:[#allocation19 + $0x60] sm:$0xff] %v5587
    %5886 = vst [vmem:[#allocation19 + $0x68] sm:$0xff] %v5602
    %5887 = vst [vmem:[#allocation19 + $0x70] sm:$0xff] %v5617
    %5888 = vst [vmem:[#allocation19 + $0x78] sm:$0xff] %v5632
    %5889 = vst [vmem:[#allocation19 + $0x80] sm:$0xff] %v5647
    %5890 = vst [vmem:[#allocation19 + $0x88] sm:$0xff] %v5662
    %5891 = vst [vmem:[#allocation19 + $0x90] sm:$0xff] %v5677
    %5892 = vst [vmem:[#allocation19 + $0x98] sm:$0xff] %v5692
    %5893 = vst [vmem:[#allocation19 + $0xa0] sm:$0xff] %v5707
    %5894 = vst [vmem:[#allocation19 + $0xa8] sm:$0xff] %v5722
    %5895 = vst [vmem:[#allocation19 + $0xb0] sm:$0xff] %v5737
    %5896 = vst [vmem:[#allocation19 + $0xb8] sm:$0xff] %v5752
    %5897 = vst [vmem:[#allocation19 + $0xc0] sm:$0xff] %v5767
    %5898 = vst [vmem:[#allocation19 + $0xc8] sm:$0xff] %v5782
    %5899 = vst [vmem:[#allocation19 + $0xd0] sm:$0xff] %v5797
    %5900 = vst [vmem:[#allocation19 + $0xd8] sm:$0xff] %v5812
    %5901 = vst [vmem:[#allocation19 + $0xe0] sm:$0xff] %v5827
    %5902 = vst [vmem:[#allocation19 + $0xe8] sm:$0xff] %v5842
    %5903 = vst [vmem:[#allocation19 + $0xf0] sm:$0xff] %v5857
    %5904 = vst [vmem:[#allocation19 + $0xf8] sm:$0xff] %v5872
    %5905 = vst [vmem:[#allocation20] sm:$0xff] %v2666
    %5906 = vst [vmem:[#allocation20 + $0x8] sm:$0xff] %v2764
    %5907 = vst [vmem:[#allocation20 + $0x10] sm:$0xff] %v2668
    %5908 = vst [vmem:[#allocation20 + $0x18] sm:$0xff] %v2766
    %5909 = vst [vmem:[#allocation20 + $0x20] sm:$0xff] %v2671
    %5910 = vst [vmem:[#allocation20 + $0x28] sm:$0xff] %v2769
    %5911 = vst [vmem:[#allocation20 + $0x30] sm:$0xff] %v2673
    %5912 = vst [vmem:[#allocation20 + $0x38] sm:$0xff] %v2771
    %5913 = vst [vmem:[#allocation20 + $0x40] sm:$0xff] %v2676
    %5914 = vst [vmem:[#allocation20 + $0x48] sm:$0xff] %v2774
    %5915 = vst [vmem:[#allocation20 + $0x50] sm:$0xff] %v2678
    %5916 = vst [vmem:[#allocation20 + $0x58] sm:$0xff] %v2776
    %5917 = vst [vmem:[#allocation20 + $0x60] sm:$0xff] %v2681
    %5918 = vst [vmem:[#allocation20 + $0x68] sm:$0xff] %v2779
    %5919 = vst [vmem:[#allocation20 + $0x70] sm:$0xff] %v2683
    %5920 = vst [vmem:[#allocation20 + $0x78] sm:$0xff] %v2781
    %5921 = vst [vmem:[#allocation20 + $0x80] sm:$0xff] %v2686
    %5922 = vst [vmem:[#allocation20 + $0x88] sm:$0xff] %v2784
    %5923 = vst [vmem:[#allocation20 + $0x90] sm:$0xff] %v2688
    %5924 = vst [vmem:[#allocation20 + $0x98] sm:$0xff] %v2786
    %5925 = vst [vmem:[#allocation20 + $0xa0] sm:$0xff] %v2691
    %5926 = vst [vmem:[#allocation20 + $0xa8] sm:$0xff] %v2789
    %5927 = vst [vmem:[#allocation20 + $0xb0] sm:$0xff] %v2693
    %5928 = vst [vmem:[#allocation20 + $0xb8] sm:$0xff] %v2791
    %5929 = vst [vmem:[#allocation20 + $0xc0] sm:$0xff] %v2696
    %5930 = vst [vmem:[#allocation20 + $0xc8] sm:$0xff] %v2794
    %5931 = vst [vmem:[#allocation20 + $0xd0] sm:$0xff] %v2698
    %5932 = vst [vmem:[#allocation20 + $0xd8] sm:$0xff] %v2796
    %5933 = vst [vmem:[#allocation20 + $0xe0] sm:$0xff] %v2701
    %5934 = vst [vmem:[#allocation20 + $0xe8] sm:$0xff] %v2799
    %5935 = vst [vmem:[#allocation20 + $0xf0] sm:$0xff] %v2703
    %5936 = vst [vmem:[#allocation20 + $0xf8] sm:$0xff] %v2801
    // Predicated region
    $region98: #{tpu_custom_call.1} parent=1 // pred_check
      _
    $region99: #{tpu_custom_call.1} parent=1 // pred_check_branch
      %5938 = sbr.rel (0) target = $region101
    $region100: #{tpu_custom_call.1} parent=1 // pred_region
      %5940 = vsyncadd [#allocation4], 0
      %s5941 = sshll.u32 [#allocation19], 4
      %s5942 = int_to_ptr.vmem [resolvable:$true] %s5941
      %s5943 = sshll.u32 %s14, 4
      %s5944 = int_to_ptr.hbm [resolvable:$true] %s5943
      %5949 = dma.vmem_to_hbm [thread:$0]  %s5942, 4096, %s5944, [#allocation4], 256, 256, 16
    $region101: #{tpu_custom_call.1} parent=1 // pred_fallthru
      _
    // Predicated region
    $region102: #{tpu_custom_call.1} parent=1 // pred_check
      _
    $region103: #{tpu_custom_call.1} parent=1 // pred_check_branch
      %5951 = sbr.rel (0) target = $region105
    $region104: #{tpu_custom_call.1} parent=1 // pred_region
      %5953 = vsyncadd [#allocation21], 0
      %s5954 = sshll.u32 [#allocation20], 4
      %s5955 = int_to_ptr.vmem [resolvable:$true] %s5954
      %s5956 = sshll.u32 %s15, 4
      %s5957 = int_to_ptr.hbm [resolvable:$true] %s5956
      %5962 = dma.vmem_to_hbm [thread:$0]  %s5955, 4096, %s5957, [#allocation21], 256, 256, 16
    $region105: #{tpu_custom_call.1} parent=1 // pred_fallthru
      _
    // Predicated region
    $region106: #{tpu_custom_call.1} parent=1 // pred_check
      _
    $region107: #{tpu_custom_call.1} parent=1 // pred_check_branch
      %5964 = sbr.rel (0) target = $region109
    $region108: #{tpu_custom_call.1} parent=1 // pred_region
      %5966 = dma.done [#allocation4], 4096
    $region109: #{tpu_custom_call.1} parent=1 // pred_fallthru
      _
    // Predicated region
    $region110: #{tpu_custom_call.1} parent=1 // pred_check
      _
    $region111: #{tpu_custom_call.1} parent=1 // pred_check_branch
      %5968 = sbr.rel (0) target = $region113
    $region112: #{tpu_custom_call.1} parent=1 // pred_region
      %5970 = dma.done [#allocation21], 4096
    $region113: #{tpu_custom_call.1} parent=1 // pred_fallthru
      _
    %5971 = vsyncpa [#allocation3], 1
    %5972 = vsyncpa [#allocation6], 1
    %5973 = vsyncpa [#allocation9], 1
    %5974 = vsyncpa [#allocation12], 1
    %5975 = vsyncpa [#allocation15], 1
    %5976 = vsyncpa [#allocation18], 1
    %5977 = vsyncpa [#allocation4], 1
    %5978 = vsyncpa [#allocation21], 1

</llo_original>
